<compile_context>
chip_gen: v6e
topology: v6e:2x2x1
jax: 0.10.0
libtpu: 0.0.40
codegen_flags: <defaults>
</compile_context>

<pallas_src>
import functools

import jax
import jax.numpy as jnp
from jax.experimental import pallas as pl
from jax.experimental.pallas import tpu as pltpu

# ----------------------- small configuration (consistent w/ module) ----------
B = 2               # batch
INPUT_DIM = 32      # latent dim fed to mapping network
STYLE_DIM = 64      # style_dim
NGF = 16            # ngf  -> hidden = ngf * 8 = 128
HIDDEN = NGF * 8
MAX_RES = 32        # max_resolution (coord_embeddings grid)
TARGET_RES = 16     # target_resolution at forward time
FOURIER_DIM = 256   # hardcoded FourierFeatures(2, 256)
EMB_DIM = 512       # hardcoded coord_embeddings channels
FEAT0 = FOURIER_DIM + EMB_DIM   # 768
NUM_LAYERS = 8      # layers 5..7 exist in the module but never run (zip trunc)


# ----------------------------- Pallas kernel ----------------------------------
def cips_mlp_kernel(feat_ref, s0_ref, w0T_ref, b0_ref,
                    sr_ref, wrT_ref, br_ref,
                    srgb_ref, wrgbT_ref, brgb_ref,
                    out_ref):
    """One (batch, pixel-tile) per grid step; channel-major (C, TN) tiles.

    ModulatedFC(x, s) = W(s * x) + b = (W^T * s) x + b, so the per-batch style
    is folded into the transposed weight on the VPU right before each MXU dot.
    """

    def leaky(v):                       # leaky_relu(0.2): mul + max, no select
        return jnp.maximum(v, 0.2 * v)

    feat = feat_ref[...]                                        # (768, TN) bf16 shared

    # layer 0: ModulatedFC(768 -> 128); style folded into the weight (VPU)
    w0m = (w0T_ref[...] * s0_ref[0]).astype(jnp.bfloat16)       # (128, 768)
    h = jnp.dot(w0m, feat, preferred_element_type=jnp.float32) + b0_ref[...]
    h = leaky(h)                                                # (128, TN) f32

    # rgb tap at layer 0 (to_rgb[0]); incremental accumulation, no concat
    wr0 = (wrgbT_ref[0] * srgb_ref[0, 0]).astype(jnp.bfloat16)  # (3, 128)
    rgb = jnp.dot(wr0, h.astype(jnp.bfloat16), preferred_element_type=jnp.float32)

    # layers 1..4: ModulatedFC(128 -> 128); zip truncation -> only 5 of 8 layers
    for i in range(1, 5):
        wm = (wrT_ref[i - 1] * sr_ref[0, i - 1]).astype(jnp.bfloat16)   # (128, 128)
        h = jnp.dot(wm, h.astype(jnp.bfloat16),
                    preferred_element_type=jnp.float32) + br_ref[i - 1]
        h = leaky(h)
        if i % 2 == 0:                          # rgb taps at layers 2 and 4
            k = i // 2
            wrk = (wrgbT_ref[k] * srgb_ref[0, k]).astype(jnp.bfloat16)
            rgb = rgb + jnp.dot(wrk, h.astype(jnp.bfloat16),
                                preferred_element_type=jnp.float32)

    # lane-dense (3, TN) store; sigmoid*2-1 as in the module.
    out_ref[0] = jax.nn.sigmoid(rgb + brgb_ref[...]) * 2.0 - 1.0


# ------------------------------ JAX glue --------------------------------------
def grid_sample_separable(emb, R):
    """F.grid_sample(coord_emb, coords, bilinear, align_corners=True) for the
    uniform meshgrid('ij') coordinate grid; returns channel-major (C, N),
    n = i*R + j.  emb: (C, M, M)."""
    C, M, _ = emb.shape
    lin = jnp.linspace(-1.0, 1.0, R)
    pix = (lin + 1.0) * 0.5 * (M - 1)
    i0f = jnp.floor(pix)
    frac = pix - i0f
    i0 = jnp.clip(i0f.astype(jnp.int32), 0, M - 1)
    i1 = jnp.clip(i0 + 1, 0, M - 1)
    # height (dim 1) sampled at positions indexed by the second grid axis j
    e_h = (emb[:, i0, :] * (1.0 - frac)[None, :, None]
           + emb[:, i1, :] * frac[None, :, None])                   # (C, Rj, M)
    # width (dim 2) sampled at positions indexed by the first grid axis i
    e_hw = (e_h[:, :, i0] * (1.0 - frac)[None, None, :]
            + e_h[:, :, i1] * frac[None, None, :])                  # (C, Rj, Ri)
    sampled = jnp.transpose(e_hw, (0, 2, 1))                        # (C, i, j)
    return sampled.reshape(C, R * R)                                # (C, N)


def _pick_pixel_tile(N, max_tile=1024):
    """Largest multiple-of-128 divisor of N that is <= max_tile (else N)."""
    if N <= max_tile:
        return N
    t = (max_tile // 128) * 128
    while t >= 128:
        if N % t == 0:
            return t
        t -= 128
    return N


def cips_forward(x, p, R):
    Bsz = x.shape[0]
    N = R * R

    # mapping network: tiny (B,64) matmuls -> plain JAX (a dedicated pallas_call
    # would be pure launch overhead).
    w = jnp.maximum(x @ p["map_w1"] + p["map_b1"], 0.0)
    w = jnp.maximum(w @ p["map_w2"] + p["map_b2"], 0.0)
    w = w @ p["map_w3"] + p["map_b3"]

    # per-layer modulation styles (small per-batch vectors; weights stay shared)
    s0 = w @ p["mod_w0"] + p["mod_b0"]                                    # (B, 768)
    sr = jnp.einsum("bs,ksh->bkh", w, p["mod_wr"]) + p["mod_br"][None]    # (B, 4, 128)
    srgb = jnp.einsum("bs,ksh->bkh", w, p["rgb_mod_w"]) + p["rgb_mod_b"][None]  # (B,3,128)
    s0_in = s0[:, None, :]                                                # (B, 1, 768)
    sr_in = sr[:, :, None, :]                                             # (B, 4, 1, 128)
    srgb_in = srgb[:, :, None, :]                                         # (B, 3, 1, 128)

    # batch-invariant, pre-transposed bf16 weights (fetched once by the kernel)
    w0T = p["fc0_w"].T.astype(jnp.bfloat16)                               # (128, 768)
    wrT = jnp.swapaxes(p["fcr_w"], 1, 2).astype(jnp.bfloat16)             # (4, 128, 128)
    wrgbT = jnp.swapaxes(p["rgb_w"], 1, 2).astype(jnp.bfloat16)           # (3, 3, 128)
    b0_col = p["fc0_b"][:, None]                                          # (128, 1)
    br_col = p["fcr_b"][:, :, None]                                       # (4, 128, 1)
    brgb_col = jnp.sum(p["rgb_b"], axis=0)[:, None]                       # (3, 1)

    # batch-invariant fused feature slab: fourier || sampled embeddings, (768, N)
    # (torch.meshgrid 'ij', n = i*R + j).  Computed once here; the kernel never
    # recomputes sin per batch / per tile.
    lin = jnp.linspace(-1.0, 1.0, R)
    xx, yy = jnp.meshgrid(lin, lin, indexing="ij")
    coords_cn = jnp.stack([xx.reshape(-1), yy.reshape(-1)], 0)            # (2, N)
    ff = jnp.sin(p["fourier_B"].T @ coords_cn)                            # (256, N)
    emb_cn = grid_sample_separable(p["coord_emb"][0], R)                  # (512, N)
    feat_cn = jnp.concatenate([ff, emb_cn], axis=0).astype(jnp.bfloat16)  # (768, N)

    TN = _pick_pixel_tile(N)
    NT = N // TN

    rgb_cn = pl.pallas_call(
        cips_mlp_kernel,
        out_shape=jax.ShapeDtypeStruct((Bsz, 3, N), jnp.float32),
        grid=(Bsz, NT),
        in_specs=[
            pl.BlockSpec((FEAT0, TN), lambda b, n: (0, n)),              # shared feat slab
            pl.BlockSpec((1, 1, FEAT0), lambda b, n: (b, 0, 0)),         # style, layer 0
            pl.BlockSpec((HIDDEN, FEAT0), lambda b, n: (0, 0)),          # W0^T (shared bf16)
            pl.BlockSpec((HIDDEN, 1), lambda b, n: (0, 0)),              # fc0 bias (col)
            pl.BlockSpec((1, 4, 1, HIDDEN), lambda b, n: (b, 0, 0, 0)),  # styles, layers 1..4
            pl.BlockSpec((4, HIDDEN, HIDDEN), lambda b, n: (0, 0, 0)),   # W1..4^T (shared bf16)
            pl.BlockSpec((4, HIDDEN, 1), lambda b, n: (0, 0, 0)),        # fc1..4 bias (col)
            pl.BlockSpec((1, 3, 1, HIDDEN), lambda b, n: (b, 0, 0, 0)),  # rgb styles
            pl.BlockSpec((3, 3, HIDDEN), lambda b, n: (0, 0, 0)),        # rgb W^T (shared bf16)
            pl.BlockSpec((3, 1), lambda b, n: (0, 0)),                   # summed rgb bias
        ],
        out_specs=pl.BlockSpec((1, 3, TN), lambda b, n: (b, 0, n)),
        compiler_params=pltpu.CompilerParams(
            dimension_semantics=("parallel", "parallel"),
            vmem_limit_bytes=48 * 1024 * 1024,    # headroom under v7x's 64 MiB
        ),
    )(feat_cn, s0_in, w0T, b0_col, sr_in, wrT, br_col, srgb_in, wrgbT, brgb_col)

    # (B, 3, N) is already channel-major; NCHW is just a reshape (no transpose).
    return rgb_cn.reshape(Bsz, 3, R, R)


# --------------------------- deterministic params -----------------------------
def init_params(key):
    ks = jax.random.split(key, 22)

    def lin_w(k, fan_in, shape):
        return jax.random.normal(k, shape, jnp.float32) / jnp.sqrt(fan_in)

    def lin_b(k, shape):
        return jax.random.normal(k, shape, jnp.float32) * 0.01

    p = {}
    p["map_w1"] = lin_w(ks[0], INPUT_DIM, (INPUT_DIM, STYLE_DIM))
    p["map_b1"] = lin_b(ks[1], (STYLE_DIM,))
    p["map_w2"] = lin_w(ks[2], STYLE_DIM, (STYLE_DIM, STYLE_DIM))
    p["map_b2"] = lin_b(ks[3], (STYLE_DIM,))
    p["map_w3"] = lin_w(ks[4], STYLE_DIM, (STYLE_DIM, STYLE_DIM))
    p["map_b3"] = lin_b(ks[5], (STYLE_DIM,))
    p["fourier_B"] = jax.random.normal(ks[6], (2, FOURIER_DIM), jnp.float32) * 10.0
    p["coord_emb"] = jax.random.normal(ks[7], (1, EMB_DIM, MAX_RES, MAX_RES), jnp.float32)
    # layer 0 (ModulatedFC 768 -> 128)
    p["mod_w0"] = lin_w(ks[8], STYLE_DIM, (STYLE_DIM, FEAT0))
    p["mod_b0"] = lin_b(ks[9], (FEAT0,))
    p["fc0_w"] = lin_w(ks[10], FEAT0, (FEAT0, HIDDEN))
    p["fc0_b"] = lin_b(ks[11], (HIDDEN,))
    # layers 1..4 (ModulatedFC 128 -> 128); only 5 of num_layers=8 run (zip trunc)
    p["mod_wr"] = lin_w(ks[12], STYLE_DIM, (4, STYLE_DIM, HIDDEN))
    p["mod_br"] = lin_b(ks[13], (4, HIDDEN))
    p["fcr_w"] = lin_w(ks[14], HIDDEN, (4, HIDDEN, HIDDEN))
    p["fcr_b"] = lin_b(ks[15], (4, HIDDEN))
    # to_rgb modules actually used in forward: indices 0, 2, 4 (taps at i=0,2,4)
    p["rgb_mod_w"] = lin_w(ks[16], STYLE_DIM, (3, STYLE_DIM, HIDDEN))
    p["rgb_mod_b"] = lin_b(ks[17], (3, HIDDEN))
    p["rgb_w"] = lin_w(ks[18], HIDDEN, (3, HIDDEN, 3))
    p["rgb_b"] = lin_b(ks[19], (3, 3))
    return p


# ------------------------------ pure-JAX reference ----------------------------
def reference_forward(x, p, R):
    Bsz = x.shape[0]
    w = jnp.maximum(x @ p["map_w1"] + p["map_b1"], 0.0)
    w = jnp.maximum(w @ p["map_w2"] + p["map_b2"], 0.0)
    w = w @ p["map_w3"] + p["map_b3"]

    lin = jnp.linspace(-1.0, 1.0, R)
    xx, yy = jnp.meshgrid(lin, lin, indexing="ij")
    coords_flat = jnp.stack([xx, yy], -1).reshape(R * R, 2).astype(jnp.float32)
    coords_flat = jnp.broadcast_to(coords_flat[None], (Bsz, R * R, 2))
    ff = jnp.sin(coords_flat @ p["fourier_B"])
    emb_flat = jnp.broadcast_to(grid_sample_separable(p["coord_emb"][0], R).T[None],
                                (Bsz, R * R, EMB_DIM))
    feat = jnp.concatenate([ff, emb_flat], axis=-1)

    fc_ws = [p["fc0_w"]] + [p["fcr_w"][k] for k in range(4)]
    fc_bs = [p["fc0_b"]] + [p["fcr_b"][k] for k in range(4)]
    mod_ws = [p["mod_w0"]] + [p["mod_wr"][k] for k in range(4)]
    mod_bs = [p["mod_b0"]] + [p["mod_br"][k] for k in range(4)]

    rgb = 0.0
    for i in range(5):
        style = w @ mod_ws[i] + mod_bs[i]
        feat = jnp.einsum("bnc,cd->bnd", feat * style[:, None, :], fc_ws[i]) + fc_bs[i]
        feat = jnp.where(feat >= 0, feat, 0.2 * feat)
        if i % 2 == 0:
            k = i // 2
            rs = w @ p["rgb_mod_w"][k] + p["rgb_mod_b"][k]
            rgb = rgb + jnp.einsum("bnc,cd->bnd", feat * rs[:, None, :],
                                   p["rgb_w"][k]) + p["rgb_b"][k]
    out = jax.nn.sigmoid(rgb).reshape(Bsz, R, R, 3).transpose(0, 3, 1, 2)
    return out * 2.0 - 1.0


# ------------------------------------ main -------------------------------------
if __name__ == "__main__":
    key = jax.random.PRNGKey(0)
    pkey, xkey = jax.random.split(key)
    params = init_params(pkey)
    x = jax.random.normal(xkey, (B, INPUT_DIM), jnp.float32)

    fwd = jax.jit(functools.partial(cips_forward, R=TARGET_RES))
    out = jax.block_until_ready(fwd(x, params))

    assert out.shape == (B, 3, TARGET_RES, TARGET_RES), out.shape
    ref = reference_forward(x, params, TARGET_RES)
    err = float(jnp.max(jnp.abs(out - ref)))
    assert err < 5e-2, f"max abs err too large: {err}"
    print("KERNEL_OK")
</pallas_src>

<mosaic_0001>
module attributes {stable_mosaic.version = 11 : i64} {
  func.func @cips_mlp_kernel(%arg0: i32, %arg1: i32, %arg2: memref<768x256xbf16, #tpu.memory_space<vmem>>, %arg3: memref<1x1x768xf32, #tpu.memory_space<vmem>>, %arg4: memref<128x768xbf16, #tpu.memory_space<vmem>>, %arg5: memref<128x1xf32, #tpu.memory_space<vmem>>, %arg6: memref<1x4x1x128xf32, #tpu.memory_space<vmem>>, %arg7: memref<4x128x128xbf16, #tpu.memory_space<vmem>>, %arg8: memref<4x128x1xf32, #tpu.memory_space<vmem>>, %arg9: memref<1x3x1x128xf32, #tpu.memory_space<vmem>>, %arg10: memref<3x3x128xbf16, #tpu.memory_space<vmem>>, %arg11: memref<3x1xf32, #tpu.memory_space<vmem>>, %arg12: memref<1x3x256xf32, #tpu.memory_space<vmem>>) attributes {dimension_semantics = [#tpu.dimension_semantics<parallel>, #tpu.dimension_semantics<parallel>], iteration_bounds = array<i64: 2, 1>, scalar_prefetch = 0 : i64, scratch_operands = 0 : i64, tpu.core_type = #tpu.core_type<tc>, window_params = [{transform_indices = @transform_0, window_bounds = array<i64: 768, 256>}, {transform_indices = @transform_1, window_bounds = array<i64: 1, 1, 768>}, {pipeline_mode = #tpu.pipeline_mode<synchronous>, transform_indices = @transform_2, window_bounds = array<i64: 128, 768>}, {pipeline_mode = #tpu.pipeline_mode<synchronous>, transform_indices = @transform_3, window_bounds = array<i64: 128, 1>}, {transform_indices = @transform_4, window_bounds = array<i64: 1, 4, 1, 128>}, {pipeline_mode = #tpu.pipeline_mode<synchronous>, transform_indices = @transform_5, window_bounds = array<i64: 4, 128, 128>}, {pipeline_mode = #tpu.pipeline_mode<synchronous>, transform_indices = @transform_6, window_bounds = array<i64: 4, 128, 1>}, {transform_indices = @transform_7, window_bounds = array<i64: 1, 3, 1, 128>}, {pipeline_mode = #tpu.pipeline_mode<synchronous>, transform_indices = @transform_8, window_bounds = array<i64: 3, 3, 128>}, {pipeline_mode = #tpu.pipeline_mode<synchronous>, transform_indices = @transform_9, window_bounds = array<i64: 3, 1>}, {transform_indices = @transform_10, window_bounds = array<i64: 1, 3, 256>}]} {
    %c0 = arith.constant 0 : index
    %c0_0 = arith.constant 0 : index
    %0 = vector.load %arg2[%c0, %c0_0] : memref<768x256xbf16, #tpu.memory_space<vmem>>, vector<768x256xbf16>
    %c0_1 = arith.constant 0 : index
    %c0_2 = arith.constant 0 : index
    %1 = vector.load %arg4[%c0_1, %c0_2] : memref<128x768xbf16, #tpu.memory_space<vmem>>, vector<128x768xbf16>
    %c0_3 = arith.constant 0 : index
    %c0_4 = arith.constant 0 : index
    %c0_5 = arith.constant 0 : index
    %2 = vector.load %arg3[%c0_3, %c0_4, %c0_5] : memref<1x1x768xf32, #tpu.memory_space<vmem>>, vector<1x1x768xf32>
    %3 = vector.shape_cast %2 : vector<1x1x768xf32> to vector<1x768xf32>
    %4 = arith.extf %1 : vector<128x768xbf16> to vector<128x768xf32>
    %5 = vector.broadcast %3 : vector<1x768xf32> to vector<128x768xf32>
    %6 = arith.mulf %4, %5 : vector<128x768xf32>
    %7 = arith.truncf %6 : vector<128x768xf32> to vector<128x768xbf16>
    %cst = arith.constant dense<0.000000e+00> : vector<128x256xf32>
    %8 = tpu.matmul %7, %0, %cst {dimension_numbers = #tpu.dot_dimension_numbers<[1], [0], [0], [1], [0, 0, 1, 1], [], []>} : vector<128x768xbf16>, vector<768x256xbf16>, vector<128x256xf32> -> vector<128x256xf32>
    %c0_6 = arith.constant 0 : index
    %c0_7 = arith.constant 0 : index
    %9 = vector.load %arg5[%c0_6, %c0_7] : memref<128x1xf32, #tpu.memory_space<vmem>>, vector<128x1xf32>
    %10 = vector.broadcast %9 : vector<128x1xf32> to vector<128x256xf32>
    %11 = arith.addf %8, %10 : vector<128x256xf32>
    %cst_8 = arith.constant 2.000000e-01 : f32
    %12 = vector.broadcast %cst_8 : f32 to vector<128x256xf32>
    %13 = arith.mulf %12, %11 : vector<128x256xf32>
    %14 = arith.maximumf %11, %13 : vector<128x256xf32>
    %c0_9 = arith.constant 0 : index
    %c0_10 = arith.constant 0 : index
    %c0_11 = arith.constant 0 : index
    %15 = vector.load %arg10[%c0_9, %c0_10, %c0_11] : memref<3x3x128xbf16, #tpu.memory_space<vmem>>, vector<1x3x128xbf16>
    %16 = vector.shape_cast %15 : vector<1x3x128xbf16> to vector<3x128xbf16>
    %c0_12 = arith.constant 0 : index
    %c0_13 = arith.constant 0 : index
    %c0_14 = arith.constant 0 : index
    %c0_15 = arith.constant 0 : index
    %17 = vector.load %arg9[%c0_12, %c0_13, %c0_14, %c0_15] : memref<1x3x1x128xf32, #tpu.memory_space<vmem>>, vector<1x1x1x128xf32>
    %18 = vector.shape_cast %17 : vector<1x1x1x128xf32> to vector<1x128xf32>
    %19 = arith.extf %16 : vector<3x128xbf16> to vector<3x128xf32>
    %20 = vector.broadcast %18 : vector<1x128xf32> to vector<3x128xf32>
    %21 = arith.mulf %19, %20 : vector<3x128xf32>
    %22 = arith.truncf %21 : vector<3x128xf32> to vector<3x128xbf16>
    %23 = arith.truncf %14 : vector<128x256xf32> to vector<128x256xbf16>
    %cst_16 = arith.constant dense<0.000000e+00> : vector<3x256xf32>
    %24 = tpu.matmul %22, %23, %cst_16 {dimension_numbers = #tpu.dot_dimension_numbers<[1], [0], [0], [1], [0, 0, 1, 1], [], []>} : vector<3x128xbf16>, vector<128x256xbf16>, vector<3x256xf32> -> vector<3x256xf32>
    %c0_17 = arith.constant 0 : index
    %c0_18 = arith.constant 0 : index
    %c0_19 = arith.constant 0 : index
    %25 = vector.load %arg7[%c0_17, %c0_18, %c0_19] : memref<4x128x128xbf16, #tpu.memory_space<vmem>>, vector<1x128x128xbf16>
    %26 = vector.shape_cast %25 : vector<1x128x128xbf16> to vector<128x128xbf16>
    %c0_20 = arith.constant 0 : index
    %c0_21 = arith.constant 0 : index
    %c0_22 = arith.constant 0 : index
    %c0_23 = arith.constant 0 : index
    %27 = vector.load %arg6[%c0_20, %c0_21, %c0_22, %c0_23] : memref<1x4x1x128xf32, #tpu.memory_space<vmem>>, vector<1x1x1x128xf32>
    %28 = vector.shape_cast %27 : vector<1x1x1x128xf32> to vector<1x128xf32>
    %29 = arith.extf %26 : vector<128x128xbf16> to vector<128x128xf32>
    %30 = vector.broadcast %28 : vector<1x128xf32> to vector<128x128xf32>
    %31 = arith.mulf %29, %30 : vector<128x128xf32>
    %32 = arith.truncf %31 : vector<128x128xf32> to vector<128x128xbf16>
    %33 = arith.truncf %14 : vector<128x256xf32> to vector<128x256xbf16>
    %cst_24 = arith.constant dense<0.000000e+00> : vector<128x256xf32>
    %34 = tpu.matmul %32, %33, %cst_24 {dimension_numbers = #tpu.dot_dimension_numbers<[1], [0], [0], [1], [0, 0, 1, 1], [], []>} : vector<128x128xbf16>, vector<128x256xbf16>, vector<128x256xf32> -> vector<128x256xf32>
    %c0_25 = arith.constant 0 : index
    %c0_26 = arith.constant 0 : index
    %c0_27 = arith.constant 0 : index
    %35 = vector.load %arg8[%c0_25, %c0_26, %c0_27] : memref<4x128x1xf32, #tpu.memory_space<vmem>>, vector<1x128x1xf32>
    %36 = vector.shape_cast %35 : vector<1x128x1xf32> to vector<128x1xf32>
    %37 = vector.broadcast %36 : vector<128x1xf32> to vector<128x256xf32>
    %38 = arith.addf %34, %37 : vector<128x256xf32>
    %cst_28 = arith.constant 2.000000e-01 : f32
    %39 = vector.broadcast %cst_28 : f32 to vector<128x256xf32>
    %40 = arith.mulf %39, %38 : vector<128x256xf32>
    %41 = arith.maximumf %38, %40 : vector<128x256xf32>
    %c1 = arith.constant 1 : index
    %c0_29 = arith.constant 0 : index
    %c0_30 = arith.constant 0 : index
    %42 = vector.load %arg7[%c1, %c0_29, %c0_30] : memref<4x128x128xbf16, #tpu.memory_space<vmem>>, vector<1x128x128xbf16>
    %43 = vector.shape_cast %42 : vector<1x128x128xbf16> to vector<128x128xbf16>
    %c0_31 = arith.constant 0 : index
    %c1_32 = arith.constant 1 : index
    %c0_33 = arith.constant 0 : index
    %c0_34 = arith.constant 0 : index
    %44 = vector.load %arg6[%c0_31, %c1_32, %c0_33, %c0_34] : memref<1x4x1x128xf32, #tpu.memory_space<vmem>>, vector<1x1x1x128xf32>
    %45 = vector.shape_cast %44 : vector<1x1x1x128xf32> to vector<1x128xf32>
    %46 = arith.extf %43 : vector<128x128xbf16> to vector<128x128xf32>
    %47 = vector.broadcast %45 : vector<1x128xf32> to vector<128x128xf32>
    %48 = arith.mulf %46, %47 : vector<128x128xf32>
    %49 = arith.truncf %48 : vector<128x128xf32> to vector<128x128xbf16>
    %50 = arith.truncf %41 : vector<128x256xf32> to vector<128x256xbf16>
    %cst_35 = arith.constant dense<0.000000e+00> : vector<128x256xf32>
    %51 = tpu.matmul %49, %50, %cst_35 {dimension_numbers = #tpu.dot_dimension_numbers<[1], [0], [0], [1], [0, 0, 1, 1], [], []>} : vector<128x128xbf16>, vector<128x256xbf16>, vector<128x256xf32> -> vector<128x256xf32>
    %c1_36 = arith.constant 1 : index
    %c0_37 = arith.constant 0 : index
    %c0_38 = arith.constant 0 : index
    %52 = vector.load %arg8[%c1_36, %c0_37, %c0_38] : memref<4x128x1xf32, #tpu.memory_space<vmem>>, vector<1x128x1xf32>
    %53 = vector.shape_cast %52 : vector<1x128x1xf32> to vector<128x1xf32>
    %54 = vector.broadcast %53 : vector<128x1xf32> to vector<128x256xf32>
    %55 = arith.addf %51, %54 : vector<128x256xf32>
    %cst_39 = arith.constant 2.000000e-01 : f32
    %56 = vector.broadcast %cst_39 : f32 to vector<128x256xf32>
    %57 = arith.mulf %56, %55 : vector<128x256xf32>
    %58 = arith.maximumf %55, %57 : vector<128x256xf32>
    %c1_40 = arith.constant 1 : index
    %c0_41 = arith.constant 0 : index
    %c0_42 = arith.constant 0 : index
    %59 = vector.load %arg10[%c1_40, %c0_41, %c0_42] : memref<3x3x128xbf16, #tpu.memory_space<vmem>>, vector<1x3x128xbf16>
    %60 = vector.shape_cast %59 : vector<1x3x128xbf16> to vector<3x128xbf16>
    %c0_43 = arith.constant 0 : index
    %c1_44 = arith.constant 1 : index
    %c0_45 = arith.constant 0 : index
    %c0_46 = arith.constant 0 : index
    %61 = vector.load %arg9[%c0_43, %c1_44, %c0_45, %c0_46] : memref<1x3x1x128xf32, #tpu.memory_space<vmem>>, vector<1x1x1x128xf32>
    %62 = vector.shape_cast %61 : vector<1x1x1x128xf32> to vector<1x128xf32>
    %63 = arith.extf %60 : vector<3x128xbf16> to vector<3x128xf32>
    %64 = vector.broadcast %62 : vector<1x128xf32> to vector<3x128xf32>
    %65 = arith.mulf %63, %64 : vector<3x128xf32>
    %66 = arith.truncf %65 : vector<3x128xf32> to vector<3x128xbf16>
    %67 = arith.truncf %58 : vector<128x256xf32> to vector<128x256xbf16>
    %cst_47 = arith.constant dense<0.000000e+00> : vector<3x256xf32>
    %68 = tpu.matmul %66, %67, %cst_47 {dimension_numbers = #tpu.dot_dimension_numbers<[1], [0], [0], [1], [0, 0, 1, 1], [], []>} : vector<3x128xbf16>, vector<128x256xbf16>, vector<3x256xf32> -> vector<3x256xf32>
    %69 = arith.addf %24, %68 : vector<3x256xf32>
    %c2 = arith.constant 2 : index
    %c0_48 = arith.constant 0 : index
    %c0_49 = arith.constant 0 : index
    %70 = vector.load %arg7[%c2, %c0_48, %c0_49] : memref<4x128x128xbf16, #tpu.memory_space<vmem>>, vector<1x128x128xbf16>
    %71 = vector.shape_cast %70 : vector<1x128x128xbf16> to vector<128x128xbf16>
    %c0_50 = arith.constant 0 : index
    %c2_51 = arith.constant 2 : index
    %c0_52 = arith.constant 0 : index
    %c0_53 = arith.constant 0 : index
    %72 = vector.load %arg6[%c0_50, %c2_51, %c0_52, %c0_53] : memref<1x4x1x128xf32, #tpu.memory_space<vmem>>, vector<1x1x1x128xf32>
    %73 = vector.shape_cast %72 : vector<1x1x1x128xf32> to vector<1x128xf32>
    %74 = arith.extf %71 : vector<128x128xbf16> to vector<128x128xf32>
    %75 = vector.broadcast %73 : vector<1x128xf32> to vector<128x128xf32>
    %76 = arith.mulf %74, %75 : vector<128x128xf32>
    %77 = arith.truncf %76 : vector<128x128xf32> to vector<128x128xbf16>
    %78 = arith.truncf %58 : vector<128x256xf32> to vector<128x256xbf16>
    %cst_54 = arith.constant dense<0.000000e+00> : vector<128x256xf32>
    %79 = tpu.matmul %77, %78, %cst_54 {dimension_numbers = #tpu.dot_dimension_numbers<[1], [0], [0], [1], [0, 0, 1, 1], [], []>} : vector<128x128xbf16>, vector<128x256xbf16>, vector<128x256xf32> -> vector<128x256xf32>
    %c2_55 = arith.constant 2 : index
    %c0_56 = arith.constant 0 : index
    %c0_57 = arith.constant 0 : index
    %80 = vector.load %arg8[%c2_55, %c0_56, %c0_57] : memref<4x128x1xf32, #tpu.memory_space<vmem>>, vector<1x128x1xf32>
    %81 = vector.shape_cast %80 : vector<1x128x1xf32> to vector<128x1xf32>
    %82 = vector.broadcast %81 : vector<128x1xf32> to vector<128x256xf32>
    %83 = arith.addf %79, %82 : vector<128x256xf32>
    %cst_58 = arith.constant 2.000000e-01 : f32
    %84 = vector.broadcast %cst_58 : f32 to vector<128x256xf32>
    %85 = arith.mulf %84, %83 : vector<128x256xf32>
    %86 = arith.maximumf %83, %85 : vector<128x256xf32>
    %c3 = arith.constant 3 : index
    %c0_59 = arith.constant 0 : index
    %c0_60 = arith.constant 0 : index
    %87 = vector.load %arg7[%c3, %c0_59, %c0_60] : memref<4x128x128xbf16, #tpu.memory_space<vmem>>, vector<1x128x128xbf16>
    %88 = vector.shape_cast %87 : vector<1x128x128xbf16> to vector<128x128xbf16>
    %c0_61 = arith.constant 0 : index
    %c3_62 = arith.constant 3 : index
    %c0_63 = arith.constant 0 : index
    %c0_64 = arith.constant 0 : index
    %89 = vector.load %arg6[%c0_61, %c3_62, %c0_63, %c0_64] : memref<1x4x1x128xf32, #tpu.memory_space<vmem>>, vector<1x1x1x128xf32>
    %90 = vector.shape_cast %89 : vector<1x1x1x128xf32> to vector<1x128xf32>
    %91 = arith.extf %88 : vector<128x128xbf16> to vector<128x128xf32>
    %92 = vector.broadcast %90 : vector<1x128xf32> to vector<128x128xf32>
    %93 = arith.mulf %91, %92 : vector<128x128xf32>
    %94 = arith.truncf %93 : vector<128x128xf32> to vector<128x128xbf16>
    %95 = arith.truncf %86 : vector<128x256xf32> to vector<128x256xbf16>
    %cst_65 = arith.constant dense<0.000000e+00> : vector<128x256xf32>
    %96 = tpu.matmul %94, %95, %cst_65 {dimension_numbers = #tpu.dot_dimension_numbers<[1], [0], [0], [1], [0, 0, 1, 1], [], []>} : vector<128x128xbf16>, vector<128x256xbf16>, vector<128x256xf32> -> vector<128x256xf32>
    %c3_66 = arith.constant 3 : index
    %c0_67 = arith.constant 0 : index
    %c0_68 = arith.constant 0 : index
    %97 = vector.load %arg8[%c3_66, %c0_67, %c0_68] : memref<4x128x1xf32, #tpu.memory_space<vmem>>, vector<1x128x1xf32>
    %98 = vector.shape_cast %97 : vector<1x128x1xf32> to vector<128x1xf32>
    %99 = vector.broadcast %98 : vector<128x1xf32> to vector<128x256xf32>
    %100 = arith.addf %96, %99 : vector<128x256xf32>
    %cst_69 = arith.constant 2.000000e-01 : f32
    %101 = vector.broadcast %cst_69 : f32 to vector<128x256xf32>
    %102 = arith.mulf %101, %100 : vector<128x256xf32>
    %103 = arith.maximumf %100, %102 : vector<128x256xf32>
    %c2_70 = arith.constant 2 : index
    %c0_71 = arith.constant 0 : index
    %c0_72 = arith.constant 0 : index
    %104 = vector.load %arg10[%c2_70, %c0_71, %c0_72] : memref<3x3x128xbf16, #tpu.memory_space<vmem>>, vector<1x3x128xbf16>
    %105 = vector.shape_cast %104 : vector<1x3x128xbf16> to vector<3x128xbf16>
    %c0_73 = arith.constant 0 : index
    %c2_74 = arith.constant 2 : index
    %c0_75 = arith.constant 0 : index
    %c0_76 = arith.constant 0 : index
    %106 = vector.load %arg9[%c0_73, %c2_74, %c0_75, %c0_76] : memref<1x3x1x128xf32, #tpu.memory_space<vmem>>, vector<1x1x1x128xf32>
    %107 = vector.shape_cast %106 : vector<1x1x1x128xf32> to vector<1x128xf32>
    %108 = arith.extf %105 : vector<3x128xbf16> to vector<3x128xf32>
    %109 = vector.broadcast %107 : vector<1x128xf32> to vector<3x128xf32>
    %110 = arith.mulf %108, %109 : vector<3x128xf32>
    %111 = arith.truncf %110 : vector<3x128xf32> to vector<3x128xbf16>
    %112 = arith.truncf %103 : vector<128x256xf32> to vector<128x256xbf16>
    %cst_77 = arith.constant dense<0.000000e+00> : vector<3x256xf32>
    %113 = tpu.matmul %111, %112, %cst_77 {dimension_numbers = #tpu.dot_dimension_numbers<[1], [0], [0], [1], [0, 0, 1, 1], [], []>} : vector<3x128xbf16>, vector<128x256xbf16>, vector<3x256xf32> -> vector<3x256xf32>
    %114 = arith.addf %69, %113 : vector<3x256xf32>
    %c0_78 = arith.constant 0 : index
    %c0_79 = arith.constant 0 : index
    %115 = vector.load %arg11[%c0_78, %c0_79] : memref<3x1xf32, #tpu.memory_space<vmem>>, vector<3x1xf32>
    %116 = vector.broadcast %115 : vector<3x1xf32> to vector<3x256xf32>
    %117 = arith.addf %114, %116 : vector<3x256xf32>
    %118 = arith.negf %117 : vector<3x256xf32>
    %119 = math.exp %118 : vector<3x256xf32>
    %cst_80 = arith.constant 1.000000e+00 : f32
    %120 = vector.broadcast %cst_80 : f32 to vector<3x256xf32>
    %121 = arith.addf %120, %119 : vector<3x256xf32>
    %122 = arith.divf %120, %121 : vector<3x256xf32>
    %cst_81 = arith.constant 2.000000e+00 : f32
    %123 = vector.broadcast %cst_81 : f32 to vector<3x256xf32>
    %124 = arith.mulf %122, %123 : vector<3x256xf32>
    %cst_82 = arith.constant 1.000000e+00 : f32
    %125 = vector.broadcast %cst_82 : f32 to vector<3x256xf32>
    %126 = arith.subf %124, %125 : vector<3x256xf32>
    %c0_83 = arith.constant 0 : index
    %c0_84 = arith.constant 0 : index
    %c0_85 = arith.constant 0 : index
    %127 = vector.load %arg12[%c0_83, %c0_84, %c0_85] : memref<1x3x256xf32, #tpu.memory_space<vmem>>, vector<1x3x256xf32>
    %128 = vector.shape_cast %127 : vector<1x3x256xf32> to vector<3x256xf32>
    %129 = vector.shape_cast %126 : vector<3x256xf32> to vector<1x3x256xf32>
    tpu.vector_store %arg12[%c0_83, %c0_84, %c0_85], %129 {strides = array<i32>} : memref<1x3x256xf32, #tpu.memory_space<vmem>>, vector<1x3x256xf32>,
    return
  }
  func.func @transform_0(%arg0: i32, %arg1: i32) -> (i32, i32) {
    %c0_i32 = arith.constant 0 : i32
    %c0_i32_0 = arith.constant 0 : i32
    return %c0_i32, %arg1 : i32, i32
  }
  func.func @transform_1(%arg0: i32, %arg1: i32) -> (i32, i32, i32) {
    %c0_i32 = arith.constant 0 : i32
    %c0_i32_0 = arith.constant 0 : i32
    %c0_i32_1 = arith.constant 0 : i32
    return %arg0, %c0_i32, %c0_i32_0 : i32, i32, i32
  }
  func.func @transform_2(%arg0: i32, %arg1: i32) -> (i32, i32) {
    %c0_i32 = arith.constant 0 : i32
    %c0_i32_0 = arith.constant 0 : i32
    %c0_i32_1 = arith.constant 0 : i32
    return %c0_i32, %c0_i32_0 : i32, i32
  }
  func.func @transform_3(%arg0: i32, %arg1: i32) -> (i32, i32) {
    %c0_i32 = arith.constant 0 : i32
    %c0_i32_0 = arith.constant 0 : i32
    %c0_i32_1 = arith.constant 0 : i32
    return %c0_i32, %c0_i32_0 : i32, i32
  }
  func.func @transform_4(%arg0: i32, %arg1: i32) -> (i32, i32, i32, i32) {
    %c0_i32 = arith.constant 0 : i32
    %c0_i32_0 = arith.constant 0 : i32
    %c0_i32_1 = arith.constant 0 : i32
    %c0_i32_2 = arith.constant 0 : i32
    return %arg0, %c0_i32, %c0_i32_0, %c0_i32_1 : i32, i32, i32, i32
  }
  func.func @transform_5(%arg0: i32, %arg1: i32) -> (i32, i32, i32) {
    %c0_i32 = arith.constant 0 : i32
    %c0_i32_0 = arith.constant 0 : i32
    %c0_i32_1 = arith.constant 0 : i32
    %c0_i32_2 = arith.constant 0 : i32
    return %c0_i32, %c0_i32_0, %c0_i32_1 : i32, i32, i32
  }
  func.func @transform_6(%arg0: i32, %arg1: i32) -> (i32, i32, i32) {
    %c0_i32 = arith.constant 0 : i32
    %c0_i32_0 = arith.constant 0 : i32
    %c0_i32_1 = arith.constant 0 : i32
    %c0_i32_2 = arith.constant 0 : i32
    return %c0_i32, %c0_i32_0, %c0_i32_1 : i32, i32, i32
  }
  func.func @transform_7(%arg0: i32, %arg1: i32) -> (i32, i32, i32, i32) {
    %c0_i32 = arith.constant 0 : i32
    %c0_i32_0 = arith.constant 0 : i32
    %c0_i32_1 = arith.constant 0 : i32
    %c0_i32_2 = arith.constant 0 : i32
    return %arg0, %c0_i32, %c0_i32_0, %c0_i32_1 : i32, i32, i32, i32
  }
  func.func @transform_8(%arg0: i32, %arg1: i32) -> (i32, i32, i32) {
    %c0_i32 = arith.constant 0 : i32
    %c0_i32_0 = arith.constant 0 : i32
    %c0_i32_1 = arith.constant 0 : i32
    %c0_i32_2 = arith.constant 0 : i32
    return %c0_i32, %c0_i32_0, %c0_i32_1 : i32, i32, i32
  }
  func.func @transform_9(%arg0: i32, %arg1: i32) -> (i32, i32) {
    %c0_i32 = arith.constant 0 : i32
    %c0_i32_0 = arith.constant 0 : i32
    %c0_i32_1 = arith.constant 0 : i32
    return %c0_i32, %c0_i32_0 : i32, i32
  }
  func.func @transform_10(%arg0: i32, %arg1: i32) -> (i32, i32, i32) {
    %c0_i32 = arith.constant 0 : i32
    %c0_i32_0 = arith.constant 0 : i32
    return %arg0, %c0_i32, %arg1 : i32, i32, i32
  }
}

</mosaic_0001>

<llo_original>
// kernel: cips_forward.1
$region0: #{cips_forward.1}
  #allocation0 [shape = 'u32[]', space=smem, size = 0x4, offset = 0x4, fixed_abs, tag = 'smem constant byte address 0x4 - core index']
  #allocation1 [shape = 'u32[144,128]{1,0:T(1,128)}', space=vmem, size = 0x12000, scoped, tag = 'internal scratch']
  %s0 = inlined_call_operand.vmem [shape: bf16[768,256], index: 0, kind: input, shape index: {}]
  %s1 = inlined_call_operand.vmem [shape: f32[2,1,768], index: 1, kind: input, shape index: {}]
  %s2 = inlined_call_operand.vmem [shape: bf16[128,768], index: 2, kind: input, shape index: {}]
  %s3 = inlined_call_operand.vmem [shape: f32[128,1], index: 3, kind: input, shape index: {}]
  %s4 = inlined_call_operand.vmem [shape: f32[2,4,1,128], index: 4, kind: input, shape index: {}]
  %s5 = inlined_call_operand.vmem [shape: bf16[4,128,128], index: 5, kind: input, shape index: {}]
  %s6 = inlined_call_operand.vmem [shape: f32[4,128,1], index: 6, kind: input, shape index: {}]
  %s7 = inlined_call_operand.vmem [shape: f32[2,3,1,128], index: 7, kind: input, shape index: {}]
  %s8 = inlined_call_operand.vmem [shape: bf16[3,3,128], index: 8, kind: input, shape index: {}]
  %s9 = inlined_call_operand.vmem [shape: f32[3,1], index: 9, kind: input, shape index: {}]
  %s10 = inlined_call_operand.vmem [shape: f32[2,3,256], index: 10, kind: output, shape index: {}]
  %s11 = sld [smem:[#allocation0]]
  $region73: #{cips_forward.1} parent=0
    _
  %s13 = ssub.s32 1, %s11
  %s14 = scalar_select 0, %s13, %s11
  loop: start=0, step=1, limit=4
  $region2: #{cips_forward.1} parent=0 // loop_pre_header
    _
  $region3: #{cips_forward.1} parent=0 // loop_header
    %s16 = sphi 0, %s20
    %p17 = scmp.ge.s32.totalorder %s16, 4
    %s23 = sphi 0, %s35
    %s24 = sphi 0, %s31
    %s25 = sphi 0, %s23
    %s26 = sphi 0, %s24
    %s27 = sphi 0, %s25
    %s28 = sphi 0, %s26
    %s38 = sphi 0, %s40
    %s41 = sphi 0, %s38
    %s42 = sphi 0, %s41
    %s58 = sphi 0, %s42
    %s64 = sphi 0, %s66
    %s67 = sphi 0, %s64
    %s68 = sphi 0, %s67
    %s84 = sphi 0, %s68
    %s88 = sphi 0, %s88
    %s90 = sphi 0, %s88
    %s91 = sphi 0, %s90
    %s105 = sphi 0, %s91
    %s109 = sphi 0, %s109
    %s111 = sphi 0, %s109
    %s112 = sphi 0, %s111
    %s126 = sphi 0, %s112
    %s132 = sphi 0, %s134
    %s135 = sphi 0, %s132
    %s136 = sphi 0, %s135
    %s152 = sphi 0, %s136
    %s156 = sphi 0, %s156
    %s158 = sphi 0, %s156
    %s159 = sphi 0, %s158
    %s173 = sphi 0, %s159
    %s177 = sphi 0, %s177
    %s179 = sphi 0, %s177
    %s180 = sphi 0, %s179
    %s194 = sphi 0, %s180
    %s200 = sphi 0, %s202
    %s203 = sphi 0, %s200
    %s204 = sphi 0, %s203
    %s220 = sphi 0, %s204
    %s224 = sphi 0, %s224
    %s226 = sphi 0, %s224
    %s227 = sphi 0, %s226
    %s241 = sphi 0, %s227
    %s245 = sphi 0, %s245
    %s247 = sphi 0, %s245
    %s248 = sphi 0, %s247
    %s262 = sphi 0, %s248
    %s270 = sphi 0, %s272
    %s273 = sphi 0, %s270
    %s274 = sphi 0, %s273
    %s290 = sphi 0, %s274
  $region4: #{cips_forward.1} parent=0 // loop_header_branch
    %19 = sbr.rel (%p17) target = $region8
  $region5: #{cips_forward.1} parent=0 // loop_body
    %s21 = ssub.s32 %s16, 1
    %s22 = ssub.s32 %s16, 2
    %s29 = sadd.s32 1, %s24
    %p30 = scmp.ge.s32.totalorder %s29, 1
    %s31 = scalar_select %p30, 0, %s29
    %s32 = sadd.s32 1, %s23
    %s33 = scalar_select %p30, %s32, %s23
    %p34 = scmp.ge.s32.totalorder %s33, 2
    %s35 = scalar_select %p34, 0, %s33
    %s36 = ssub.s32 %s24, %s31
    %p37 = scmp.eq.s32.totalorder %s36, 0
    %s39 = sadd.s32 %s38, 1
    %s40 = scalar_select %p37, %s38, %s39
    %p43 = pneg %p37
    %p44 = scmp.eq.s32.totalorder %s16, 1
    %p45 = por %p43, %p44
    %p46 = scmp.ne.s32.totalorder %s38, %s41
    %p47 = scmp.eq.s32.totalorder %s16, 0
    %p48 = por %p46, %p47
    %p49 = scmp.ne.s32.totalorder %s38, %s41
    %p50 = scmp.eq.s32.totalorder %s21, 1
    %p51 = por %p49, %p50
    %p52 = scmp.ne.s32.totalorder %s41, %s42
    %p53 = scmp.eq.s32.totalorder %s21, 0
    %p54 = por %p52, %p53
    %p55 = scmp.ne.s32.totalorder %s41, %s42
    %p56 = scmp.eq.s32.totalorder %s22, 1
    %p57 = por %p55, %p56
    %p59 = scmp.ne.s32.totalorder %s42, %s58
    %p60 = scmp.eq.s32.totalorder %s22, 0
    %p61 = por %p59, %p60
    %s62 = ssub.s32 %s23, %s35
    %p63 = scmp.eq.s32.totalorder %s62, 0
    %s65 = sadd.s32 %s64, 1
    %s66 = scalar_select %p63, %s64, %s65
    %p69 = pneg %p63
    %p70 = scmp.eq.s32.totalorder %s16, 1
    %p71 = por %p69, %p70
    %p72 = scmp.ne.s32.totalorder %s64, %s67
    %p73 = scmp.eq.s32.totalorder %s16, 0
    %p74 = por %p72, %p73
    %p75 = scmp.ne.s32.totalorder %s64, %s67
    %p76 = scmp.eq.s32.totalorder %s21, 1
    %p77 = por %p75, %p76
    %p78 = scmp.ne.s32.totalorder %s67, %s68
    %p79 = scmp.eq.s32.totalorder %s21, 0
    %p80 = por %p78, %p79
    %p81 = scmp.ne.s32.totalorder %s67, %s68
    %p82 = scmp.eq.s32.totalorder %s22, 1
    %p83 = por %p81, %p82
    %p85 = scmp.ne.s32.totalorder %s68, %s84
    %p86 = scmp.eq.s32.totalorder %s22, 0
    %p87 = por %p85, %p86
    %s89 = sadd.s32 %s88, 1
    %p92 = scmp.eq.s32.totalorder %s16, 1
    %p93 = scmp.ne.s32.totalorder %s88, %s90
    %p94 = scmp.eq.s32.totalorder %s16, 0
    %p95 = por %p93, %p94
    %p96 = scmp.ne.s32.totalorder %s88, %s90
    %p97 = scmp.eq.s32.totalorder %s21, 1
    %p98 = por %p96, %p97
    %p99 = scmp.ne.s32.totalorder %s90, %s91
    %p100 = scmp.eq.s32.totalorder %s21, 0
    %p101 = por %p99, %p100
    %p102 = scmp.ne.s32.totalorder %s90, %s91
    %p103 = scmp.eq.s32.totalorder %s22, 1
    %p104 = por %p102, %p103
    %p106 = scmp.ne.s32.totalorder %s91, %s105
    %p107 = scmp.eq.s32.totalorder %s22, 0
    %p108 = por %p106, %p107
    %s110 = sadd.s32 %s109, 1
    %p113 = scmp.eq.s32.totalorder %s16, 1
    %p114 = scmp.ne.s32.totalorder %s109, %s111
    %p115 = scmp.eq.s32.totalorder %s16, 0
    %p116 = por %p114, %p115
    %p117 = scmp.ne.s32.totalorder %s109, %s111
    %p118 = scmp.eq.s32.totalorder %s21, 1
    %p119 = por %p117, %p118
    %p120 = scmp.ne.s32.totalorder %s111, %s112
    %p121 = scmp.eq.s32.totalorder %s21, 0
    %p122 = por %p120, %p121
    %p123 = scmp.ne.s32.totalorder %s111, %s112
    %p124 = scmp.eq.s32.totalorder %s22, 1
    %p125 = por %p123, %p124
    %p127 = scmp.ne.s32.totalorder %s112, %s126
    %p128 = scmp.eq.s32.totalorder %s22, 0
    %p129 = por %p127, %p128
    %s130 = ssub.s32 %s23, %s35
    %p131 = scmp.eq.s32.totalorder %s130, 0
    %s133 = sadd.s32 %s132, 1
    %s134 = scalar_select %p131, %s132, %s133
    %p137 = pneg %p131
    %p138 = scmp.eq.s32.totalorder %s16, 1
    %p139 = por %p137, %p138
    %p140 = scmp.ne.s32.totalorder %s132, %s135
    %p141 = scmp.eq.s32.totalorder %s16, 0
    %p142 = por %p140, %p141
    %p143 = scmp.ne.s32.totalorder %s132, %s135
    %p144 = scmp.eq.s32.totalorder %s21, 1
    %p145 = por %p143, %p144
    %p146 = scmp.ne.s32.totalorder %s135, %s136
    %p147 = scmp.eq.s32.totalorder %s21, 0
    %p148 = por %p146, %p147
    %p149 = scmp.ne.s32.totalorder %s135, %s136
    %p150 = scmp.eq.s32.totalorder %s22, 1
    %p151 = por %p149, %p150
    %p153 = scmp.ne.s32.totalorder %s136, %s152
    %p154 = scmp.eq.s32.totalorder %s22, 0
    %p155 = por %p153, %p154
    %s157 = sadd.s32 %s156, 1
    %p160 = scmp.eq.s32.totalorder %s16, 1
    %p161 = scmp.ne.s32.totalorder %s156, %s158
    %p162 = scmp.eq.s32.totalorder %s16, 0
    %p163 = por %p161, %p162
    %p164 = scmp.ne.s32.totalorder %s156, %s158
    %p165 = scmp.eq.s32.totalorder %s21, 1
    %p166 = por %p164, %p165
    %p167 = scmp.ne.s32.totalorder %s158, %s159
    %p168 = scmp.eq.s32.totalorder %s21, 0
    %p169 = por %p167, %p168
    %p170 = scmp.ne.s32.totalorder %s158, %s159
    %p171 = scmp.eq.s32.totalorder %s22, 1
    %p172 = por %p170, %p171
    %p174 = scmp.ne.s32.totalorder %s159, %s173
    %p175 = scmp.eq.s32.totalorder %s22, 0
    %p176 = por %p174, %p175
    %s178 = sadd.s32 %s177, 1
    %p181 = scmp.eq.s32.totalorder %s16, 1
    %p182 = scmp.ne.s32.totalorder %s177, %s179
    %p183 = scmp.eq.s32.totalorder %s16, 0
    %p184 = por %p182, %p183
    %p185 = scmp.ne.s32.totalorder %s177, %s179
    %p186 = scmp.eq.s32.totalorder %s21, 1
    %p187 = por %p185, %p186
    %p188 = scmp.ne.s32.totalorder %s179, %s180
    %p189 = scmp.eq.s32.totalorder %s21, 0
    %p190 = por %p188, %p189
    %p191 = scmp.ne.s32.totalorder %s179, %s180
    %p192 = scmp.eq.s32.totalorder %s22, 1
    %p193 = por %p191, %p192
    %p195 = scmp.ne.s32.totalorder %s180, %s194
    %p196 = scmp.eq.s32.totalorder %s22, 0
    %p197 = por %p195, %p196
    %s198 = ssub.s32 %s23, %s35
    %p199 = scmp.eq.s32.totalorder %s198, 0
    %s201 = sadd.s32 %s200, 1
    %s202 = scalar_select %p199, %s200, %s201
    %p205 = pneg %p199
    %p206 = scmp.eq.s32.totalorder %s16, 1
    %p207 = por %p205, %p206
    %p208 = scmp.ne.s32.totalorder %s200, %s203
    %p209 = scmp.eq.s32.totalorder %s16, 0
    %p210 = por %p208, %p209
    %p211 = scmp.ne.s32.totalorder %s200, %s203
    %p212 = scmp.eq.s32.totalorder %s21, 1
    %p213 = por %p211, %p212
    %p214 = scmp.ne.s32.totalorder %s203, %s204
    %p215 = scmp.eq.s32.totalorder %s21, 0
    %p216 = por %p214, %p215
    %p217 = scmp.ne.s32.totalorder %s203, %s204
    %p218 = scmp.eq.s32.totalorder %s22, 1
    %p219 = por %p217, %p218
    %p221 = scmp.ne.s32.totalorder %s204, %s220
    %p222 = scmp.eq.s32.totalorder %s22, 0
    %p223 = por %p221, %p222
    %s225 = sadd.s32 %s224, 1
    %p228 = scmp.eq.s32.totalorder %s16, 1
    %p229 = scmp.ne.s32.totalorder %s224, %s226
    %p230 = scmp.eq.s32.totalorder %s16, 0
    %p231 = por %p229, %p230
    %p232 = scmp.ne.s32.totalorder %s224, %s226
    %p233 = scmp.eq.s32.totalorder %s21, 1
    %p234 = por %p232, %p233
    %p235 = scmp.ne.s32.totalorder %s226, %s227
    %p236 = scmp.eq.s32.totalorder %s21, 0
    %p237 = por %p235, %p236
    %p238 = scmp.ne.s32.totalorder %s226, %s227
    %p239 = scmp.eq.s32.totalorder %s22, 1
    %p240 = por %p238, %p239
    %p242 = scmp.ne.s32.totalorder %s227, %s241
    %p243 = scmp.eq.s32.totalorder %s22, 0
    %p244 = por %p242, %p243
    %s246 = sadd.s32 %s245, 1
    %p249 = scmp.eq.s32.totalorder %s16, 1
    %p250 = scmp.ne.s32.totalorder %s245, %s247
    %p251 = scmp.eq.s32.totalorder %s16, 0
    %p252 = por %p250, %p251
    %p253 = scmp.ne.s32.totalorder %s245, %s247
    %p254 = scmp.eq.s32.totalorder %s21, 1
    %p255 = por %p253, %p254
    %p256 = scmp.ne.s32.totalorder %s247, %s248
    %p257 = scmp.eq.s32.totalorder %s21, 0
    %p258 = por %p256, %p257
    %p259 = scmp.ne.s32.totalorder %s247, %s248
    %p260 = scmp.eq.s32.totalorder %s22, 1
    %p261 = por %p259, %p260
    %p263 = scmp.ne.s32.totalorder %s248, %s262
    %p264 = scmp.eq.s32.totalorder %s22, 0
    %p265 = por %p263, %p264
    %s266 = ssub.s32 %s23, %s35
    %s267 = ssub.s32 %s24, %s31
    %s268 = sor.u32 %s266, %s267
    %p269 = scmp.eq.s32.totalorder %s268, 0
    %s271 = sadd.s32 %s270, 1
    %s272 = scalar_select %p269, %s270, %s271
    %p275 = pneg %p269
    %p276 = scmp.eq.s32.totalorder %s16, 1
    %p277 = por %p275, %p276
    %p278 = scmp.ne.s32.totalorder %s270, %s273
    %p279 = scmp.eq.s32.totalorder %s16, 0
    %p280 = por %p278, %p279
    %p281 = scmp.ne.s32.totalorder %s270, %s273
    %p282 = scmp.eq.s32.totalorder %s21, 1
    %p283 = por %p281, %p282
    %p284 = scmp.ne.s32.totalorder %s273, %s274
    %p285 = scmp.eq.s32.totalorder %s21, 0
    %p286 = por %p284, %p285
    %p287 = scmp.ne.s32.totalorder %s273, %s274
    %p288 = scmp.eq.s32.totalorder %s22, 1
    %p289 = por %p287, %p288
    %p291 = scmp.ne.s32.totalorder %s274, %s290
    %p292 = scmp.eq.s32.totalorder %s22, 0
    %p293 = por %p291, %p292
    %p294 = scmp.le.s32.totalorder 1, %s16
    %p295 = scmp.lt.s32.totalorder %s16, 3
    %p296 = pnand %p294, %p295
    %p297 = pneg %p296
    // Predicated region
    $region9: #{cips_forward.1} parent=5 // pred_check
      _
    $region10: #{cips_forward.1} parent=5 // pred_check_branch
      %299 = sbr.rel (%p296) target = $region12
    $region11: #{cips_forward.1} parent=5 // pred_region
      %s300 = ssub.s32 %s16, 1
      // Predicated region
      $region13: #{cips_forward.1} parent=11 // pred_check
        %p301 = pneg %p54
      $region14: #{cips_forward.1} parent=11 // pred_check_branch
        %303 = sbr.rel (%p301) target = $region16
      $region15: #{cips_forward.1} parent=11 // pred_region
        %s304 = smul.u32 2, %s26
        %p305 = scmp.lt.s32.totalorder %s304, 1
        %s306 = scalar_select %p305, %s304, 1
        %s307 = smul.addr %s306, 4
        %s308 = scalar_lea.vmem %s0, %s307
        %s309 = smul.u32 2, %s26
      $region16: #{cips_forward.1} parent=11 // pred_fallthru
        _
      // Predicated region
      $region17: #{cips_forward.1} parent=11 // pred_check
        %p310 = pneg %p101
      $region18: #{cips_forward.1} parent=11 // pred_check_branch
        %312 = sbr.rel (%p310) target = $region20
      $region19: #{cips_forward.1} parent=11 // pred_region
        _
      $region20: #{cips_forward.1} parent=11 // pred_fallthru
        _
      // Predicated region
      $region21: #{cips_forward.1} parent=11 // pred_check
        %p313 = pneg %p122
      $region22: #{cips_forward.1} parent=11 // pred_check_branch
        %315 = sbr.rel (%p313) target = $region24
      $region23: #{cips_forward.1} parent=11 // pred_region
        _
      $region24: #{cips_forward.1} parent=11 // pred_fallthru
        _
      // Predicated region
      $region25: #{cips_forward.1} parent=11 // pred_check
        %p316 = pneg %p169
      $region26: #{cips_forward.1} parent=11 // pred_check_branch
        %318 = sbr.rel (%p316) target = $region28
      $region27: #{cips_forward.1} parent=11 // pred_region
        _
      $region28: #{cips_forward.1} parent=11 // pred_fallthru
        _
      // Predicated region
      $region29: #{cips_forward.1} parent=11 // pred_check
        %p319 = pneg %p190
      $region30: #{cips_forward.1} parent=11 // pred_check_branch
        %321 = sbr.rel (%p319) target = $region32
      $region31: #{cips_forward.1} parent=11 // pred_region
        _
      $region32: #{cips_forward.1} parent=11 // pred_fallthru
        _
      // Predicated region
      $region33: #{cips_forward.1} parent=11 // pred_check
        %p322 = pneg %p237
      $region34: #{cips_forward.1} parent=11 // pred_check_branch
        %324 = sbr.rel (%p322) target = $region36
      $region35: #{cips_forward.1} parent=11 // pred_region
        _
      $region36: #{cips_forward.1} parent=11 // pred_fallthru
        _
      // Predicated region
      $region37: #{cips_forward.1} parent=11 // pred_check
        %p325 = pneg %p258
      $region38: #{cips_forward.1} parent=11 // pred_check_branch
        %327 = sbr.rel (%p325) target = $region40
      $region39: #{cips_forward.1} parent=11 // pred_region
        _
      $region40: #{cips_forward.1} parent=11 // pred_fallthru
        _
    $region12: #{cips_forward.1} parent=5 // pred_fallthru
      _
    %p328 = scmp.lt.s32.totalorder %s16, 2
    // Predicated region
    $region41: #{cips_forward.1} parent=5 // pred_check
      %p329 = pneg %p328
    $region42: #{cips_forward.1} parent=5 // pred_check_branch
      %331 = sbr.rel (%p329) target = $region44
    $region43: #{cips_forward.1} parent=5 // pred_region
      // Predicated region
      $region45: #{cips_forward.1} parent=43 // pred_check
        %p332 = pneg %p74
      $region46: #{cips_forward.1} parent=43 // pred_check_branch
        %334 = sbr.rel (%p332) target = $region48
      $region47: #{cips_forward.1} parent=43 // pred_region
        %p335 = scmp.lt.s32.totalorder %s23, 1
        %s336 = scalar_select %p335, %s23, 1
        %s337 = smul.addr %s336, 6
        %s338 = scalar_lea.vmem %s1, %s337
      $region48: #{cips_forward.1} parent=43 // pred_fallthru
        _
      // Predicated region
      $region49: #{cips_forward.1} parent=43 // pred_check
        %p339 = pneg %p142
      $region50: #{cips_forward.1} parent=43 // pred_check_branch
        %341 = sbr.rel (%p339) target = $region52
      $region51: #{cips_forward.1} parent=43 // pred_region
        %p342 = scmp.lt.s32.totalorder %s23, 1
        %s343 = scalar_select %p342, %s23, 1
        %s344 = smul.addr %s343, 4
        %s345 = scalar_lea.vmem %s4, %s344
      $region52: #{cips_forward.1} parent=43 // pred_fallthru
        _
      // Predicated region
      $region53: #{cips_forward.1} parent=43 // pred_check
        %p346 = pneg %p210
      $region54: #{cips_forward.1} parent=43 // pred_check_branch
        %348 = sbr.rel (%p346) target = $region56
      $region55: #{cips_forward.1} parent=43 // pred_region
        %p349 = scmp.lt.s32.totalorder %s23, 1
        %s350 = scalar_select %p349, %s23, 1
        %s351 = smul.addr %s350, 3
        %s352 = scalar_lea.vmem %s7, %s351
      $region56: #{cips_forward.1} parent=43 // pred_fallthru
        _
    $region44: #{cips_forward.1} parent=5 // pred_fallthru
      _
    %p353 = scmp.le.s32.totalorder 1, %s16
    %p354 = scmp.lt.s32.totalorder %s16, 3
    %p355 = pnand %p353, %p354
    %p356 = pneg %p355
    // Predicated region
    $region57: #{cips_forward.1} parent=5 // pred_check
      _
    $region58: #{cips_forward.1} parent=5 // pred_check_branch
      %358 = sbr.rel (%p355) target = $region60
    $region59: #{cips_forward.1} parent=5 // pred_region
      %s359 = ssub.s32 %s16, 1
      %s360 = smul.u32 2, %s26
      %p361 = scmp.lt.s32.totalorder %s360, 1
      %s362 = scalar_select %p361, %s360, 1
      %s363 = smul.addr %s362, 4
      %s364 = scalar_lea.vmem %s0, %s363
      %p365 = pneg %p54
      %p366 = pneg %p51
      %p367 = scmp.lt.s32.totalorder %s25, 1
      %s368 = scalar_select %p367, %s25, 1
      %s369 = smul.addr %s368, 6
      %s370 = scalar_lea.vmem %s1, %s369
      %p371 = pneg %p80
      %p372 = pneg %p77
      %p373 = pneg %p101
      %p374 = pneg %p98
      %p375 = pneg %p122
      %p376 = pneg %p119
      %p377 = scmp.lt.s32.totalorder %s25, 1
      %s378 = scalar_select %p377, %s25, 1
      %s379 = smul.addr %s378, 4
      %s380 = scalar_lea.vmem %s4, %s379
      %p381 = pneg %p148
      %p382 = pneg %p145
      %p383 = pneg %p169
      %p384 = pneg %p166
      %p385 = pneg %p190
      %p386 = pneg %p187
      %p387 = scmp.lt.s32.totalorder %s25, 1
      %s388 = scalar_select %p387, %s25, 1
      %s389 = smul.addr %s388, 3
      %s390 = scalar_lea.vmem %s7, %s389
      %p391 = pneg %p216
      %p392 = pneg %p213
      %p393 = pneg %p237
      %p394 = pneg %p234
      %p395 = pneg %p258
      %p396 = pneg %p255
      %p397 = pneg %p286
      %p398 = pneg %p283
      %s399 = smul.u32 2, %s26
      %p400 = scmp.lt.s32.totalorder %s25, 1
      %s401 = scalar_select %p400, %s25, 1
      %p402 = scmp.lt.s32.totalorder %s399, 1
      %s403 = scalar_select %p402, %s399, 1
      %s404 = smul.addr %s401, 2
      %s405 = sadd.s32 %s403, %s404
      %s406 = smul.addr %s405, 4
      %s407 = scalar_lea.vmem %s10, %s406
      %s408 = smul.u32 2, %s26
      %p409 = scmp.lt.s32.totalorder %s408, 1
      %s410 = scalar_select %p409, %s408, 1
      %s411 = smul.addr %s410, 4
      %s412 = scalar_lea.vmem %s0, %s411
      %s413 = smul.u32 2, %s26
      %p414 = scmp.lt.s32.totalorder %s25, 1
      %s415 = scalar_select %p414, %s25, 1
      %s416 = smul.addr %s415, 6
      %s417 = scalar_lea.vmem %s1, %s416
      %p418 = scmp.lt.s32.totalorder %s25, 1
      %s419 = scalar_select %p418, %s25, 1
      %s420 = smul.addr %s419, 4
      %s421 = scalar_lea.vmem %s4, %s420
      %p422 = scmp.lt.s32.totalorder %s25, 1
      %s423 = scalar_select %p422, %s25, 1
      %s424 = smul.addr %s423, 3
      %s425 = scalar_lea.vmem %s7, %s424
      %s426 = smul.u32 2, %s26
      %p427 = scmp.lt.s32.totalorder %s25, 1
      %s428 = scalar_select %p427, %s25, 1
      %p429 = scmp.lt.s32.totalorder %s426, 1
      %s430 = scalar_select %p429, %s426, 1
      %s431 = smul.addr %s428, 2
      %s432 = sadd.s32 %s430, %s431
      %s433 = smul.addr %s432, 4
      %s434 = scalar_lea.vmem %s10, %s433
      %s435 = smul.u32 2, %s26
      %v437 = vld [vmem:[%s412] sm:$0xff]
      %v438 = vld [vmem:[%s412 + $0x8] sm:$0xff]
      %v439 = vld [vmem:[%s412 + $0x10] sm:$0xff]
      %v440 = vld [vmem:[%s412 + $0x18] sm:$0xff]
      %v441 = vld [vmem:[%s412 + $0x20] sm:$0xff]
      %v442 = vld [vmem:[%s412 + $0x28] sm:$0xff]
      %v443 = vld [vmem:[%s412 + $0x30] sm:$0xff]
      %v444 = vld [vmem:[%s412 + $0x38] sm:$0xff]
      %v445 = vld [vmem:[%s412 + $0x40] sm:$0xff]
      %v446 = vld [vmem:[%s412 + $0x48] sm:$0xff]
      %v447 = vld [vmem:[%s412 + $0x50] sm:$0xff]
      %v448 = vld [vmem:[%s412 + $0x58] sm:$0xff]
      %v449 = vld [vmem:[%s412 + $0x60] sm:$0xff]
      %v450 = vld [vmem:[%s412 + $0x68] sm:$0xff]
      %v451 = vld [vmem:[%s412 + $0x70] sm:$0xff]
      %v452 = vld [vmem:[%s412 + $0x78] sm:$0xff]
      %v453 = vld [vmem:[%s412 + $0x80] sm:$0xff]
      %v454 = vld [vmem:[%s412 + $0x88] sm:$0xff]
      %v455 = vld [vmem:[%s412 + $0x90] sm:$0xff]
      %v456 = vld [vmem:[%s412 + $0x98] sm:$0xff]
      %v457 = vld [vmem:[%s412 + $0xa0] sm:$0xff]
      %v458 = vld [vmem:[%s412 + $0xa8] sm:$0xff]
      %v459 = vld [vmem:[%s412 + $0xb0] sm:$0xff]
      %v460 = vld [vmem:[%s412 + $0xb8] sm:$0xff]
      %v461 = vld [vmem:[%s412 + $0xc0] sm:$0xff]
      %v462 = vld [vmem:[%s412 + $0xc8] sm:$0xff]
      %v463 = vld [vmem:[%s412 + $0xd0] sm:$0xff]
      %v464 = vld [vmem:[%s412 + $0xd8] sm:$0xff]
      %v465 = vld [vmem:[%s412 + $0xe0] sm:$0xff]
      %v466 = vld [vmem:[%s412 + $0xe8] sm:$0xff]
      %v467 = vld [vmem:[%s412 + $0xf0] sm:$0xff]
      %v468 = vld [vmem:[%s412 + $0xf8] sm:$0xff]
      %v469 = vld [vmem:[%s412 + $0x100] sm:$0xff]
      %v470 = vld [vmem:[%s412 + $0x108] sm:$0xff]
      %v471 = vld [vmem:[%s412 + $0x110] sm:$0xff]
      %v472 = vld [vmem:[%s412 + $0x118] sm:$0xff]
      %v473 = vld [vmem:[%s412 + $0x120] sm:$0xff]
      %v474 = vld [vmem:[%s412 + $0x128] sm:$0xff]
      %v475 = vld [vmem:[%s412 + $0x130] sm:$0xff]
      %v476 = vld [vmem:[%s412 + $0x138] sm:$0xff]
      %v477 = vld [vmem:[%s412 + $0x140] sm:$0xff]
      %v478 = vld [vmem:[%s412 + $0x148] sm:$0xff]
      %v479 = vld [vmem:[%s412 + $0x150] sm:$0xff]
      %v480 = vld [vmem:[%s412 + $0x158] sm:$0xff]
      %v481 = vld [vmem:[%s412 + $0x160] sm:$0xff]
      %v482 = vld [vmem:[%s412 + $0x168] sm:$0xff]
      %v483 = vld [vmem:[%s412 + $0x170] sm:$0xff]
      %v484 = vld [vmem:[%s412 + $0x178] sm:$0xff]
      %v485 = vld [vmem:[%s412 + $0x180] sm:$0xff]
      %v486 = vld [vmem:[%s412 + $0x188] sm:$0xff]
      %v487 = vld [vmem:[%s412 + $0x190] sm:$0xff]
      %v488 = vld [vmem:[%s412 + $0x198] sm:$0xff]
      %v489 = vld [vmem:[%s412 + $0x1a0] sm:$0xff]
      %v490 = vld [vmem:[%s412 + $0x1a8] sm:$0xff]
      %v491 = vld [vmem:[%s412 + $0x1b0] sm:$0xff]
      %v492 = vld [vmem:[%s412 + $0x1b8] sm:$0xff]
      %v493 = vld [vmem:[%s412 + $0x1c0] sm:$0xff]
      %v494 = vld [vmem:[%s412 + $0x1c8] sm:$0xff]
      %v495 = vld [vmem:[%s412 + $0x1d0] sm:$0xff]
      %v496 = vld [vmem:[%s412 + $0x1d8] sm:$0xff]
      %v497 = vld [vmem:[%s412 + $0x1e0] sm:$0xff]
      %v498 = vld [vmem:[%s412 + $0x1e8] sm:$0xff]
      %v499 = vld [vmem:[%s412 + $0x1f0] sm:$0xff]
      %v500 = vld [vmem:[%s412 + $0x1f8] sm:$0xff]
      %v501 = vld [vmem:[%s412 + $0x200] sm:$0xff]
      %v502 = vld [vmem:[%s412 + $0x208] sm:$0xff]
      %v503 = vld [vmem:[%s412 + $0x210] sm:$0xff]
      %v504 = vld [vmem:[%s412 + $0x218] sm:$0xff]
      %v505 = vld [vmem:[%s412 + $0x220] sm:$0xff]
      %v506 = vld [vmem:[%s412 + $0x228] sm:$0xff]
      %v507 = vld [vmem:[%s412 + $0x230] sm:$0xff]
      %v508 = vld [vmem:[%s412 + $0x238] sm:$0xff]
      %v509 = vld [vmem:[%s412 + $0x240] sm:$0xff]
      %v510 = vld [vmem:[%s412 + $0x248] sm:$0xff]
      %v511 = vld [vmem:[%s412 + $0x250] sm:$0xff]
      %v512 = vld [vmem:[%s412 + $0x258] sm:$0xff]
      %v513 = vld [vmem:[%s412 + $0x260] sm:$0xff]
      %v514 = vld [vmem:[%s412 + $0x268] sm:$0xff]
      %v515 = vld [vmem:[%s412 + $0x270] sm:$0xff]
      %v516 = vld [vmem:[%s412 + $0x278] sm:$0xff]
      %v517 = vld [vmem:[%s412 + $0x280] sm:$0xff]
      %v518 = vld [vmem:[%s412 + $0x288] sm:$0xff]
      %v519 = vld [vmem:[%s412 + $0x290] sm:$0xff]
      %v520 = vld [vmem:[%s412 + $0x298] sm:$0xff]
      %v521 = vld [vmem:[%s412 + $0x2a0] sm:$0xff]
      %v522 = vld [vmem:[%s412 + $0x2a8] sm:$0xff]
      %v523 = vld [vmem:[%s412 + $0x2b0] sm:$0xff]
      %v524 = vld [vmem:[%s412 + $0x2b8] sm:$0xff]
      %v525 = vld [vmem:[%s412 + $0x2c0] sm:$0xff]
      %v526 = vld [vmem:[%s412 + $0x2c8] sm:$0xff]
      %v527 = vld [vmem:[%s412 + $0x2d0] sm:$0xff]
      %v528 = vld [vmem:[%s412 + $0x2d8] sm:$0xff]
      %v529 = vld [vmem:[%s412 + $0x2e0] sm:$0xff]
      %v530 = vld [vmem:[%s412 + $0x2e8] sm:$0xff]
      %v531 = vld [vmem:[%s412 + $0x2f0] sm:$0xff]
      %v532 = vld [vmem:[%s412 + $0x2f8] sm:$0xff]
      %v533 = vld [vmem:[%s2] sm:$0xff]
      %v534 = vld [vmem:[%s2 + $0x8] sm:$0xff]
      %v535 = vld [vmem:[%s2 + $0x10] sm:$0xff]
      %v536 = vld [vmem:[%s2 + $0x18] sm:$0xff]
      %v537 = vld [vmem:[%s2 + $0x20] sm:$0xff]
      %v538 = vld [vmem:[%s2 + $0x28] sm:$0xff]
      %v539 = vld [vmem:[%s2 + $0x30] sm:$0xff]
      %v540 = vld [vmem:[%s2 + $0x38] sm:$0xff]
      %v541 = vld [vmem:[%s2 + $0x40] sm:$0xff]
      %v542 = vld [vmem:[%s2 + $0x48] sm:$0xff]
      %v543 = vld [vmem:[%s2 + $0x50] sm:$0xff]
      %v544 = vld [vmem:[%s2 + $0x58] sm:$0xff]
      %v545 = vld [vmem:[%s2 + $0x60] sm:$0xff]
      %v546 = vld [vmem:[%s2 + $0x68] sm:$0xff]
      %v547 = vld [vmem:[%s2 + $0x70] sm:$0xff]
      %v548 = vld [vmem:[%s2 + $0x78] sm:$0xff]
      %v549 = vld [vmem:[%s2 + $0x80] sm:$0xff]
      %v550 = vld [vmem:[%s2 + $0x88] sm:$0xff]
      %v551 = vld [vmem:[%s2 + $0x90] sm:$0xff]
      %v552 = vld [vmem:[%s2 + $0x98] sm:$0xff]
      %v553 = vld [vmem:[%s2 + $0xa0] sm:$0xff]
      %v554 = vld [vmem:[%s2 + $0xa8] sm:$0xff]
      %v555 = vld [vmem:[%s2 + $0xb0] sm:$0xff]
      %v556 = vld [vmem:[%s2 + $0xb8] sm:$0xff]
      %v557 = vld [vmem:[%s2 + $0xc0] sm:$0xff]
      %v558 = vld [vmem:[%s2 + $0xc8] sm:$0xff]
      %v559 = vld [vmem:[%s2 + $0xd0] sm:$0xff]
      %v560 = vld [vmem:[%s2 + $0xd8] sm:$0xff]
      %v561 = vld [vmem:[%s2 + $0xe0] sm:$0xff]
      %v562 = vld [vmem:[%s2 + $0xe8] sm:$0xff]
      %v563 = vld [vmem:[%s2 + $0xf0] sm:$0xff]
      %v564 = vld [vmem:[%s2 + $0xf8] sm:$0xff]
      %v565 = vld [vmem:[%s2 + $0x100] sm:$0xff]
      %v566 = vld [vmem:[%s2 + $0x108] sm:$0xff]
      %v567 = vld [vmem:[%s2 + $0x110] sm:$0xff]
      %v568 = vld [vmem:[%s2 + $0x118] sm:$0xff]
      %v569 = vld [vmem:[%s2 + $0x120] sm:$0xff]
      %v570 = vld [vmem:[%s2 + $0x128] sm:$0xff]
      %v571 = vld [vmem:[%s2 + $0x130] sm:$0xff]
      %v572 = vld [vmem:[%s2 + $0x138] sm:$0xff]
      %v573 = vld [vmem:[%s2 + $0x140] sm:$0xff]
      %v574 = vld [vmem:[%s2 + $0x148] sm:$0xff]
      %v575 = vld [vmem:[%s2 + $0x150] sm:$0xff]
      %v576 = vld [vmem:[%s2 + $0x158] sm:$0xff]
      %v577 = vld [vmem:[%s2 + $0x160] sm:$0xff]
      %v578 = vld [vmem:[%s2 + $0x168] sm:$0xff]
      %v579 = vld [vmem:[%s2 + $0x170] sm:$0xff]
      %v580 = vld [vmem:[%s2 + $0x178] sm:$0xff]
      %v581 = vld [vmem:[%s417] sm:$0x3f]
      %v582 = vunpack.c.l.bf16 %v533
      %v583 = vunpack.c.h.bf16 %v533
      %v584 = vunpack.c.l.bf16 %v534
      %v585 = vunpack.c.h.bf16 %v534
      %v586 = vunpack.c.l.bf16 %v535
      %v587 = vunpack.c.h.bf16 %v535
      %v588 = vunpack.c.l.bf16 %v536
      %v589 = vunpack.c.h.bf16 %v536
      %v590 = vunpack.c.l.bf16 %v537
      %v591 = vunpack.c.h.bf16 %v537
      %v592 = vunpack.c.l.bf16 %v538
      %v593 = vunpack.c.h.bf16 %v538
      %v594 = vunpack.c.l.bf16 %v539
      %v595 = vunpack.c.h.bf16 %v539
      %v596 = vunpack.c.l.bf16 %v540
      %v597 = vunpack.c.h.bf16 %v540
      %v598 = vunpack.c.l.bf16 %v541
      %v599 = vunpack.c.h.bf16 %v541
      %v600 = vunpack.c.l.bf16 %v542
      %v601 = vunpack.c.h.bf16 %v542
      %v602 = vunpack.c.l.bf16 %v543
      %v603 = vunpack.c.h.bf16 %v543
      %v604 = vunpack.c.l.bf16 %v544
      %v605 = vunpack.c.h.bf16 %v544
      %v606 = vunpack.c.l.bf16 %v545
      %v607 = vunpack.c.h.bf16 %v545
      %v608 = vunpack.c.l.bf16 %v546
      %v609 = vunpack.c.h.bf16 %v546
      %v610 = vunpack.c.l.bf16 %v547
      %v611 = vunpack.c.h.bf16 %v547
      %v612 = vunpack.c.l.bf16 %v548
      %v613 = vunpack.c.h.bf16 %v548
      %v614 = vunpack.c.l.bf16 %v549
      %v615 = vunpack.c.h.bf16 %v549
      %v616 = vunpack.c.l.bf16 %v550
      %v617 = vunpack.c.h.bf16 %v550
      %v618 = vunpack.c.l.bf16 %v551
      %v619 = vunpack.c.h.bf16 %v551
      %v620 = vunpack.c.l.bf16 %v552
      %v621 = vunpack.c.h.bf16 %v552
      %v622 = vunpack.c.l.bf16 %v553
      %v623 = vunpack.c.h.bf16 %v553
      %v624 = vunpack.c.l.bf16 %v554
      %v625 = vunpack.c.h.bf16 %v554
      %v626 = vunpack.c.l.bf16 %v555
      %v627 = vunpack.c.h.bf16 %v555
      %v628 = vunpack.c.l.bf16 %v556
      %v629 = vunpack.c.h.bf16 %v556
      %v630 = vunpack.c.l.bf16 %v557
      %v631 = vunpack.c.h.bf16 %v557
      %v632 = vunpack.c.l.bf16 %v558
      %v633 = vunpack.c.h.bf16 %v558
      %v634 = vunpack.c.l.bf16 %v559
      %v635 = vunpack.c.h.bf16 %v559
      %v636 = vunpack.c.l.bf16 %v560
      %v637 = vunpack.c.h.bf16 %v560
      %v638 = vunpack.c.l.bf16 %v561
      %v639 = vunpack.c.h.bf16 %v561
      %v640 = vunpack.c.l.bf16 %v562
      %v641 = vunpack.c.h.bf16 %v562
      %v642 = vunpack.c.l.bf16 %v563
      %v643 = vunpack.c.h.bf16 %v563
      %v644 = vunpack.c.l.bf16 %v564
      %v645 = vunpack.c.h.bf16 %v564
      %v646 = vunpack.c.l.bf16 %v565
      %v647 = vunpack.c.h.bf16 %v565
      %v648 = vunpack.c.l.bf16 %v566
      %v649 = vunpack.c.h.bf16 %v566
      %v650 = vunpack.c.l.bf16 %v567
      %v651 = vunpack.c.h.bf16 %v567
      %v652 = vunpack.c.l.bf16 %v568
      %v653 = vunpack.c.h.bf16 %v568
      %v654 = vunpack.c.l.bf16 %v569
      %v655 = vunpack.c.h.bf16 %v569
      %v656 = vunpack.c.l.bf16 %v570
      %v657 = vunpack.c.h.bf16 %v570
      %v658 = vunpack.c.l.bf16 %v571
      %v659 = vunpack.c.h.bf16 %v571
      %v660 = vunpack.c.l.bf16 %v572
      %v661 = vunpack.c.h.bf16 %v572
      %v662 = vunpack.c.l.bf16 %v573
      %v663 = vunpack.c.h.bf16 %v573
      %v664 = vunpack.c.l.bf16 %v574
      %v665 = vunpack.c.h.bf16 %v574
      %v666 = vunpack.c.l.bf16 %v575
      %v667 = vunpack.c.h.bf16 %v575
      %v668 = vunpack.c.l.bf16 %v576
      %v669 = vunpack.c.h.bf16 %v576
      %v670 = vunpack.c.l.bf16 %v577
      %v671 = vunpack.c.h.bf16 %v577
      %v672 = vunpack.c.l.bf16 %v578
      %v673 = vunpack.c.h.bf16 %v578
      %v674 = vunpack.c.l.bf16 %v579
      %v675 = vunpack.c.h.bf16 %v579
      %v676 = vunpack.c.l.bf16 %v580
      %v677 = vunpack.c.h.bf16 %v580
      %v679 = vlaneseq
      %v680 = vshrl.u32 %v679, 7
      %v681 = vsub.s32 0, %v680
      %v682 = vrot.slane %v581, %v681
      %v683 = vlaneseq
      %v684 = vshrl.u32 %v683, 7
      %v685 = vsub.s32 1, %v684
      %v686 = vrot.slane %v581, %v685
      %v687 = vlaneseq
      %v688 = vshrl.u32 %v687, 7
      %v689 = vsub.s32 2, %v688
      %v690 = vrot.slane %v581, %v689
      %v691 = vlaneseq
      %v692 = vshrl.u32 %v691, 7
      %v693 = vsub.s32 3, %v692
      %v694 = vrot.slane %v581, %v693
      %v695 = vlaneseq
      %v696 = vshrl.u32 %v695, 7
      %v697 = vsub.s32 4, %v696
      %v698 = vrot.slane %v581, %v697
      %v699 = vlaneseq
      %v700 = vshrl.u32 %v699, 7
      %v701 = vsub.s32 5, %v700
      %v702 = vrot.slane %v581, %v701
      %v709 = vmul.f32 %v582, %v682
      %v710 = vmul.f32 %v583, %v686
      %v711 = vmul.f32 %v584, %v690
      %v712 = vmul.f32 %v585, %v694
      %v713 = vmul.f32 %v586, %v698
      %v714 = vmul.f32 %v587, %v702
      %v715 = vmul.f32 %v588, %v682
      %v716 = vmul.f32 %v589, %v686
      %v717 = vmul.f32 %v590, %v690
      %v718 = vmul.f32 %v591, %v694
      %v719 = vmul.f32 %v592, %v698
      %v720 = vmul.f32 %v593, %v702
      %v721 = vmul.f32 %v594, %v682
      %v722 = vmul.f32 %v595, %v686
      %v723 = vmul.f32 %v596, %v690
      %v724 = vmul.f32 %v597, %v694
      %v725 = vmul.f32 %v598, %v698
      %v726 = vmul.f32 %v599, %v702
      %v727 = vmul.f32 %v600, %v682
      %v728 = vmul.f32 %v601, %v686
      %v729 = vmul.f32 %v602, %v690
      %v730 = vmul.f32 %v603, %v694
      %v731 = vmul.f32 %v604, %v698
      %v732 = vmul.f32 %v605, %v702
      %v733 = vmul.f32 %v606, %v682
      %v734 = vmul.f32 %v607, %v686
      %v735 = vmul.f32 %v608, %v690
      %v736 = vmul.f32 %v609, %v694
      %v737 = vmul.f32 %v610, %v698
      %v738 = vmul.f32 %v611, %v702
      %v739 = vmul.f32 %v612, %v682
      %v740 = vmul.f32 %v613, %v686
      %v741 = vmul.f32 %v614, %v690
      %v742 = vmul.f32 %v615, %v694
      %v743 = vmul.f32 %v616, %v698
      %v744 = vmul.f32 %v617, %v702
      %v745 = vmul.f32 %v618, %v682
      %v746 = vmul.f32 %v619, %v686
      %v747 = vmul.f32 %v620, %v690
      %v748 = vmul.f32 %v621, %v694
      %v749 = vmul.f32 %v622, %v698
      %v750 = vmul.f32 %v623, %v702
      %v751 = vmul.f32 %v624, %v682
      %v752 = vmul.f32 %v625, %v686
      %v753 = vmul.f32 %v626, %v690
      %v754 = vmul.f32 %v627, %v694
      %v755 = vmul.f32 %v628, %v698
      %v756 = vmul.f32 %v629, %v702
      %v757 = vmul.f32 %v630, %v682
      %v758 = vmul.f32 %v631, %v686
      %v759 = vmul.f32 %v632, %v690
      %v760 = vmul.f32 %v633, %v694
      %v761 = vmul.f32 %v634, %v698
      %v762 = vmul.f32 %v635, %v702
      %v763 = vmul.f32 %v636, %v682
      %v764 = vmul.f32 %v637, %v686
      %v765 = vmul.f32 %v638, %v690
      %v766 = vmul.f32 %v639, %v694
      %v767 = vmul.f32 %v640, %v698
      %v768 = vmul.f32 %v641, %v702
      %v769 = vmul.f32 %v642, %v682
      %v770 = vmul.f32 %v643, %v686
      %v771 = vmul.f32 %v644, %v690
      %v772 = vmul.f32 %v645, %v694
      %v773 = vmul.f32 %v646, %v698
      %v774 = vmul.f32 %v647, %v702
      %v775 = vmul.f32 %v648, %v682
      %v776 = vmul.f32 %v649, %v686
      %v777 = vmul.f32 %v650, %v690
      %v778 = vmul.f32 %v651, %v694
      %v779 = vmul.f32 %v652, %v698
      %v780 = vmul.f32 %v653, %v702
      %v781 = vmul.f32 %v654, %v682
      %v782 = vmul.f32 %v655, %v686
      %v783 = vmul.f32 %v656, %v690
      %v784 = vmul.f32 %v657, %v694
      %v785 = vmul.f32 %v658, %v698
      %v786 = vmul.f32 %v659, %v702
      %v787 = vmul.f32 %v660, %v682
      %v788 = vmul.f32 %v661, %v686
      %v789 = vmul.f32 %v662, %v690
      %v790 = vmul.f32 %v663, %v694
      %v791 = vmul.f32 %v664, %v698
      %v792 = vmul.f32 %v665, %v702
      %v793 = vmul.f32 %v666, %v682
      %v794 = vmul.f32 %v667, %v686
      %v795 = vmul.f32 %v668, %v690
      %v796 = vmul.f32 %v669, %v694
      %v797 = vmul.f32 %v670, %v698
      %v798 = vmul.f32 %v671, %v702
      %v799 = vmul.f32 %v672, %v682
      %v800 = vmul.f32 %v673, %v686
      %v801 = vmul.f32 %v674, %v690
      %v802 = vmul.f32 %v675, %v694
      %v803 = vmul.f32 %v676, %v698
      %v804 = vmul.f32 %v677, %v702
      %v805 = vpack.c.bf16 %v715, %v709
      %v806 = vpack.c.bf16 %v716, %v710
      %v807 = vpack.c.bf16 %v717, %v711
      %v808 = vpack.c.bf16 %v718, %v712
      %v809 = vpack.c.bf16 %v719, %v713
      %v810 = vpack.c.bf16 %v720, %v714
      %v811 = vpack.c.bf16 %v727, %v721
      %v812 = vpack.c.bf16 %v728, %v722
      %v813 = vpack.c.bf16 %v729, %v723
      %v814 = vpack.c.bf16 %v730, %v724
      %v815 = vpack.c.bf16 %v731, %v725
      %v816 = vpack.c.bf16 %v732, %v726
      %v817 = vpack.c.bf16 %v739, %v733
      %v818 = vpack.c.bf16 %v740, %v734
      %v819 = vpack.c.bf16 %v741, %v735
      %v820 = vpack.c.bf16 %v742, %v736
      %v821 = vpack.c.bf16 %v743, %v737
      %v822 = vpack.c.bf16 %v744, %v738
      %v823 = vpack.c.bf16 %v751, %v745
      %v824 = vpack.c.bf16 %v752, %v746
      %v825 = vpack.c.bf16 %v753, %v747
      %v826 = vpack.c.bf16 %v754, %v748
      %v827 = vpack.c.bf16 %v755, %v749
      %v828 = vpack.c.bf16 %v756, %v750
      %v829 = vpack.c.bf16 %v763, %v757
      %v830 = vpack.c.bf16 %v764, %v758
      %v831 = vpack.c.bf16 %v765, %v759
      %v832 = vpack.c.bf16 %v766, %v760
      %v833 = vpack.c.bf16 %v767, %v761
      %v834 = vpack.c.bf16 %v768, %v762
      %v835 = vpack.c.bf16 %v775, %v769
      %v836 = vpack.c.bf16 %v776, %v770
      %v837 = vpack.c.bf16 %v777, %v771
      %v838 = vpack.c.bf16 %v778, %v772
      %v839 = vpack.c.bf16 %v779, %v773
      %v840 = vpack.c.bf16 %v780, %v774
      %v841 = vpack.c.bf16 %v787, %v781
      %v842 = vpack.c.bf16 %v788, %v782
      %v843 = vpack.c.bf16 %v789, %v783
      %v844 = vpack.c.bf16 %v790, %v784
      %v845 = vpack.c.bf16 %v791, %v785
      %v846 = vpack.c.bf16 %v792, %v786
      %v847 = vpack.c.bf16 %v799, %v793
      %v848 = vpack.c.bf16 %v800, %v794
      %v849 = vpack.c.bf16 %v801, %v795
      %v850 = vpack.c.bf16 %v802, %v796
      %v851 = vpack.c.bf16 %v803, %v797
      %v852 = vpack.c.bf16 %v804, %v798
      %v853 = vld [vmem:[%s3] sm:$0xff]
      %v854 = vld [vmem:[%s3 + $0x8] sm:$0xff]
      %v855 = vld [vmem:[%s3 + $0x10] sm:$0xff]
      %v856 = vld [vmem:[%s3 + $0x18] sm:$0xff]
      %v857 = vld [vmem:[%s3 + $0x20] sm:$0xff]
      %v858 = vld [vmem:[%s3 + $0x28] sm:$0xff]
      %v859 = vld [vmem:[%s3 + $0x30] sm:$0xff]
      %v860 = vld [vmem:[%s3 + $0x38] sm:$0xff]
      %v861 = vld [vmem:[%s3 + $0x40] sm:$0xff]
      %v862 = vld [vmem:[%s3 + $0x48] sm:$0xff]
      %v863 = vld [vmem:[%s3 + $0x50] sm:$0xff]
      %v864 = vld [vmem:[%s3 + $0x58] sm:$0xff]
      %v865 = vld [vmem:[%s3 + $0x60] sm:$0xff]
      %v866 = vld [vmem:[%s3 + $0x68] sm:$0xff]
      %v867 = vld [vmem:[%s3 + $0x70] sm:$0xff]
      %v868 = vld [vmem:[%s3 + $0x78] sm:$0xff]
      %870 = vset.pattern.permute.xlu0 0
      %871 = vperm.xlu0 %870, %v853
      %v872 = vpop.permute.xlu0 %871
      %875 = vset.pattern.permute.xlu0 0
      %876 = vperm.xlu0 %875, %v854
      %v877 = vpop.permute.xlu0 %876
      %880 = vset.pattern.permute.xlu0 0
      %881 = vperm.xlu0 %880, %v855
      %v882 = vpop.permute.xlu0 %881
      %885 = vset.pattern.permute.xlu0 0
      %886 = vperm.xlu0 %885, %v856
      %v887 = vpop.permute.xlu0 %886
      %890 = vset.pattern.permute.xlu0 0
      %891 = vperm.xlu0 %890, %v857
      %v892 = vpop.permute.xlu0 %891
      %895 = vset.pattern.permute.xlu0 0
      %896 = vperm.xlu0 %895, %v858
      %v897 = vpop.permute.xlu0 %896
      %900 = vset.pattern.permute.xlu0 0
      %901 = vperm.xlu0 %900, %v859
      %v902 = vpop.permute.xlu0 %901
      %905 = vset.pattern.permute.xlu0 0
      %906 = vperm.xlu0 %905, %v860
      %v907 = vpop.permute.xlu0 %906
      %910 = vset.pattern.permute.xlu0 0
      %911 = vperm.xlu0 %910, %v861
      %v912 = vpop.permute.xlu0 %911
      %915 = vset.pattern.permute.xlu0 0
      %916 = vperm.xlu0 %915, %v862
      %v917 = vpop.permute.xlu0 %916
      %920 = vset.pattern.permute.xlu0 0
      %921 = vperm.xlu0 %920, %v863
      %v922 = vpop.permute.xlu0 %921
      %925 = vset.pattern.permute.xlu0 0
      %926 = vperm.xlu0 %925, %v864
      %v927 = vpop.permute.xlu0 %926
      %930 = vset.pattern.permute.xlu0 0
      %931 = vperm.xlu0 %930, %v865
      %v932 = vpop.permute.xlu0 %931
      %935 = vset.pattern.permute.xlu0 0
      %936 = vperm.xlu0 %935, %v866
      %v937 = vpop.permute.xlu0 %936
      %940 = vset.pattern.permute.xlu0 0
      %941 = vperm.xlu0 %940, %v867
      %v942 = vpop.permute.xlu0 %941
      %945 = vset.pattern.permute.xlu0 0
      %946 = vperm.xlu0 %945, %v868
      %v947 = vpop.permute.xlu0 %946
      %v1045 = vunpack.c.l.b16 %v437
      %v1046 = vunpack.c.h.b16 %v437
      %v1047 = vunpack.c.l.b16 %v438
      %v1048 = vunpack.c.h.b16 %v438
      %v1049 = vunpack.c.l.b16 %v439
      %v1050 = vunpack.c.h.b16 %v439
      %v1051 = vunpack.c.l.b16 %v440
      %v1052 = vunpack.c.h.b16 %v440
      %v1053 = vunpack.c.l.b16 %v441
      %v1054 = vunpack.c.h.b16 %v441
      %v1055 = vunpack.c.l.b16 %v442
      %v1056 = vunpack.c.h.b16 %v442
      %v1057 = vunpack.c.l.b16 %v443
      %v1058 = vunpack.c.h.b16 %v443
      %v1059 = vunpack.c.l.b16 %v444
      %v1060 = vunpack.c.h.b16 %v444
      %v1061 = vunpack.c.l.b16 %v445
      %v1062 = vunpack.c.h.b16 %v445
      %v1063 = vunpack.c.l.b16 %v446
      %v1064 = vunpack.c.h.b16 %v446
      %v1065 = vunpack.c.l.b16 %v447
      %v1066 = vunpack.c.h.b16 %v447
      %v1067 = vunpack.c.l.b16 %v448
      %v1068 = vunpack.c.h.b16 %v448
      %v1069 = vunpack.c.l.b16 %v449
      %v1070 = vunpack.c.h.b16 %v449
      %v1071 = vunpack.c.l.b16 %v450
      %v1072 = vunpack.c.h.b16 %v450
      %v1073 = vunpack.c.l.b16 %v451
      %v1074 = vunpack.c.h.b16 %v451
      %v1075 = vunpack.c.l.b16 %v452
      %v1076 = vunpack.c.h.b16 %v452
      %v1077 = vunpack.c.l.b16 %v453
      %v1078 = vunpack.c.h.b16 %v453
      %v1079 = vunpack.c.l.b16 %v454
      %v1080 = vunpack.c.h.b16 %v454
      %v1081 = vunpack.c.l.b16 %v455
      %v1082 = vunpack.c.h.b16 %v455
      %v1083 = vunpack.c.l.b16 %v456
      %v1084 = vunpack.c.h.b16 %v456
      %v1085 = vunpack.c.l.b16 %v457
      %v1086 = vunpack.c.h.b16 %v457
      %v1087 = vunpack.c.l.b16 %v458
      %v1088 = vunpack.c.h.b16 %v458
      %v1089 = vunpack.c.l.b16 %v459
      %v1090 = vunpack.c.h.b16 %v459
      %v1091 = vunpack.c.l.b16 %v460
      %v1092 = vunpack.c.h.b16 %v460
      %v1093 = vunpack.c.l.b16 %v461
      %v1094 = vunpack.c.h.b16 %v461
      %v1095 = vunpack.c.l.b16 %v462
      %v1096 = vunpack.c.h.b16 %v462
      %v1097 = vunpack.c.l.b16 %v463
      %v1098 = vunpack.c.h.b16 %v463
      %v1099 = vunpack.c.l.b16 %v464
      %v1100 = vunpack.c.h.b16 %v464
      %v1101 = vunpack.c.l.b16 %v465
      %v1102 = vunpack.c.h.b16 %v465
      %v1103 = vunpack.c.l.b16 %v466
      %v1104 = vunpack.c.h.b16 %v466
      %v1105 = vunpack.c.l.b16 %v467
      %v1106 = vunpack.c.h.b16 %v467
      %v1107 = vunpack.c.l.b16 %v468
      %v1108 = vunpack.c.h.b16 %v468
      %v1109 = vunpack.c.l.b16 %v469
      %v1110 = vunpack.c.h.b16 %v469
      %v1111 = vunpack.c.l.b16 %v470
      %v1112 = vunpack.c.h.b16 %v470
      %v1113 = vunpack.c.l.b16 %v471
      %v1114 = vunpack.c.h.b16 %v471
      %v1115 = vunpack.c.l.b16 %v472
      %v1116 = vunpack.c.h.b16 %v472
      %v1117 = vunpack.c.l.b16 %v473
      %v1118 = vunpack.c.h.b16 %v473
      %v1119 = vunpack.c.l.b16 %v474
      %v1120 = vunpack.c.h.b16 %v474
      %v1121 = vunpack.c.l.b16 %v475
      %v1122 = vunpack.c.h.b16 %v475
      %v1123 = vunpack.c.l.b16 %v476
      %v1124 = vunpack.c.h.b16 %v476
      %v1125 = vunpack.c.l.b16 %v477
      %v1126 = vunpack.c.h.b16 %v477
      %v1127 = vunpack.c.l.b16 %v478
      %v1128 = vunpack.c.h.b16 %v478
      %v1129 = vunpack.c.l.b16 %v479
      %v1130 = vunpack.c.h.b16 %v479
      %v1131 = vunpack.c.l.b16 %v480
      %v1132 = vunpack.c.h.b16 %v480
      %v1133 = vunpack.c.l.b16 %v481
      %v1134 = vunpack.c.h.b16 %v481
      %v1135 = vunpack.c.l.b16 %v482
      %v1136 = vunpack.c.h.b16 %v482
      %v1137 = vunpack.c.l.b16 %v483
      %v1138 = vunpack.c.h.b16 %v483
      %v1139 = vunpack.c.l.b16 %v484
      %v1140 = vunpack.c.h.b16 %v484
      %v1141 = vunpack.c.l.b16 %v485
      %v1142 = vunpack.c.h.b16 %v485
      %v1143 = vunpack.c.l.b16 %v486
      %v1144 = vunpack.c.h.b16 %v486
      %v1145 = vunpack.c.l.b16 %v487
      %v1146 = vunpack.c.h.b16 %v487
      %v1147 = vunpack.c.l.b16 %v488
      %v1148 = vunpack.c.h.b16 %v488
      %v1149 = vunpack.c.l.b16 %v489
      %v1150 = vunpack.c.h.b16 %v489
      %v1151 = vunpack.c.l.b16 %v490
      %v1152 = vunpack.c.h.b16 %v490
      %v1153 = vunpack.c.l.b16 %v491
      %v1154 = vunpack.c.h.b16 %v491
      %v1155 = vunpack.c.l.b16 %v492
      %v1156 = vunpack.c.h.b16 %v492
      %v1157 = vunpack.c.l.b16 %v493
      %v1158 = vunpack.c.h.b16 %v493
      %v1159 = vunpack.c.l.b16 %v494
      %v1160 = vunpack.c.h.b16 %v494
      %v1161 = vunpack.c.l.b16 %v495
      %v1162 = vunpack.c.h.b16 %v495
      %v1163 = vunpack.c.l.b16 %v496
      %v1164 = vunpack.c.h.b16 %v496
      %v1165 = vunpack.c.l.b16 %v497
      %v1166 = vunpack.c.h.b16 %v497
      %v1167 = vunpack.c.l.b16 %v498
      %v1168 = vunpack.c.h.b16 %v498
      %v1169 = vunpack.c.l.b16 %v499
      %v1170 = vunpack.c.h.b16 %v499
      %v1171 = vunpack.c.l.b16 %v500
      %v1172 = vunpack.c.h.b16 %v500
      %v1173 = vunpack.c.l.b16 %v501
      %v1174 = vunpack.c.h.b16 %v501
      %v1175 = vunpack.c.l.b16 %v502
      %v1176 = vunpack.c.h.b16 %v502
      %v1177 = vunpack.c.l.b16 %v503
      %v1178 = vunpack.c.h.b16 %v503
      %v1179 = vunpack.c.l.b16 %v504
      %v1180 = vunpack.c.h.b16 %v504
      %v1181 = vunpack.c.l.b16 %v505
      %v1182 = vunpack.c.h.b16 %v505
      %v1183 = vunpack.c.l.b16 %v506
      %v1184 = vunpack.c.h.b16 %v506
      %v1185 = vunpack.c.l.b16 %v507
      %v1186 = vunpack.c.h.b16 %v507
      %v1187 = vunpack.c.l.b16 %v508
      %v1188 = vunpack.c.h.b16 %v508
      %v1189 = vunpack.c.l.b16 %v509
      %v1190 = vunpack.c.h.b16 %v509
      %v1191 = vunpack.c.l.b16 %v510
      %v1192 = vunpack.c.h.b16 %v510
      %v1193 = vunpack.c.l.b16 %v511
      %v1194 = vunpack.c.h.b16 %v511
      %v1195 = vunpack.c.l.b16 %v512
      %v1196 = vunpack.c.h.b16 %v512
      %v1197 = vunpack.c.l.b16 %v513
      %v1198 = vunpack.c.h.b16 %v513
      %v1199 = vunpack.c.l.b16 %v514
      %v1200 = vunpack.c.h.b16 %v514
      %v1201 = vunpack.c.l.b16 %v515
      %v1202 = vunpack.c.h.b16 %v515
      %v1203 = vunpack.c.l.b16 %v516
      %v1204 = vunpack.c.h.b16 %v516
      %v1205 = vunpack.c.l.b16 %v517
      %v1206 = vunpack.c.h.b16 %v517
      %v1207 = vunpack.c.l.b16 %v518
      %v1208 = vunpack.c.h.b16 %v518
      %v1209 = vunpack.c.l.b16 %v519
      %v1210 = vunpack.c.h.b16 %v519
      %v1211 = vunpack.c.l.b16 %v520
      %v1212 = vunpack.c.h.b16 %v520
      %v1213 = vunpack.c.l.b16 %v521
      %v1214 = vunpack.c.h.b16 %v521
      %v1215 = vunpack.c.l.b16 %v522
      %v1216 = vunpack.c.h.b16 %v522
      %v1217 = vunpack.c.l.b16 %v523
      %v1218 = vunpack.c.h.b16 %v523
      %v1219 = vunpack.c.l.b16 %v524
      %v1220 = vunpack.c.h.b16 %v524
      %v1221 = vunpack.c.l.b16 %v525
      %v1222 = vunpack.c.h.b16 %v525
      %v1223 = vunpack.c.l.b16 %v526
      %v1224 = vunpack.c.h.b16 %v526
      %v1225 = vunpack.c.l.b16 %v527
      %v1226 = vunpack.c.h.b16 %v527
      %v1227 = vunpack.c.l.b16 %v528
      %v1228 = vunpack.c.h.b16 %v528
      %v1229 = vunpack.c.l.b16 %v529
      %v1230 = vunpack.c.h.b16 %v529
      %v1231 = vunpack.c.l.b16 %v530
      %v1232 = vunpack.c.h.b16 %v530
      %v1233 = vunpack.c.l.b16 %v531
      %v1234 = vunpack.c.h.b16 %v531
      %v1235 = vunpack.c.l.b16 %v532
      %v1236 = vunpack.c.h.b16 %v532
      %v1237 = vpack.c.b16 %v1047, %v1045
      %v1238 = vpack.c.b16 %v1048, %v1046
      %v1239 = vpack.c.b16 %v1051, %v1049
      %v1240 = vpack.c.b16 %v1052, %v1050
      %v1241 = vpack.c.b16 %v1055, %v1053
      %v1242 = vpack.c.b16 %v1056, %v1054
      %v1243 = vpack.c.b16 %v1059, %v1057
      %v1244 = vpack.c.b16 %v1060, %v1058
      %v1245 = vpack.c.b16 %v1063, %v1061
      %v1246 = vpack.c.b16 %v1064, %v1062
      %v1247 = vpack.c.b16 %v1067, %v1065
      %v1248 = vpack.c.b16 %v1068, %v1066
      %v1249 = vpack.c.b16 %v1071, %v1069
      %v1250 = vpack.c.b16 %v1072, %v1070
      %v1251 = vpack.c.b16 %v1075, %v1073
      %v1252 = vpack.c.b16 %v1076, %v1074
      %v1253 = vpack.c.b16 %v1079, %v1077
      %v1254 = vpack.c.b16 %v1080, %v1078
      %v1255 = vpack.c.b16 %v1083, %v1081
      %v1256 = vpack.c.b16 %v1084, %v1082
      %v1257 = vpack.c.b16 %v1087, %v1085
      %v1258 = vpack.c.b16 %v1088, %v1086
      %v1259 = vpack.c.b16 %v1091, %v1089
      %v1260 = vpack.c.b16 %v1092, %v1090
      %v1261 = vpack.c.b16 %v1095, %v1093
      %v1262 = vpack.c.b16 %v1096, %v1094
      %v1263 = vpack.c.b16 %v1099, %v1097
      %v1264 = vpack.c.b16 %v1100, %v1098
      %v1265 = vpack.c.b16 %v1103, %v1101
      %v1266 = vpack.c.b16 %v1104, %v1102
      %v1267 = vpack.c.b16 %v1107, %v1105
      %v1268 = vpack.c.b16 %v1108, %v1106
      %v1269 = vpack.c.b16 %v1111, %v1109
      %v1270 = vpack.c.b16 %v1112, %v1110
      %v1271 = vpack.c.b16 %v1115, %v1113
      %v1272 = vpack.c.b16 %v1116, %v1114
      %v1273 = vpack.c.b16 %v1119, %v1117
      %v1274 = vpack.c.b16 %v1120, %v1118
      %v1275 = vpack.c.b16 %v1123, %v1121
      %v1276 = vpack.c.b16 %v1124, %v1122
      %v1277 = vpack.c.b16 %v1127, %v1125
      %v1278 = vpack.c.b16 %v1128, %v1126
      %v1279 = vpack.c.b16 %v1131, %v1129
      %v1280 = vpack.c.b16 %v1132, %v1130
      %v1281 = vpack.c.b16 %v1135, %v1133
      %v1282 = vpack.c.b16 %v1136, %v1134
      %v1283 = vpack.c.b16 %v1139, %v1137
      %v1284 = vpack.c.b16 %v1140, %v1138
      %v1285 = vpack.c.b16 %v1143, %v1141
      %v1286 = vpack.c.b16 %v1144, %v1142
      %v1287 = vpack.c.b16 %v1147, %v1145
      %v1288 = vpack.c.b16 %v1148, %v1146
      %v1289 = vpack.c.b16 %v1151, %v1149
      %v1290 = vpack.c.b16 %v1152, %v1150
      %v1291 = vpack.c.b16 %v1155, %v1153
      %v1292 = vpack.c.b16 %v1156, %v1154
      %v1293 = vpack.c.b16 %v1159, %v1157
      %v1294 = vpack.c.b16 %v1160, %v1158
      %v1295 = vpack.c.b16 %v1163, %v1161
      %v1296 = vpack.c.b16 %v1164, %v1162
      %v1297 = vpack.c.b16 %v1167, %v1165
      %v1298 = vpack.c.b16 %v1168, %v1166
      %v1299 = vpack.c.b16 %v1171, %v1169
      %v1300 = vpack.c.b16 %v1172, %v1170
      %v1301 = vpack.c.b16 %v1175, %v1173
      %v1302 = vpack.c.b16 %v1176, %v1174
      %v1303 = vpack.c.b16 %v1179, %v1177
      %v1304 = vpack.c.b16 %v1180, %v1178
      %v1305 = vpack.c.b16 %v1183, %v1181
      %v1306 = vpack.c.b16 %v1184, %v1182
      %v1307 = vpack.c.b16 %v1187, %v1185
      %v1308 = vpack.c.b16 %v1188, %v1186
      %v1309 = vpack.c.b16 %v1191, %v1189
      %v1310 = vpack.c.b16 %v1192, %v1190
      %v1311 = vpack.c.b16 %v1195, %v1193
      %v1312 = vpack.c.b16 %v1196, %v1194
      %v1313 = vpack.c.b16 %v1199, %v1197
      %v1314 = vpack.c.b16 %v1200, %v1198
      %v1315 = vpack.c.b16 %v1203, %v1201
      %v1316 = vpack.c.b16 %v1204, %v1202
      %v1317 = vpack.c.b16 %v1207, %v1205
      %v1318 = vpack.c.b16 %v1208, %v1206
      %v1319 = vpack.c.b16 %v1211, %v1209
      %v1320 = vpack.c.b16 %v1212, %v1210
      %v1321 = vpack.c.b16 %v1215, %v1213
      %v1322 = vpack.c.b16 %v1216, %v1214
      %v1323 = vpack.c.b16 %v1219, %v1217
      %v1324 = vpack.c.b16 %v1220, %v1218
      %v1325 = vpack.c.b16 %v1223, %v1221
      %v1326 = vpack.c.b16 %v1224, %v1222
      %v1327 = vpack.c.b16 %v1227, %v1225
      %v1328 = vpack.c.b16 %v1228, %v1226
      %v1329 = vpack.c.b16 %v1231, %v1229
      %v1330 = vpack.c.b16 %v1232, %v1230
      %v1331 = vpack.c.b16 %v1235, %v1233
      %v1332 = vpack.c.b16 %v1236, %v1234
      %1429 = vmatprep.subr.bf16.mxu0 %v1252
      %1430 = vmatpush1.bf16.msra.mxu0 %v1251
      %1431 = vmatprep.subr.bf16.mxu0 %v1250
      %1432 = vmatpush1.bf16.msra.mxu0 %v1249
      %1433 = vmatprep.subr.bf16.mxu0 %v1248
      %1434 = vmatpush1.bf16.msra.mxu0 %v1247
      %1435 = vmatprep.subr.bf16.mxu0 %v1246
      %1436 = vmatpush1.bf16.msra.mxu0 %v1245
      %1437 = vmatprep.subr.bf16.mxu0 %v1244
      %1438 = vmatpush1.bf16.msra.mxu0 %v1243
      %1439 = vmatprep.subr.bf16.mxu0 %v1242
      %1440 = vmatpush1.bf16.msra.mxu0 %v1241
      %1441 = vmatprep.subr.bf16.mxu0 %v1240
      %1442 = vmatpush1.bf16.msra.mxu0 %v1239
      %1443 = vmatprep.subr.bf16.mxu0 %v1238
      %1444 = vmatpush1.bf16.msra.mxu0 %v1237
      %1445 = vmatprep.subr.bf16.mxu0 %v1268
      %1446 = vmatpush2.bf16.msra.mxu0 %v1267
      %1447 = vmatprep.subr.bf16.mxu0 %v1266
      %1448 = vmatpush2.bf16.msra.mxu0 %v1265
      %1449 = vmatprep.subr.bf16.mxu0 %v1264
      %1450 = vmatpush2.bf16.msra.mxu0 %v1263
      %1451 = vmatprep.subr.bf16.mxu0 %v1262
      %1452 = vmatpush2.bf16.msra.mxu0 %v1261
      %1453 = vmatprep.subr.bf16.mxu0 %v1260
      %1454 = vmatpush2.bf16.msra.mxu0 %v1259
      %1455 = vmatprep.subr.bf16.mxu0 %v1258
      %1456 = vmatpush2.bf16.msra.mxu0 %v1257
      %1457 = vmatprep.subr.bf16.mxu0 %v1256
      %1458 = vmatpush2.bf16.msra.mxu0 %v1255
      %1459 = vmatprep.subr.bf16.mxu0 %v1254
      %1460 = vmatpush2.bf16.msra.mxu0 %v1253
      %1461 = vmatprep.mubr.bf16.mxu0 %v806
      %1462 = vmatmul.mubr.bf16.gmra.mxu0 %v805
      %v1463 = vpop.f32.mrf.mxu0
      %v1464 = vadd.f32 %v872, %v1463
      %v1465 = vpop.f32.mrf.mxu0
      %v1466 = vadd.f32 %v872, %v1465
      %v1467 = vpop.f32.mrf.mxu0
      %v1468 = vadd.f32 %v877, %v1467
      %v1469 = vpop.f32.mrf.mxu0
      %v1470 = vadd.f32 %v877, %v1469
      %1471 = vmatprep.mubr.bf16.mxu0 %v812
      %1472 = vmatmul.mubr.bf16.gmra.mxu0 %v811
      %v1473 = vpop.f32.mrf.mxu0
      %v1474 = vadd.f32 %v882, %v1473
      %v1475 = vpop.f32.mrf.mxu0
      %v1476 = vadd.f32 %v882, %v1475
      %v1477 = vpop.f32.mrf.mxu0
      %v1478 = vadd.f32 %v887, %v1477
      %v1479 = vpop.f32.mrf.mxu0
      %v1480 = vadd.f32 %v887, %v1479
      %1481 = vmatprep.mubr.bf16.mxu0 %v818
      %1482 = vmatmul.mubr.bf16.gmra.mxu0 %v817
      %v1483 = vpop.f32.mrf.mxu0
      %v1484 = vadd.f32 %v892, %v1483
      %v1485 = vpop.f32.mrf.mxu0
      %v1486 = vadd.f32 %v892, %v1485
      %v1487 = vpop.f32.mrf.mxu0
      %v1488 = vadd.f32 %v897, %v1487
      %v1489 = vpop.f32.mrf.mxu0
      %v1490 = vadd.f32 %v897, %v1489
      %1491 = vmatprep.mubr.bf16.mxu0 %v824
      %1492 = vmatmul.mubr.bf16.gmra.mxu0 %v823
      %v1493 = vpop.f32.mrf.mxu0
      %v1494 = vadd.f32 %v902, %v1493
      %v1495 = vpop.f32.mrf.mxu0
      %v1496 = vadd.f32 %v902, %v1495
      %v1497 = vpop.f32.mrf.mxu0
      %v1498 = vadd.f32 %v907, %v1497
      %v1499 = vpop.f32.mrf.mxu0
      %v1500 = vadd.f32 %v907, %v1499
      %1501 = vmatprep.mubr.bf16.mxu0 %v830
      %1502 = vmatmul.mubr.bf16.gmra.mxu0 %v829
      %v1503 = vpop.f32.mrf.mxu0
      %v1504 = vadd.f32 %v912, %v1503
      %v1505 = vpop.f32.mrf.mxu0
      %v1506 = vadd.f32 %v912, %v1505
      %v1507 = vpop.f32.mrf.mxu0
      %v1508 = vadd.f32 %v917, %v1507
      %v1509 = vpop.f32.mrf.mxu0
      %v1510 = vadd.f32 %v917, %v1509
      %1511 = vmatprep.mubr.bf16.mxu0 %v836
      %1512 = vmatmul.mubr.bf16.gmra.mxu0 %v835
      %v1513 = vpop.f32.mrf.mxu0
      %v1514 = vadd.f32 %v922, %v1513
      %v1515 = vpop.f32.mrf.mxu0
      %v1516 = vadd.f32 %v922, %v1515
      %v1517 = vpop.f32.mrf.mxu0
      %v1518 = vadd.f32 %v927, %v1517
      %v1519 = vpop.f32.mrf.mxu0
      %v1520 = vadd.f32 %v927, %v1519
      %1521 = vmatprep.mubr.bf16.mxu0 %v842
      %1522 = vmatmul.mubr.bf16.gmra.mxu0 %v841
      %v1523 = vpop.f32.mrf.mxu0
      %v1524 = vadd.f32 %v932, %v1523
      %v1525 = vpop.f32.mrf.mxu0
      %v1526 = vadd.f32 %v932, %v1525
      %v1527 = vpop.f32.mrf.mxu0
      %v1528 = vadd.f32 %v937, %v1527
      %v1529 = vpop.f32.mrf.mxu0
      %v1530 = vadd.f32 %v937, %v1529
      %1531 = vmatprep.mubr.bf16.mxu0 %v848
      %1532 = vmatmul.mubr.bf16.gmra.mxu0 %v847
      %v1533 = vpop.f32.mrf.mxu0
      %v1534 = vadd.f32 %v942, %v1533
      %v1535 = vpop.f32.mrf.mxu0
      %v1536 = vadd.f32 %v942, %v1535
      %v1537 = vpop.f32.mrf.mxu0
      %v1538 = vadd.f32 %v947, %v1537
      %v1539 = vpop.f32.mrf.mxu0
      %v1540 = vadd.f32 %v947, %v1539
      %1541 = vdwg.mxu0
      %1542 = vmatprep.subr.bf16.mxu0 %v1284
      %1543 = vmatpush1.bf16.msra.mxu0 %v1283
      %1544 = vmatprep.subr.bf16.mxu0 %v1282
      %1545 = vmatpush1.bf16.msra.mxu0 %v1281
      %1546 = vmatprep.subr.bf16.mxu0 %v1280
      %1547 = vmatpush1.bf16.msra.mxu0 %v1279
      %1548 = vmatprep.subr.bf16.mxu0 %v1278
      %1549 = vmatpush1.bf16.msra.mxu0 %v1277
      %1550 = vmatprep.subr.bf16.mxu0 %v1276
      %1551 = vmatpush1.bf16.msra.mxu0 %v1275
      %1552 = vmatprep.subr.bf16.mxu0 %v1274
      %1553 = vmatpush1.bf16.msra.mxu0 %v1273
      %1554 = vmatprep.subr.bf16.mxu0 %v1272
      %1555 = vmatpush1.bf16.msra.mxu0 %v1271
      %1556 = vmatprep.subr.bf16.mxu0 %v1270
      %1557 = vmatpush1.bf16.msra.mxu0 %v1269
      %1558 = vmatprep.subr.bf16.mxu0 %v1300
      %1559 = vmatpush2.bf16.msra.mxu0 %v1299
      %1560 = vmatprep.subr.bf16.mxu0 %v1298
      %1561 = vmatpush2.bf16.msra.mxu0 %v1297
      %1562 = vmatprep.subr.bf16.mxu0 %v1296
      %1563 = vmatpush2.bf16.msra.mxu0 %v1295
      %1564 = vmatprep.subr.bf16.mxu0 %v1294
      %1565 = vmatpush2.bf16.msra.mxu0 %v1293
      %1566 = vmatprep.subr.bf16.mxu0 %v1292
      %1567 = vmatpush2.bf16.msra.mxu0 %v1291
      %1568 = vmatprep.subr.bf16.mxu0 %v1290
      %1569 = vmatpush2.bf16.msra.mxu0 %v1289
      %1570 = vmatprep.subr.bf16.mxu0 %v1288
      %1571 = vmatpush2.bf16.msra.mxu0 %v1287
      %1572 = vmatprep.subr.bf16.mxu0 %v1286
      %1573 = vmatpush2.bf16.msra.mxu0 %v1285
      %1574 = vmatprep.mubr.bf16.mxu0 %v808
      %1575 = vmatmul.mubr.bf16.gmra.mxu0 %v807
      %v1576 = vpop.f32.mrf.mxu0
      %v1577 = vadd.f32 %v1464, %v1576
      %v1578 = vpop.f32.mrf.mxu0
      %v1579 = vadd.f32 %v1466, %v1578
      %v1580 = vpop.f32.mrf.mxu0
      %v1581 = vadd.f32 %v1468, %v1580
      %v1582 = vpop.f32.mrf.mxu0
      %v1583 = vadd.f32 %v1470, %v1582
      %1584 = vmatprep.mubr.bf16.mxu0 %v814
      %1585 = vmatmul.mubr.bf16.gmra.mxu0 %v813
      %v1586 = vpop.f32.mrf.mxu0
      %v1587 = vadd.f32 %v1474, %v1586
      %v1588 = vpop.f32.mrf.mxu0
      %v1589 = vadd.f32 %v1476, %v1588
      %v1590 = vpop.f32.mrf.mxu0
      %v1591 = vadd.f32 %v1478, %v1590
      %v1592 = vpop.f32.mrf.mxu0
      %v1593 = vadd.f32 %v1480, %v1592
      %1594 = vmatprep.mubr.bf16.mxu0 %v820
      %1595 = vmatmul.mubr.bf16.gmra.mxu0 %v819
      %v1596 = vpop.f32.mrf.mxu0
      %v1597 = vadd.f32 %v1484, %v1596
      %v1598 = vpop.f32.mrf.mxu0
      %v1599 = vadd.f32 %v1486, %v1598
      %v1600 = vpop.f32.mrf.mxu0
      %v1601 = vadd.f32 %v1488, %v1600
      %v1602 = vpop.f32.mrf.mxu0
      %v1603 = vadd.f32 %v1490, %v1602
      %1604 = vmatprep.mubr.bf16.mxu0 %v826
      %1605 = vmatmul.mubr.bf16.gmra.mxu0 %v825
      %v1606 = vpop.f32.mrf.mxu0
      %v1607 = vadd.f32 %v1494, %v1606
      %v1608 = vpop.f32.mrf.mxu0
      %v1609 = vadd.f32 %v1496, %v1608
      %v1610 = vpop.f32.mrf.mxu0
      %v1611 = vadd.f32 %v1498, %v1610
      %v1612 = vpop.f32.mrf.mxu0
      %v1613 = vadd.f32 %v1500, %v1612
      %1614 = vmatprep.mubr.bf16.mxu0 %v832
      %1615 = vmatmul.mubr.bf16.gmra.mxu0 %v831
      %v1616 = vpop.f32.mrf.mxu0
      %v1617 = vadd.f32 %v1504, %v1616
      %v1618 = vpop.f32.mrf.mxu0
      %v1619 = vadd.f32 %v1506, %v1618
      %v1620 = vpop.f32.mrf.mxu0
      %v1621 = vadd.f32 %v1508, %v1620
      %v1622 = vpop.f32.mrf.mxu0
      %v1623 = vadd.f32 %v1510, %v1622
      %1624 = vmatprep.mubr.bf16.mxu0 %v838
      %1625 = vmatmul.mubr.bf16.gmra.mxu0 %v837
      %v1626 = vpop.f32.mrf.mxu0
      %v1627 = vadd.f32 %v1514, %v1626
      %v1628 = vpop.f32.mrf.mxu0
      %v1629 = vadd.f32 %v1516, %v1628
      %v1630 = vpop.f32.mrf.mxu0
      %v1631 = vadd.f32 %v1518, %v1630
      %v1632 = vpop.f32.mrf.mxu0
      %v1633 = vadd.f32 %v1520, %v1632
      %1634 = vmatprep.mubr.bf16.mxu0 %v844
      %1635 = vmatmul.mubr.bf16.gmra.mxu0 %v843
      %v1636 = vpop.f32.mrf.mxu0
      %v1637 = vadd.f32 %v1524, %v1636
      %v1638 = vpop.f32.mrf.mxu0
      %v1639 = vadd.f32 %v1526, %v1638
      %v1640 = vpop.f32.mrf.mxu0
      %v1641 = vadd.f32 %v1528, %v1640
      %v1642 = vpop.f32.mrf.mxu0
      %v1643 = vadd.f32 %v1530, %v1642
      %1644 = vmatprep.mubr.bf16.mxu0 %v850
      %1645 = vmatmul.mubr.bf16.gmra.mxu0 %v849
      %v1646 = vpop.f32.mrf.mxu0
      %v1647 = vadd.f32 %v1534, %v1646
      %v1648 = vpop.f32.mrf.mxu0
      %v1649 = vadd.f32 %v1536, %v1648
      %v1650 = vpop.f32.mrf.mxu0
      %v1651 = vadd.f32 %v1538, %v1650
      %v1652 = vpop.f32.mrf.mxu0
      %v1653 = vadd.f32 %v1540, %v1652
      %1654 = vdwg.mxu0
      %1655 = vmatprep.subr.bf16.mxu0 %v1316
      %1656 = vmatpush1.bf16.msra.mxu0 %v1315
      %1657 = vmatprep.subr.bf16.mxu0 %v1314
      %1658 = vmatpush1.bf16.msra.mxu0 %v1313
      %1659 = vmatprep.subr.bf16.mxu0 %v1312
      %1660 = vmatpush1.bf16.msra.mxu0 %v1311
      %1661 = vmatprep.subr.bf16.mxu0 %v1310
      %1662 = vmatpush1.bf16.msra.mxu0 %v1309
      %1663 = vmatprep.subr.bf16.mxu0 %v1308
      %1664 = vmatpush1.bf16.msra.mxu0 %v1307
      %1665 = vmatprep.subr.bf16.mxu0 %v1306
      %1666 = vmatpush1.bf16.msra.mxu0 %v1305
      %1667 = vmatprep.subr.bf16.mxu0 %v1304
      %1668 = vmatpush1.bf16.msra.mxu0 %v1303
      %1669 = vmatprep.subr.bf16.mxu0 %v1302
      %1670 = vmatpush1.bf16.msra.mxu0 %v1301
      %1671 = vmatprep.subr.bf16.mxu0 %v1332
      %1672 = vmatpush2.bf16.msra.mxu0 %v1331
      %1673 = vmatprep.subr.bf16.mxu0 %v1330
      %1674 = vmatpush2.bf16.msra.mxu0 %v1329
      %1675 = vmatprep.subr.bf16.mxu0 %v1328
      %1676 = vmatpush2.bf16.msra.mxu0 %v1327
      %1677 = vmatprep.subr.bf16.mxu0 %v1326
      %1678 = vmatpush2.bf16.msra.mxu0 %v1325
      %1679 = vmatprep.subr.bf16.mxu0 %v1324
      %1680 = vmatpush2.bf16.msra.mxu0 %v1323
      %1681 = vmatprep.subr.bf16.mxu0 %v1322
      %1682 = vmatpush2.bf16.msra.mxu0 %v1321
      %1683 = vmatprep.subr.bf16.mxu0 %v1320
      %1684 = vmatpush2.bf16.msra.mxu0 %v1319
      %1685 = vmatprep.subr.bf16.mxu0 %v1318
      %1686 = vmatpush2.bf16.msra.mxu0 %v1317
      %1687 = vmatprep.mubr.bf16.mxu0 %v810
      %1688 = vmatmul.mubr.bf16.gmra.mxu0 %v809
      %v1689 = vpop.f32.mrf.mxu0
      %v1690 = vadd.f32 %v1577, %v1689
      %v1691 = vpop.f32.mrf.mxu0
      %v1692 = vadd.f32 %v1579, %v1691
      %v1693 = vpop.f32.mrf.mxu0
      %v1694 = vadd.f32 %v1581, %v1693
      %v1695 = vpop.f32.mrf.mxu0
      %v1696 = vadd.f32 %v1583, %v1695
      %1697 = vmatprep.mubr.bf16.mxu0 %v816
      %1698 = vmatmul.mubr.bf16.gmra.mxu0 %v815
      %v1699 = vpop.f32.mrf.mxu0
      %v1700 = vadd.f32 %v1587, %v1699
      %v1701 = vpop.f32.mrf.mxu0
      %v1702 = vadd.f32 %v1589, %v1701
      %v1703 = vpop.f32.mrf.mxu0
      %v1704 = vadd.f32 %v1591, %v1703
      %v1705 = vpop.f32.mrf.mxu0
      %v1706 = vadd.f32 %v1593, %v1705
      %1707 = vmatprep.mubr.bf16.mxu0 %v822
      %1708 = vmatmul.mubr.bf16.gmra.mxu0 %v821
      %v1709 = vpop.f32.mrf.mxu0
      %v1710 = vadd.f32 %v1597, %v1709
      %v1711 = vpop.f32.mrf.mxu0
      %v1712 = vadd.f32 %v1599, %v1711
      %v1713 = vpop.f32.mrf.mxu0
      %v1714 = vadd.f32 %v1601, %v1713
      %v1715 = vpop.f32.mrf.mxu0
      %v1716 = vadd.f32 %v1603, %v1715
      %1717 = vmatprep.mubr.bf16.mxu0 %v828
      %1718 = vmatmul.mubr.bf16.gmra.mxu0 %v827
      %v1719 = vpop.f32.mrf.mxu0
      %v1720 = vadd.f32 %v1607, %v1719
      %v1721 = vpop.f32.mrf.mxu0
      %v1722 = vadd.f32 %v1609, %v1721
      %v1723 = vpop.f32.mrf.mxu0
      %v1724 = vadd.f32 %v1611, %v1723
      %v1725 = vpop.f32.mrf.mxu0
      %v1726 = vadd.f32 %v1613, %v1725
      %1727 = vmatprep.mubr.bf16.mxu0 %v834
      %1728 = vmatmul.mubr.bf16.gmra.mxu0 %v833
      %v1729 = vpop.f32.mrf.mxu0
      %v1730 = vadd.f32 %v1617, %v1729
      %v1731 = vpop.f32.mrf.mxu0
      %v1732 = vadd.f32 %v1619, %v1731
      %v1733 = vpop.f32.mrf.mxu0
      %v1734 = vadd.f32 %v1621, %v1733
      %v1735 = vpop.f32.mrf.mxu0
      %v1736 = vadd.f32 %v1623, %v1735
      %1737 = vmatprep.mubr.bf16.mxu0 %v840
      %1738 = vmatmul.mubr.bf16.gmra.mxu0 %v839
      %v1739 = vpop.f32.mrf.mxu0
      %v1740 = vadd.f32 %v1627, %v1739
      %v1741 = vpop.f32.mrf.mxu0
      %v1742 = vadd.f32 %v1629, %v1741
      %v1743 = vpop.f32.mrf.mxu0
      %v1744 = vadd.f32 %v1631, %v1743
      %v1745 = vpop.f32.mrf.mxu0
      %v1746 = vadd.f32 %v1633, %v1745
      %1747 = vmatprep.mubr.bf16.mxu0 %v846
      %1748 = vmatmul.mubr.bf16.gmra.mxu0 %v845
      %v1749 = vpop.f32.mrf.mxu0
      %v1750 = vadd.f32 %v1637, %v1749
      %v1751 = vpop.f32.mrf.mxu0
      %v1752 = vadd.f32 %v1639, %v1751
      %v1753 = vpop.f32.mrf.mxu0
      %v1754 = vadd.f32 %v1641, %v1753
      %v1755 = vpop.f32.mrf.mxu0
      %v1756 = vadd.f32 %v1643, %v1755
      %1757 = vmatprep.mubr.bf16.mxu0 %v852
      %1758 = vmatmul.mubr.bf16.gmra.mxu0 %v851
      %v1759 = vpop.f32.mrf.mxu0
      %v1760 = vadd.f32 %v1647, %v1759
      %v1761 = vpop.f32.mrf.mxu0
      %v1762 = vadd.f32 %v1649, %v1761
      %v1763 = vpop.f32.mrf.mxu0
      %v1764 = vadd.f32 %v1651, %v1763
      %v1765 = vpop.f32.mrf.mxu0
      %v1766 = vadd.f32 %v1653, %v1765
      %1767 = vdwg.mxu0
      %v1768 = vmul.f32 %v1690, 0.2
      %v1769 = vmul.f32 %v1692, 0.2
      %v1770 = vmul.f32 %v1694, 0.2
      %v1771 = vmul.f32 %v1696, 0.2
      %v1772 = vmul.f32 %v1700, 0.2
      %v1773 = vmul.f32 %v1702, 0.2
      %v1774 = vmul.f32 %v1704, 0.2
      %v1775 = vmul.f32 %v1706, 0.2
      %v1776 = vmul.f32 %v1710, 0.2
      %v1777 = vmul.f32 %v1712, 0.2
      %v1778 = vmul.f32 %v1714, 0.2
      %v1779 = vmul.f32 %v1716, 0.2
      %v1780 = vmul.f32 %v1720, 0.2
      %v1781 = vmul.f32 %v1722, 0.2
      %v1782 = vmul.f32 %v1724, 0.2
      %v1783 = vmul.f32 %v1726, 0.2
      %v1784 = vmul.f32 %v1730, 0.2
      %v1785 = vmul.f32 %v1732, 0.2
      %v1786 = vmul.f32 %v1734, 0.2
      %v1787 = vmul.f32 %v1736, 0.2
      %v1788 = vmul.f32 %v1740, 0.2
      %v1789 = vmul.f32 %v1742, 0.2
      %v1790 = vmul.f32 %v1744, 0.2
      %v1791 = vmul.f32 %v1746, 0.2
      %v1792 = vmul.f32 %v1750, 0.2
      %v1793 = vmul.f32 %v1752, 0.2
      %v1794 = vmul.f32 %v1754, 0.2
      %v1795 = vmul.f32 %v1756, 0.2
      %v1796 = vmul.f32 %v1760, 0.2
      %v1797 = vmul.f32 %v1762, 0.2
      %v1798 = vmul.f32 %v1764, 0.2
      %v1799 = vmul.f32 %v1766, 0.2
      %v1800 = vmax.f32 %v1690, %v1768
      %v1801 = vmax.f32 %v1692, %v1769
      %v1802 = vmax.f32 %v1694, %v1770
      %v1803 = vmax.f32 %v1696, %v1771
      %v1804 = vmax.f32 %v1700, %v1772
      %v1805 = vmax.f32 %v1702, %v1773
      %v1806 = vmax.f32 %v1704, %v1774
      %v1807 = vmax.f32 %v1706, %v1775
      %v1808 = vmax.f32 %v1710, %v1776
      %v1809 = vmax.f32 %v1712, %v1777
      %v1810 = vmax.f32 %v1714, %v1778
      %v1811 = vmax.f32 %v1716, %v1779
      %v1812 = vmax.f32 %v1720, %v1780
      %v1813 = vmax.f32 %v1722, %v1781
      %v1814 = vmax.f32 %v1724, %v1782
      %v1815 = vmax.f32 %v1726, %v1783
      %v1816 = vmax.f32 %v1730, %v1784
      %v1817 = vmax.f32 %v1732, %v1785
      %v1818 = vmax.f32 %v1734, %v1786
      %v1819 = vmax.f32 %v1736, %v1787
      %v1820 = vmax.f32 %v1740, %v1788
      %v1821 = vmax.f32 %v1742, %v1789
      %v1822 = vmax.f32 %v1744, %v1790
      %v1823 = vmax.f32 %v1746, %v1791
      %v1824 = vmax.f32 %v1750, %v1792
      %v1825 = vmax.f32 %v1752, %v1793
      %v1826 = vmax.f32 %v1754, %v1794
      %v1827 = vmax.f32 %v1756, %v1795
      %v1828 = vmax.f32 %v1760, %v1796
      %v1829 = vmax.f32 %v1762, %v1797
      %v1830 = vmax.f32 %v1764, %v1798
      %v1831 = vmax.f32 %v1766, %v1799
      %v1832 = vld [vmem:[%s8] sm:$0x3]
      %v1833 = vld [vmem:[%s425] sm:$0x1]
      %v1834 = vunpack.c.l.bf16 %v1832
      %v1836 = vlaneseq
      %v1837 = vshrl.u32 %v1836, 7
      %v1838 = vsub.s32 0, %v1837
      %v1839 = vrot.slane %v1833, %v1838
      %v1841 = vmul.f32 %v1834, %v1839
      %v1842 = vpack.c.bf16 %v1841, %v1841
      %v1843 = vpack.c.bf16 %v1802, %v1800
      %v1844 = vpack.c.bf16 %v1803, %v1801
      %v1845 = vpack.c.bf16 %v1806, %v1804
      %v1846 = vpack.c.bf16 %v1807, %v1805
      %v1847 = vpack.c.bf16 %v1810, %v1808
      %v1848 = vpack.c.bf16 %v1811, %v1809
      %v1849 = vpack.c.bf16 %v1814, %v1812
      %v1850 = vpack.c.bf16 %v1815, %v1813
      %v1851 = vpack.c.bf16 %v1818, %v1816
      %v1852 = vpack.c.bf16 %v1819, %v1817
      %v1853 = vpack.c.bf16 %v1822, %v1820
      %v1854 = vpack.c.bf16 %v1823, %v1821
      %v1855 = vpack.c.bf16 %v1826, %v1824
      %v1856 = vpack.c.bf16 %v1827, %v1825
      %v1857 = vpack.c.bf16 %v1830, %v1828
      %v1858 = vpack.c.bf16 %v1831, %v1829
      %v1859 = vld [vmem:[%s5] sm:$0xf]
      %v1860 = vld [vmem:[%s5 + $0x4] sm:$0xf]
      %v1861 = vld [vmem:[%s5 + $0x8] sm:$0xf]
      %v1862 = vld [vmem:[%s5 + $0xc] sm:$0xf]
      %v1863 = vld [vmem:[%s5 + $0x10] sm:$0xf]
      %v1864 = vld [vmem:[%s5 + $0x14] sm:$0xf]
      %v1865 = vld [vmem:[%s5 + $0x18] sm:$0xf]
      %v1866 = vld [vmem:[%s5 + $0x1c] sm:$0xf]
      %v1867 = vld [vmem:[%s5 + $0x20] sm:$0xf]
      %v1868 = vld [vmem:[%s5 + $0x24] sm:$0xf]
      %v1869 = vld [vmem:[%s5 + $0x28] sm:$0xf]
      %v1870 = vld [vmem:[%s5 + $0x2c] sm:$0xf]
      %v1871 = vld [vmem:[%s5 + $0x30] sm:$0xf]
      %v1872 = vld [vmem:[%s5 + $0x34] sm:$0xf]
      %v1873 = vld [vmem:[%s5 + $0x38] sm:$0xf]
      %v1874 = vld [vmem:[%s5 + $0x3c] sm:$0xf]
      %v1875 = vld [vmem:[%s421] sm:$0x1]
      %v1876 = vunpack.c.l.bf16 %v1859
      %v1877 = vunpack.c.l.bf16 %v1860
      %v1878 = vunpack.c.l.bf16 %v1861
      %v1879 = vunpack.c.l.bf16 %v1862
      %v1880 = vunpack.c.l.bf16 %v1863
      %v1881 = vunpack.c.l.bf16 %v1864
      %v1882 = vunpack.c.l.bf16 %v1865
      %v1883 = vunpack.c.l.bf16 %v1866
      %v1884 = vunpack.c.l.bf16 %v1867
      %v1885 = vunpack.c.l.bf16 %v1868
      %v1886 = vunpack.c.l.bf16 %v1869
      %v1887 = vunpack.c.l.bf16 %v1870
      %v1888 = vunpack.c.l.bf16 %v1871
      %v1889 = vunpack.c.l.bf16 %v1872
      %v1890 = vunpack.c.l.bf16 %v1873
      %v1891 = vunpack.c.l.bf16 %v1874
      %v1893 = vlaneseq
      %v1894 = vshrl.u32 %v1893, 7
      %v1895 = vsub.s32 0, %v1894
      %v1896 = vrot.slane %v1875, %v1895
      %v1898 = vmul.f32 %v1876, %v1896
      %v1899 = vmul.f32 %v1877, %v1896
      %v1900 = vmul.f32 %v1878, %v1896
      %v1901 = vmul.f32 %v1879, %v1896
      %v1902 = vmul.f32 %v1880, %v1896
      %v1903 = vmul.f32 %v1881, %v1896
      %v1904 = vmul.f32 %v1882, %v1896
      %v1905 = vmul.f32 %v1883, %v1896
      %v1906 = vmul.f32 %v1884, %v1896
      %v1907 = vmul.f32 %v1885, %v1896
      %v1908 = vmul.f32 %v1886, %v1896
      %v1909 = vmul.f32 %v1887, %v1896
      %v1910 = vmul.f32 %v1888, %v1896
      %v1911 = vmul.f32 %v1889, %v1896
      %v1912 = vmul.f32 %v1890, %v1896
      %v1913 = vmul.f32 %v1891, %v1896
      %v1914 = vpack.c.bf16 %v1899, %v1898
      %v1915 = vpack.c.bf16 %v1901, %v1900
      %v1916 = vpack.c.bf16 %v1903, %v1902
      %v1917 = vpack.c.bf16 %v1905, %v1904
      %v1918 = vpack.c.bf16 %v1907, %v1906
      %v1919 = vpack.c.bf16 %v1909, %v1908
      %v1920 = vpack.c.bf16 %v1911, %v1910
      %v1921 = vpack.c.bf16 %v1913, %v1912
      %v1922 = vld [vmem:[%s6] sm:$0xff]
      %v1923 = vld [vmem:[%s6 + $0x8] sm:$0xff]
      %v1924 = vld [vmem:[%s6 + $0x10] sm:$0xff]
      %v1925 = vld [vmem:[%s6 + $0x18] sm:$0xff]
      %v1926 = vld [vmem:[%s6 + $0x20] sm:$0xff]
      %v1927 = vld [vmem:[%s6 + $0x28] sm:$0xff]
      %v1928 = vld [vmem:[%s6 + $0x30] sm:$0xff]
      %v1929 = vld [vmem:[%s6 + $0x38] sm:$0xff]
      %v1930 = vld [vmem:[%s6 + $0x40] sm:$0xff]
      %v1931 = vld [vmem:[%s6 + $0x48] sm:$0xff]
      %v1932 = vld [vmem:[%s6 + $0x50] sm:$0xff]
      %v1933 = vld [vmem:[%s6 + $0x58] sm:$0xff]
      %v1934 = vld [vmem:[%s6 + $0x60] sm:$0xff]
      %v1935 = vld [vmem:[%s6 + $0x68] sm:$0xff]
      %v1936 = vld [vmem:[%s6 + $0x70] sm:$0xff]
      %v1937 = vld [vmem:[%s6 + $0x78] sm:$0xff]
      %1939 = vset.pattern.permute.xlu0 0
      %1940 = vperm.xlu0 %1939, %v1922
      %v1941 = vpop.permute.xlu0 %1940
      %1944 = vset.pattern.permute.xlu0 0
      %1945 = vperm.xlu0 %1944, %v1923
      %v1946 = vpop.permute.xlu0 %1945
      %1949 = vset.pattern.permute.xlu0 0
      %1950 = vperm.xlu0 %1949, %v1924
      %v1951 = vpop.permute.xlu0 %1950
      %1954 = vset.pattern.permute.xlu0 0
      %1955 = vperm.xlu0 %1954, %v1925
      %v1956 = vpop.permute.xlu0 %1955
      %1959 = vset.pattern.permute.xlu0 0
      %1960 = vperm.xlu0 %1959, %v1926
      %v1961 = vpop.permute.xlu0 %1960
      %1964 = vset.pattern.permute.xlu0 0
      %1965 = vperm.xlu0 %1964, %v1927
      %v1966 = vpop.permute.xlu0 %1965
      %1969 = vset.pattern.permute.xlu0 0
      %1970 = vperm.xlu0 %1969, %v1928
      %v1971 = vpop.permute.xlu0 %1970
      %1974 = vset.pattern.permute.xlu0 0
      %1975 = vperm.xlu0 %1974, %v1929
      %v1976 = vpop.permute.xlu0 %1975
      %1979 = vset.pattern.permute.xlu0 0
      %1980 = vperm.xlu0 %1979, %v1930
      %v1981 = vpop.permute.xlu0 %1980
      %1984 = vset.pattern.permute.xlu0 0
      %1985 = vperm.xlu0 %1984, %v1931
      %v1986 = vpop.permute.xlu0 %1985
      %1989 = vset.pattern.permute.xlu0 0
      %1990 = vperm.xlu0 %1989, %v1932
      %v1991 = vpop.permute.xlu0 %1990
      %1994 = vset.pattern.permute.xlu0 0
      %1995 = vperm.xlu0 %1994, %v1933
      %v1996 = vpop.permute.xlu0 %1995
      %1999 = vset.pattern.permute.xlu0 0
      %2000 = vperm.xlu0 %1999, %v1934
      %v2001 = vpop.permute.xlu0 %2000
      %2004 = vset.pattern.permute.xlu0 0
      %2005 = vperm.xlu0 %2004, %v1935
      %v2006 = vpop.permute.xlu0 %2005
      %2009 = vset.pattern.permute.xlu0 0
      %2010 = vperm.xlu0 %2009, %v1936
      %v2011 = vpop.permute.xlu0 %2010
      %2014 = vset.pattern.permute.xlu0 0
      %2015 = vperm.xlu0 %2014, %v1937
      %v2016 = vpop.permute.xlu0 %2015
      %2018 = vmatprep.subr.bf16.mxu0 %v1858
      %2019 = vmatpush1.bf16.msra.mxu0 %v1857
      %2020 = vmatprep.subr.bf16.mxu0 %v1856
      %2021 = vmatpush1.bf16.msra.mxu0 %v1855
      %2022 = vmatprep.subr.bf16.mxu0 %v1854
      %2023 = vmatpush1.bf16.msra.mxu0 %v1853
      %2024 = vmatprep.subr.bf16.mxu0 %v1852
      %2025 = vmatpush1.bf16.msra.mxu0 %v1851
      %2026 = vmatprep.subr.bf16.mxu0 %v1850
      %2027 = vmatpush1.bf16.msra.mxu0 %v1849
      %2028 = vmatprep.subr.bf16.mxu0 %v1848
      %2029 = vmatpush1.bf16.msra.mxu0 %v1847
      %2030 = vmatprep.subr.bf16.mxu0 %v1846
      %2031 = vmatpush1.bf16.msra.mxu0 %v1845
      %2032 = vmatprep.subr.bf16.mxu0 %v1844
      %2033 = vmatpush1.bf16.msra.mxu0 %v1843
      %2034 = vmatprep.subr.bf16.mxu0 0
      %2035 = vmatpush2.bf16.msra.mxu0 0
      %2036 = vmatprep.subr.bf16.mxu0 0
      %2037 = vmatpush2.bf16.msra.mxu0 0
      %2038 = vmatprep.subr.bf16.mxu0 0
      %2039 = vmatpush2.bf16.msra.mxu0 0
      %2040 = vmatprep.subr.bf16.mxu0 0
      %2041 = vmatpush2.bf16.msra.mxu0 0
      %2042 = vmatprep.subr.bf16.mxu0 0
      %2043 = vmatpush2.bf16.msra.mxu0 0
      %2044 = vmatprep.subr.bf16.mxu0 0
      %2045 = vmatpush2.bf16.msra.mxu0 0
      %2046 = vmatprep.subr.bf16.mxu0 0
      %2047 = vmatpush2.bf16.msra.mxu0 0
      %2048 = vmatprep.subr.bf16.mxu0 0
      %2049 = vmatpush2.bf16.msra.mxu0 0
      %2050 = vmatprep.mubr.bf16.mxu0 0
      %2051 = vmatmul.mubr.bf16.gmra.mxu0 %v1914
      %v2052 = vpop.f32.mrf.mxu0
      %v2053 = vadd.f32 %v1941, %v2052
      %v2054 = vpop.f32.mrf.mxu0
      %v2055 = vadd.f32 %v1941, %v2054
      %v2056 = vpop.f32.mrf.mxu0
      %v2057 = vadd.f32 %v1946, %v2056
      %v2058 = vpop.f32.mrf.mxu0
      %v2059 = vadd.f32 %v1946, %v2058
      %2060 = vmatprep.mubr.bf16.mxu0 0
      %2061 = vmatmul.mubr.bf16.gmra.mxu0 %v1915
      %v2062 = vpop.f32.mrf.mxu0
      %v2063 = vadd.f32 %v1951, %v2062
      %v2064 = vpop.f32.mrf.mxu0
      %v2065 = vadd.f32 %v1951, %v2064
      %v2066 = vpop.f32.mrf.mxu0
      %v2067 = vadd.f32 %v1956, %v2066
      %v2068 = vpop.f32.mrf.mxu0
      %v2069 = vadd.f32 %v1956, %v2068
      %2070 = vmatprep.mubr.bf16.mxu0 0
      %2071 = vmatmul.mubr.bf16.gmra.mxu0 %v1916
      %v2072 = vpop.f32.mrf.mxu0
      %v2073 = vadd.f32 %v1961, %v2072
      %v2074 = vpop.f32.mrf.mxu0
      %v2075 = vadd.f32 %v1961, %v2074
      %v2076 = vpop.f32.mrf.mxu0
      %v2077 = vadd.f32 %v1966, %v2076
      %v2078 = vpop.f32.mrf.mxu0
      %v2079 = vadd.f32 %v1966, %v2078
      %2080 = vmatprep.mubr.bf16.mxu0 0
      %2081 = vmatmul.mubr.bf16.gmra.mxu0 %v1917
      %v2082 = vpop.f32.mrf.mxu0
      %v2083 = vadd.f32 %v1971, %v2082
      %v2084 = vpop.f32.mrf.mxu0
      %v2085 = vadd.f32 %v1971, %v2084
      %v2086 = vpop.f32.mrf.mxu0
      %v2087 = vadd.f32 %v1976, %v2086
      %v2088 = vpop.f32.mrf.mxu0
      %v2089 = vadd.f32 %v1976, %v2088
      %2090 = vmatprep.mubr.bf16.mxu0 0
      %2091 = vmatmul.mubr.bf16.gmra.mxu0 %v1918
      %v2092 = vpop.f32.mrf.mxu0
      %v2093 = vadd.f32 %v1981, %v2092
      %v2094 = vpop.f32.mrf.mxu0
      %v2095 = vadd.f32 %v1981, %v2094
      %v2096 = vpop.f32.mrf.mxu0
      %v2097 = vadd.f32 %v1986, %v2096
      %v2098 = vpop.f32.mrf.mxu0
      %v2099 = vadd.f32 %v1986, %v2098
      %2100 = vmatprep.mubr.bf16.mxu0 0
      %2101 = vmatmul.mubr.bf16.gmra.mxu0 %v1919
      %v2102 = vpop.f32.mrf.mxu0
      %v2103 = vadd.f32 %v1991, %v2102
      %v2104 = vpop.f32.mrf.mxu0
      %v2105 = vadd.f32 %v1991, %v2104
      %v2106 = vpop.f32.mrf.mxu0
      %v2107 = vadd.f32 %v1996, %v2106
      %v2108 = vpop.f32.mrf.mxu0
      %v2109 = vadd.f32 %v1996, %v2108
      %2110 = vmatprep.mubr.bf16.mxu0 0
      %2111 = vmatmul.mubr.bf16.gmra.mxu0 %v1920
      %v2112 = vpop.f32.mrf.mxu0
      %v2113 = vadd.f32 %v2001, %v2112
      %v2114 = vpop.f32.mrf.mxu0
      %v2115 = vadd.f32 %v2001, %v2114
      %v2116 = vpop.f32.mrf.mxu0
      %v2117 = vadd.f32 %v2006, %v2116
      %v2118 = vpop.f32.mrf.mxu0
      %v2119 = vadd.f32 %v2006, %v2118
      %2120 = vmatprep.mubr.bf16.mxu0 0
      %2121 = vmatmul.mubr.bf16.gmra.mxu0 %v1921
      %v2122 = vpop.f32.mrf.mxu0
      %v2123 = vadd.f32 %v2011, %v2122
      %v2124 = vpop.f32.mrf.mxu0
      %v2125 = vadd.f32 %v2011, %v2124
      %v2126 = vpop.f32.mrf.mxu0
      %v2127 = vadd.f32 %v2016, %v2126
      %v2128 = vpop.f32.mrf.mxu0
      %v2129 = vadd.f32 %v2016, %v2128
      %2130 = vdwg.mxu0
      %v2131 = vmul.f32 %v2053, 0.2
      %v2132 = vmul.f32 %v2055, 0.2
      %v2133 = vmul.f32 %v2057, 0.2
      %v2134 = vmul.f32 %v2059, 0.2
      %v2135 = vmul.f32 %v2063, 0.2
      %v2136 = vmul.f32 %v2065, 0.2
      %v2137 = vmul.f32 %v2067, 0.2
      %v2138 = vmul.f32 %v2069, 0.2
      %v2139 = vmul.f32 %v2073, 0.2
      %v2140 = vmul.f32 %v2075, 0.2
      %v2141 = vmul.f32 %v2077, 0.2
      %v2142 = vmul.f32 %v2079, 0.2
      %v2143 = vmul.f32 %v2083, 0.2
      %v2144 = vmul.f32 %v2085, 0.2
      %v2145 = vmul.f32 %v2087, 0.2
      %v2146 = vmul.f32 %v2089, 0.2
      %v2147 = vmul.f32 %v2093, 0.2
      %v2148 = vmul.f32 %v2095, 0.2
      %v2149 = vmul.f32 %v2097, 0.2
      %v2150 = vmul.f32 %v2099, 0.2
      %v2151 = vmul.f32 %v2103, 0.2
      %v2152 = vmul.f32 %v2105, 0.2
      %v2153 = vmul.f32 %v2107, 0.2
      %v2154 = vmul.f32 %v2109, 0.2
      %v2155 = vmul.f32 %v2113, 0.2
      %v2156 = vmul.f32 %v2115, 0.2
      %v2157 = vmul.f32 %v2117, 0.2
      %v2158 = vmul.f32 %v2119, 0.2
      %v2159 = vmul.f32 %v2123, 0.2
      %v2160 = vmul.f32 %v2125, 0.2
      %v2161 = vmul.f32 %v2127, 0.2
      %v2162 = vmul.f32 %v2129, 0.2
      %v2163 = vmax.f32 %v2053, %v2131
      %v2164 = vmax.f32 %v2055, %v2132
      %v2165 = vmax.f32 %v2057, %v2133
      %v2166 = vmax.f32 %v2059, %v2134
      %v2167 = vmax.f32 %v2063, %v2135
      %v2168 = vmax.f32 %v2065, %v2136
      %v2169 = vmax.f32 %v2067, %v2137
      %v2170 = vmax.f32 %v2069, %v2138
      %v2171 = vmax.f32 %v2073, %v2139
      %v2172 = vmax.f32 %v2075, %v2140
      %v2173 = vmax.f32 %v2077, %v2141
      %v2174 = vmax.f32 %v2079, %v2142
      %v2175 = vmax.f32 %v2083, %v2143
      %v2176 = vmax.f32 %v2085, %v2144
      %v2177 = vmax.f32 %v2087, %v2145
      %v2178 = vmax.f32 %v2089, %v2146
      %v2179 = vmax.f32 %v2093, %v2147
      %v2180 = vmax.f32 %v2095, %v2148
      %v2181 = vmax.f32 %v2097, %v2149
      %v2182 = vmax.f32 %v2099, %v2150
      %v2183 = vmax.f32 %v2103, %v2151
      %v2184 = vmax.f32 %v2105, %v2152
      %v2185 = vmax.f32 %v2107, %v2153
      %v2186 = vmax.f32 %v2109, %v2154
      %v2187 = vmax.f32 %v2113, %v2155
      %v2188 = vmax.f32 %v2115, %v2156
      %v2189 = vmax.f32 %v2117, %v2157
      %v2190 = vmax.f32 %v2119, %v2158
      %v2191 = vmax.f32 %v2123, %v2159
      %v2192 = vmax.f32 %v2125, %v2160
      %v2193 = vmax.f32 %v2127, %v2161
      %v2194 = vmax.f32 %v2129, %v2162
      %s2195 = scalar_lea.vmem %s5, 64
      %v2196 = vld [vmem:[%s2195] sm:$0xf]
      %v2197 = vld [vmem:[%s2195 + $0x4] sm:$0xf]
      %v2198 = vld [vmem:[%s2195 + $0x8] sm:$0xf]
      %v2199 = vld [vmem:[%s2195 + $0xc] sm:$0xf]
      %v2200 = vld [vmem:[%s2195 + $0x10] sm:$0xf]
      %v2201 = vld [vmem:[%s2195 + $0x14] sm:$0xf]
      %v2202 = vld [vmem:[%s2195 + $0x18] sm:$0xf]
      %v2203 = vld [vmem:[%s2195 + $0x1c] sm:$0xf]
      %v2204 = vld [vmem:[%s2195 + $0x20] sm:$0xf]
      %v2205 = vld [vmem:[%s2195 + $0x24] sm:$0xf]
      %v2206 = vld [vmem:[%s2195 + $0x28] sm:$0xf]
      %v2207 = vld [vmem:[%s2195 + $0x2c] sm:$0xf]
      %v2208 = vld [vmem:[%s2195 + $0x30] sm:$0xf]
      %v2209 = vld [vmem:[%s2195 + $0x34] sm:$0xf]
      %v2210 = vld [vmem:[%s2195 + $0x38] sm:$0xf]
      %v2211 = vld [vmem:[%s2195 + $0x3c] sm:$0xf]
      %s2212 = scalar_lea.vmem %s421, 1
      %v2213 = vld [vmem:[%s2212] sm:$0x1]
      %v2214 = vunpack.c.l.bf16 %v2196
      %v2215 = vunpack.c.l.bf16 %v2197
      %v2216 = vunpack.c.l.bf16 %v2198
      %v2217 = vunpack.c.l.bf16 %v2199
      %v2218 = vunpack.c.l.bf16 %v2200
      %v2219 = vunpack.c.l.bf16 %v2201
      %v2220 = vunpack.c.l.bf16 %v2202
      %v2221 = vunpack.c.l.bf16 %v2203
      %v2222 = vunpack.c.l.bf16 %v2204
      %v2223 = vunpack.c.l.bf16 %v2205
      %v2224 = vunpack.c.l.bf16 %v2206
      %v2225 = vunpack.c.l.bf16 %v2207
      %v2226 = vunpack.c.l.bf16 %v2208
      %v2227 = vunpack.c.l.bf16 %v2209
      %v2228 = vunpack.c.l.bf16 %v2210
      %v2229 = vunpack.c.l.bf16 %v2211
      %v2231 = vlaneseq
      %v2232 = vshrl.u32 %v2231, 7
      %v2233 = vsub.s32 0, %v2232
      %v2234 = vrot.slane %v2213, %v2233
      %v2236 = vmul.f32 %v2214, %v2234
      %v2237 = vmul.f32 %v2215, %v2234
      %v2238 = vmul.f32 %v2216, %v2234
      %v2239 = vmul.f32 %v2217, %v2234
      %v2240 = vmul.f32 %v2218, %v2234
      %v2241 = vmul.f32 %v2219, %v2234
      %v2242 = vmul.f32 %v2220, %v2234
      %v2243 = vmul.f32 %v2221, %v2234
      %v2244 = vmul.f32 %v2222, %v2234
      %v2245 = vmul.f32 %v2223, %v2234
      %v2246 = vmul.f32 %v2224, %v2234
      %v2247 = vmul.f32 %v2225, %v2234
      %v2248 = vmul.f32 %v2226, %v2234
      %v2249 = vmul.f32 %v2227, %v2234
      %v2250 = vmul.f32 %v2228, %v2234
      %v2251 = vmul.f32 %v2229, %v2234
      %v2252 = vpack.c.bf16 %v2237, %v2236
      %v2253 = vpack.c.bf16 %v2239, %v2238
      %v2254 = vpack.c.bf16 %v2241, %v2240
      %v2255 = vpack.c.bf16 %v2243, %v2242
      %v2256 = vpack.c.bf16 %v2245, %v2244
      %v2257 = vpack.c.bf16 %v2247, %v2246
      %v2258 = vpack.c.bf16 %v2249, %v2248
      %v2259 = vpack.c.bf16 %v2251, %v2250
      %v2260 = vpack.c.bf16 %v2165, %v2163
      %v2261 = vpack.c.bf16 %v2166, %v2164
      %v2262 = vpack.c.bf16 %v2169, %v2167
      %v2263 = vpack.c.bf16 %v2170, %v2168
      %v2264 = vpack.c.bf16 %v2173, %v2171
      %v2265 = vpack.c.bf16 %v2174, %v2172
      %v2266 = vpack.c.bf16 %v2177, %v2175
      %v2267 = vpack.c.bf16 %v2178, %v2176
      %v2268 = vpack.c.bf16 %v2181, %v2179
      %v2269 = vpack.c.bf16 %v2182, %v2180
      %v2270 = vpack.c.bf16 %v2185, %v2183
      %v2271 = vpack.c.bf16 %v2186, %v2184
      %v2272 = vpack.c.bf16 %v2189, %v2187
      %v2273 = vpack.c.bf16 %v2190, %v2188
      %v2274 = vpack.c.bf16 %v2193, %v2191
      %v2275 = vpack.c.bf16 %v2194, %v2192
      %s2276 = scalar_lea.vmem %s6, 128
      %v2277 = vld [vmem:[%s2276] sm:$0xff]
      %v2278 = vld [vmem:[%s2276 + $0x8] sm:$0xff]
      %v2279 = vld [vmem:[%s2276 + $0x10] sm:$0xff]
      %v2280 = vld [vmem:[%s2276 + $0x18] sm:$0xff]
      %v2281 = vld [vmem:[%s2276 + $0x20] sm:$0xff]
      %v2282 = vld [vmem:[%s2276 + $0x28] sm:$0xff]
      %v2283 = vld [vmem:[%s2276 + $0x30] sm:$0xff]
      %v2284 = vld [vmem:[%s2276 + $0x38] sm:$0xff]
      %v2285 = vld [vmem:[%s2276 + $0x40] sm:$0xff]
      %v2286 = vld [vmem:[%s2276 + $0x48] sm:$0xff]
      %v2287 = vld [vmem:[%s2276 + $0x50] sm:$0xff]
      %v2288 = vld [vmem:[%s2276 + $0x58] sm:$0xff]
      %v2289 = vld [vmem:[%s2276 + $0x60] sm:$0xff]
      %v2290 = vld [vmem:[%s2276 + $0x68] sm:$0xff]
      %v2291 = vld [vmem:[%s2276 + $0x70] sm:$0xff]
      %v2292 = vld [vmem:[%s2276 + $0x78] sm:$0xff]
      %2294 = vset.pattern.permute.xlu0 0
      %2295 = vperm.xlu0 %2294, %v2277
      %v2296 = vpop.permute.xlu0 %2295
      %2299 = vset.pattern.permute.xlu0 0
      %2300 = vperm.xlu0 %2299, %v2278
      %v2301 = vpop.permute.xlu0 %2300
      %2304 = vset.pattern.permute.xlu0 0
      %2305 = vperm.xlu0 %2304, %v2279
      %v2306 = vpop.permute.xlu0 %2305
      %2309 = vset.pattern.permute.xlu0 0
      %2310 = vperm.xlu0 %2309, %v2280
      %v2311 = vpop.permute.xlu0 %2310
      %2314 = vset.pattern.permute.xlu0 0
      %2315 = vperm.xlu0 %2314, %v2281
      %v2316 = vpop.permute.xlu0 %2315
      %2319 = vset.pattern.permute.xlu0 0
      %2320 = vperm.xlu0 %2319, %v2282
      %v2321 = vpop.permute.xlu0 %2320
      %2324 = vset.pattern.permute.xlu0 0
      %2325 = vperm.xlu0 %2324, %v2283
      %v2326 = vpop.permute.xlu0 %2325
      %2329 = vset.pattern.permute.xlu0 0
      %2330 = vperm.xlu0 %2329, %v2284
      %v2331 = vpop.permute.xlu0 %2330
      %2334 = vset.pattern.permute.xlu0 0
      %2335 = vperm.xlu0 %2334, %v2285
      %v2336 = vpop.permute.xlu0 %2335
      %2339 = vset.pattern.permute.xlu0 0
      %2340 = vperm.xlu0 %2339, %v2286
      %v2341 = vpop.permute.xlu0 %2340
      %2344 = vset.pattern.permute.xlu0 0
      %2345 = vperm.xlu0 %2344, %v2287
      %v2346 = vpop.permute.xlu0 %2345
      %2349 = vset.pattern.permute.xlu0 0
      %2350 = vperm.xlu0 %2349, %v2288
      %v2351 = vpop.permute.xlu0 %2350
      %2354 = vset.pattern.permute.xlu0 0
      %2355 = vperm.xlu0 %2354, %v2289
      %v2356 = vpop.permute.xlu0 %2355
      %2359 = vset.pattern.permute.xlu0 0
      %2360 = vperm.xlu0 %2359, %v2290
      %v2361 = vpop.permute.xlu0 %2360
      %2364 = vset.pattern.permute.xlu0 0
      %2365 = vperm.xlu0 %2364, %v2291
      %v2366 = vpop.permute.xlu0 %2365
      %2369 = vset.pattern.permute.xlu0 0
      %2370 = vperm.xlu0 %2369, %v2292
      %v2371 = vpop.permute.xlu0 %2370
      %2373 = vmatprep.subr.bf16.mxu0 %v2275
      %2374 = vmatpush1.bf16.msra.mxu0 %v2274
      %2375 = vmatprep.subr.bf16.mxu0 %v2273
      %2376 = vmatpush1.bf16.msra.mxu0 %v2272
      %2377 = vmatprep.subr.bf16.mxu0 %v2271
      %2378 = vmatpush1.bf16.msra.mxu0 %v2270
      %2379 = vmatprep.subr.bf16.mxu0 %v2269
      %2380 = vmatpush1.bf16.msra.mxu0 %v2268
      %2381 = vmatprep.subr.bf16.mxu0 %v2267
      %2382 = vmatpush1.bf16.msra.mxu0 %v2266
      %2383 = vmatprep.subr.bf16.mxu0 %v2265
      %2384 = vmatpush1.bf16.msra.mxu0 %v2264
      %2385 = vmatprep.subr.bf16.mxu0 %v2263
      %2386 = vmatpush1.bf16.msra.mxu0 %v2262
      %2387 = vmatprep.subr.bf16.mxu0 %v2261
      %2388 = vmatpush1.bf16.msra.mxu0 %v2260
      %2389 = vmatprep.subr.bf16.mxu0 0
      %2390 = vmatpush2.bf16.msra.mxu0 0
      %2391 = vmatprep.subr.bf16.mxu0 0
      %2392 = vmatpush2.bf16.msra.mxu0 0
      %2393 = vmatprep.subr.bf16.mxu0 0
      %2394 = vmatpush2.bf16.msra.mxu0 0
      %2395 = vmatprep.subr.bf16.mxu0 0
      %2396 = vmatpush2.bf16.msra.mxu0 0
      %2397 = vmatprep.subr.bf16.mxu0 0
      %2398 = vmatpush2.bf16.msra.mxu0 0
      %2399 = vmatprep.subr.bf16.mxu0 0
      %2400 = vmatpush2.bf16.msra.mxu0 0
      %2401 = vmatprep.subr.bf16.mxu0 0
      %2402 = vmatpush2.bf16.msra.mxu0 0
      %2403 = vmatprep.subr.bf16.mxu0 0
      %2404 = vmatpush2.bf16.msra.mxu0 0
      %2405 = vmatprep.mubr.bf16.mxu0 0
      %2406 = vmatmul.mubr.bf16.gmra.mxu0 %v2252
      %v2407 = vpop.f32.mrf.mxu0
      %v2408 = vadd.f32 %v2296, %v2407
      %v2409 = vpop.f32.mrf.mxu0
      %v2410 = vadd.f32 %v2296, %v2409
      %v2411 = vpop.f32.mrf.mxu0
      %v2412 = vadd.f32 %v2301, %v2411
      %v2413 = vpop.f32.mrf.mxu0
      %v2414 = vadd.f32 %v2301, %v2413
      %2415 = vmatprep.mubr.bf16.mxu0 0
      %2416 = vmatmul.mubr.bf16.gmra.mxu0 %v2253
      %v2417 = vpop.f32.mrf.mxu0
      %v2418 = vadd.f32 %v2306, %v2417
      %v2419 = vpop.f32.mrf.mxu0
      %v2420 = vadd.f32 %v2306, %v2419
      %v2421 = vpop.f32.mrf.mxu0
      %v2422 = vadd.f32 %v2311, %v2421
      %v2423 = vpop.f32.mrf.mxu0
      %v2424 = vadd.f32 %v2311, %v2423
      %2425 = vmatprep.mubr.bf16.mxu0 0
      %2426 = vmatmul.mubr.bf16.gmra.mxu0 %v2254
      %v2427 = vpop.f32.mrf.mxu0
      %v2428 = vadd.f32 %v2316, %v2427
      %v2429 = vpop.f32.mrf.mxu0
      %v2430 = vadd.f32 %v2316, %v2429
      %v2431 = vpop.f32.mrf.mxu0
      %v2432 = vadd.f32 %v2321, %v2431
      %v2433 = vpop.f32.mrf.mxu0
      %v2434 = vadd.f32 %v2321, %v2433
      %2435 = vmatprep.mubr.bf16.mxu0 0
      %2436 = vmatmul.mubr.bf16.gmra.mxu0 %v2255
      %v2437 = vpop.f32.mrf.mxu0
      %v2438 = vadd.f32 %v2326, %v2437
      %v2439 = vpop.f32.mrf.mxu0
      %v2440 = vadd.f32 %v2326, %v2439
      %v2441 = vpop.f32.mrf.mxu0
      %v2442 = vadd.f32 %v2331, %v2441
      %v2443 = vpop.f32.mrf.mxu0
      %v2444 = vadd.f32 %v2331, %v2443
      %2445 = vmatprep.mubr.bf16.mxu0 0
      %2446 = vmatmul.mubr.bf16.gmra.mxu0 %v2256
      %v2447 = vpop.f32.mrf.mxu0
      %v2448 = vadd.f32 %v2336, %v2447
      %v2449 = vpop.f32.mrf.mxu0
      %v2450 = vadd.f32 %v2336, %v2449
      %v2451 = vpop.f32.mrf.mxu0
      %v2452 = vadd.f32 %v2341, %v2451
      %v2453 = vpop.f32.mrf.mxu0
      %v2454 = vadd.f32 %v2341, %v2453
      %2455 = vmatprep.mubr.bf16.mxu0 0
      %2456 = vmatmul.mubr.bf16.gmra.mxu0 %v2257
      %v2457 = vpop.f32.mrf.mxu0
      %v2458 = vadd.f32 %v2346, %v2457
      %v2459 = vpop.f32.mrf.mxu0
      %v2460 = vadd.f32 %v2346, %v2459
      %v2461 = vpop.f32.mrf.mxu0
      %v2462 = vadd.f32 %v2351, %v2461
      %v2463 = vpop.f32.mrf.mxu0
      %v2464 = vadd.f32 %v2351, %v2463
      %2465 = vmatprep.mubr.bf16.mxu0 0
      %2466 = vmatmul.mubr.bf16.gmra.mxu0 %v2258
      %v2467 = vpop.f32.mrf.mxu0
      %v2468 = vadd.f32 %v2356, %v2467
      %v2469 = vpop.f32.mrf.mxu0
      %v2470 = vadd.f32 %v2356, %v2469
      %v2471 = vpop.f32.mrf.mxu0
      %v2472 = vadd.f32 %v2361, %v2471
      %v2473 = vpop.f32.mrf.mxu0
      %v2474 = vadd.f32 %v2361, %v2473
      %2475 = vmatprep.mubr.bf16.mxu0 0
      %2476 = vmatmul.mubr.bf16.gmra.mxu0 %v2259
      %v2477 = vpop.f32.mrf.mxu0
      %v2478 = vadd.f32 %v2366, %v2477
      %v2479 = vpop.f32.mrf.mxu0
      %v2480 = vadd.f32 %v2366, %v2479
      %v2481 = vpop.f32.mrf.mxu0
      %v2482 = vadd.f32 %v2371, %v2481
      %v2483 = vpop.f32.mrf.mxu0
      %v2484 = vadd.f32 %v2371, %v2483
      %2485 = vdwg.mxu0
      %v2486 = vmul.f32 %v2408, 0.2
      %v2487 = vmul.f32 %v2410, 0.2
      %v2488 = vmul.f32 %v2412, 0.2
      %v2489 = vmul.f32 %v2414, 0.2
      %v2490 = vmul.f32 %v2418, 0.2
      %v2491 = vmul.f32 %v2420, 0.2
      %v2492 = vmul.f32 %v2422, 0.2
      %v2493 = vmul.f32 %v2424, 0.2
      %v2494 = vmul.f32 %v2428, 0.2
      %v2495 = vmul.f32 %v2430, 0.2
      %v2496 = vmul.f32 %v2432, 0.2
      %v2497 = vmul.f32 %v2434, 0.2
      %v2498 = vmul.f32 %v2438, 0.2
      %v2499 = vmul.f32 %v2440, 0.2
      %v2500 = vmul.f32 %v2442, 0.2
      %v2501 = vmul.f32 %v2444, 0.2
      %v2502 = vmul.f32 %v2448, 0.2
      %v2503 = vmul.f32 %v2450, 0.2
      %v2504 = vmul.f32 %v2452, 0.2
      %v2505 = vmul.f32 %v2454, 0.2
      %v2506 = vmul.f32 %v2458, 0.2
      %v2507 = vmul.f32 %v2460, 0.2
      %v2508 = vmul.f32 %v2462, 0.2
      %v2509 = vmul.f32 %v2464, 0.2
      %v2510 = vmul.f32 %v2468, 0.2
      %v2511 = vmul.f32 %v2470, 0.2
      %v2512 = vmul.f32 %v2472, 0.2
      %v2513 = vmul.f32 %v2474, 0.2
      %v2514 = vmul.f32 %v2478, 0.2
      %v2515 = vmul.f32 %v2480, 0.2
      %v2516 = vmul.f32 %v2482, 0.2
      %v2517 = vmul.f32 %v2484, 0.2
      %v2518 = vmax.f32 %v2408, %v2486
      %v2519 = vmax.f32 %v2410, %v2487
      %v2520 = vmax.f32 %v2412, %v2488
      %v2521 = vmax.f32 %v2414, %v2489
      %v2522 = vmax.f32 %v2418, %v2490
      %v2523 = vmax.f32 %v2420, %v2491
      %v2524 = vmax.f32 %v2422, %v2492
      %v2525 = vmax.f32 %v2424, %v2493
      %v2526 = vmax.f32 %v2428, %v2494
      %v2527 = vmax.f32 %v2430, %v2495
      %v2528 = vmax.f32 %v2432, %v2496
      %v2529 = vmax.f32 %v2434, %v2497
      %v2530 = vmax.f32 %v2438, %v2498
      %v2531 = vmax.f32 %v2440, %v2499
      %v2532 = vmax.f32 %v2442, %v2500
      %v2533 = vmax.f32 %v2444, %v2501
      %v2534 = vmax.f32 %v2448, %v2502
      %v2535 = vmax.f32 %v2450, %v2503
      %v2536 = vmax.f32 %v2452, %v2504
      %v2537 = vmax.f32 %v2454, %v2505
      %v2538 = vmax.f32 %v2458, %v2506
      %v2539 = vmax.f32 %v2460, %v2507
      %v2540 = vmax.f32 %v2462, %v2508
      %v2541 = vmax.f32 %v2464, %v2509
      %v2542 = vmax.f32 %v2468, %v2510
      %v2543 = vmax.f32 %v2470, %v2511
      %v2544 = vmax.f32 %v2472, %v2512
      %v2545 = vmax.f32 %v2474, %v2513
      %v2546 = vmax.f32 %v2478, %v2514
      %v2547 = vmax.f32 %v2480, %v2515
      %v2548 = vmax.f32 %v2482, %v2516
      %v2549 = vmax.f32 %v2484, %v2517
      %s2550 = scalar_lea.vmem %s8, 2
      %v2551 = vld [vmem:[%s2550] sm:$0x3]
      %s2552 = scalar_lea.vmem %s425, 1
      %v2553 = vld [vmem:[%s2552] sm:$0x1]
      %v2554 = vunpack.c.l.bf16 %v2551
      %v2556 = vlaneseq
      %v2557 = vshrl.u32 %v2556, 7
      %v2558 = vsub.s32 0, %v2557
      %v2559 = vrot.slane %v2553, %v2558
      %v2561 = vmul.f32 %v2554, %v2559
      %v2562 = vpack.c.bf16 %v2561, %v2561
      %v2563 = vpack.c.bf16 %v2520, %v2518
      %v2564 = vpack.c.bf16 %v2521, %v2519
      %v2565 = vpack.c.bf16 %v2524, %v2522
      %v2566 = vpack.c.bf16 %v2525, %v2523
      %v2567 = vpack.c.bf16 %v2528, %v2526
      %v2568 = vpack.c.bf16 %v2529, %v2527
      %v2569 = vpack.c.bf16 %v2532, %v2530
      %v2570 = vpack.c.bf16 %v2533, %v2531
      %v2571 = vpack.c.bf16 %v2536, %v2534
      %v2572 = vpack.c.bf16 %v2537, %v2535
      %v2573 = vpack.c.bf16 %v2540, %v2538
      %v2574 = vpack.c.bf16 %v2541, %v2539
      %v2575 = vpack.c.bf16 %v2544, %v2542
      %v2576 = vpack.c.bf16 %v2545, %v2543
      %v2577 = vpack.c.bf16 %v2548, %v2546
      %v2578 = vpack.c.bf16 %v2549, %v2547
      %2579 = vmatprep.subr.bf16.mxu0 %v2578
      %2580 = vmatpush1.bf16.msra.mxu0 %v2577
      %2581 = vmatprep.subr.bf16.mxu0 %v2576
      %2582 = vmatpush1.bf16.msra.mxu0 %v2575
      %2583 = vmatprep.subr.bf16.mxu0 %v2574
      %2584 = vmatpush1.bf16.msra.mxu0 %v2573
      %2585 = vmatprep.subr.bf16.mxu0 %v2572
      %2586 = vmatpush1.bf16.msra.mxu0 %v2571
      %2587 = vmatprep.subr.bf16.mxu0 %v2570
      %2588 = vmatpush1.bf16.msra.mxu0 %v2569
      %2589 = vmatprep.subr.bf16.mxu0 %v2568
      %2590 = vmatpush1.bf16.msra.mxu0 %v2567
      %2591 = vmatprep.subr.bf16.mxu0 %v2566
      %2592 = vmatpush1.bf16.msra.mxu0 %v2565
      %2593 = vmatprep.subr.bf16.mxu0 %v2564
      %2594 = vmatpush1.bf16.msra.mxu0 %v2563
      %2595 = vmatprep.subr.bf16.mxu0 0
      %2596 = vmatpush2.bf16.msra.mxu0 0
      %2597 = vmatprep.subr.bf16.mxu0 0
      %2598 = vmatpush2.bf16.msra.mxu0 0
      %2599 = vmatprep.subr.bf16.mxu0 0
      %2600 = vmatpush2.bf16.msra.mxu0 0
      %2601 = vmatprep.subr.bf16.mxu0 0
      %2602 = vmatpush2.bf16.msra.mxu0 0
      %2603 = vmatprep.subr.bf16.mxu0 0
      %2604 = vmatpush2.bf16.msra.mxu0 0
      %2605 = vmatprep.subr.bf16.mxu0 0
      %2606 = vmatpush2.bf16.msra.mxu0 0
      %2607 = vmatprep.subr.bf16.mxu0 0
      %2608 = vmatpush2.bf16.msra.mxu0 0
      %2609 = vmatprep.subr.bf16.mxu0 0
      %2610 = vmatpush2.bf16.msra.mxu0 0
      %2611 = vmatprep.mubr.bf16.mxu0 0
      %2612 = vmatmul.mubr.bf16.gmra.mxu0 %v2562
      %v2613 = vpop.f32.mrf.mxu0
      %v2614 = vadd.f32 0.0, %v2613
      %v2615 = vpop.f32.mrf.mxu0
      %v2616 = vadd.f32 0.0, %v2615
      %v2617 = vpop.f32.mrf.mxu0
      %v2618 = vpop.f32.mrf.mxu0
      %2619 = vdwg.mxu0
      %2620 = vmatprep.subr.bf16.mxu0 %v1858
      %2621 = vmatpush1.bf16.msra.mxu0 %v1857
      %2622 = vmatprep.subr.bf16.mxu0 %v1856
      %2623 = vmatpush1.bf16.msra.mxu0 %v1855
      %2624 = vmatprep.subr.bf16.mxu0 %v1854
      %2625 = vmatpush1.bf16.msra.mxu0 %v1853
      %2626 = vmatprep.subr.bf16.mxu0 %v1852
      %2627 = vmatpush1.bf16.msra.mxu0 %v1851
      %2628 = vmatprep.subr.bf16.mxu0 %v1850
      %2629 = vmatpush1.bf16.msra.mxu0 %v1849
      %2630 = vmatprep.subr.bf16.mxu0 %v1848
      %2631 = vmatpush1.bf16.msra.mxu0 %v1847
      %2632 = vmatprep.subr.bf16.mxu0 %v1846
      %2633 = vmatpush1.bf16.msra.mxu0 %v1845
      %2634 = vmatprep.subr.bf16.mxu0 %v1844
      %2635 = vmatpush1.bf16.msra.mxu0 %v1843
      %2636 = vmatprep.subr.bf16.mxu0 0
      %2637 = vmatpush2.bf16.msra.mxu0 0
      %2638 = vmatprep.subr.bf16.mxu0 0
      %2639 = vmatpush2.bf16.msra.mxu0 0
      %2640 = vmatprep.subr.bf16.mxu0 0
      %2641 = vmatpush2.bf16.msra.mxu0 0
      %2642 = vmatprep.subr.bf16.mxu0 0
      %2643 = vmatpush2.bf16.msra.mxu0 0
      %2644 = vmatprep.subr.bf16.mxu0 0
      %2645 = vmatpush2.bf16.msra.mxu0 0
      %2646 = vmatprep.subr.bf16.mxu0 0
      %2647 = vmatpush2.bf16.msra.mxu0 0
      %2648 = vmatprep.subr.bf16.mxu0 0
      %2649 = vmatpush2.bf16.msra.mxu0 0
      %2650 = vmatprep.subr.bf16.mxu0 0
      %2651 = vmatpush2.bf16.msra.mxu0 0
      %2652 = vmatprep.mubr.bf16.mxu0 0
      %2653 = vmatmul.mubr.bf16.gmra.mxu0 %v1842
      %v2654 = vpop.f32.mrf.mxu0
      %v2655 = vadd.f32 %v2614, %v2654
      %v2656 = vpop.f32.mrf.mxu0
      %v2657 = vadd.f32 %v2616, %v2656
      %v2658 = vpop.f32.mrf.mxu0
      %v2659 = vpop.f32.mrf.mxu0
      %2660 = vdwg.mxu0
      %s2661 = scalar_lea.vmem %s5, 128
      %v2662 = vld [vmem:[%s2661] sm:$0xf]
      %v2663 = vld [vmem:[%s2661 + $0x4] sm:$0xf]
      %v2664 = vld [vmem:[%s2661 + $0x8] sm:$0xf]
      %v2665 = vld [vmem:[%s2661 + $0xc] sm:$0xf]
      %v2666 = vld [vmem:[%s2661 + $0x10] sm:$0xf]
      %v2667 = vld [vmem:[%s2661 + $0x14] sm:$0xf]
      %v2668 = vld [vmem:[%s2661 + $0x18] sm:$0xf]
      %v2669 = vld [vmem:[%s2661 + $0x1c] sm:$0xf]
      %v2670 = vld [vmem:[%s2661 + $0x20] sm:$0xf]
      %v2671 = vld [vmem:[%s2661 + $0x24] sm:$0xf]
      %v2672 = vld [vmem:[%s2661 + $0x28] sm:$0xf]
      %v2673 = vld [vmem:[%s2661 + $0x2c] sm:$0xf]
      %v2674 = vld [vmem:[%s2661 + $0x30] sm:$0xf]
      %v2675 = vld [vmem:[%s2661 + $0x34] sm:$0xf]
      %v2676 = vld [vmem:[%s2661 + $0x38] sm:$0xf]
      %v2677 = vld [vmem:[%s2661 + $0x3c] sm:$0xf]
      %s2678 = scalar_lea.vmem %s421, 2
      %v2679 = vld [vmem:[%s2678] sm:$0x1]
      %v2680 = vunpack.c.l.bf16 %v2662
      %v2681 = vunpack.c.l.bf16 %v2663
      %v2682 = vunpack.c.l.bf16 %v2664
      %v2683 = vunpack.c.l.bf16 %v2665
      %v2684 = vunpack.c.l.bf16 %v2666
      %v2685 = vunpack.c.l.bf16 %v2667
      %v2686 = vunpack.c.l.bf16 %v2668
      %v2687 = vunpack.c.l.bf16 %v2669
      %v2688 = vunpack.c.l.bf16 %v2670
      %v2689 = vunpack.c.l.bf16 %v2671
      %v2690 = vunpack.c.l.bf16 %v2672
      %v2691 = vunpack.c.l.bf16 %v2673
      %v2692 = vunpack.c.l.bf16 %v2674
      %v2693 = vunpack.c.l.bf16 %v2675
      %v2694 = vunpack.c.l.bf16 %v2676
      %v2695 = vunpack.c.l.bf16 %v2677
      %v2697 = vlaneseq
      %v2698 = vshrl.u32 %v2697, 7
      %v2699 = vsub.s32 0, %v2698
      %v2700 = vrot.slane %v2679, %v2699
      %v2702 = vmul.f32 %v2680, %v2700
      %v2703 = vmul.f32 %v2681, %v2700
      %v2704 = vmul.f32 %v2682, %v2700
      %v2705 = vmul.f32 %v2683, %v2700
      %v2706 = vmul.f32 %v2684, %v2700
      %v2707 = vmul.f32 %v2685, %v2700
      %v2708 = vmul.f32 %v2686, %v2700
      %v2709 = vmul.f32 %v2687, %v2700
      %v2710 = vmul.f32 %v2688, %v2700
      %v2711 = vmul.f32 %v2689, %v2700
      %v2712 = vmul.f32 %v2690, %v2700
      %v2713 = vmul.f32 %v2691, %v2700
      %v2714 = vmul.f32 %v2692, %v2700
      %v2715 = vmul.f32 %v2693, %v2700
      %v2716 = vmul.f32 %v2694, %v2700
      %v2717 = vmul.f32 %v2695, %v2700
      %v2718 = vpack.c.bf16 %v2703, %v2702
      %v2719 = vpack.c.bf16 %v2705, %v2704
      %v2720 = vpack.c.bf16 %v2707, %v2706
      %v2721 = vpack.c.bf16 %v2709, %v2708
      %v2722 = vpack.c.bf16 %v2711, %v2710
      %v2723 = vpack.c.bf16 %v2713, %v2712
      %v2724 = vpack.c.bf16 %v2715, %v2714
      %v2725 = vpack.c.bf16 %v2717, %v2716
      %s2726 = scalar_lea.vmem %s6, 256
      %v2727 = vld [vmem:[%s2726] sm:$0xff]
      %v2728 = vld [vmem:[%s2726 + $0x8] sm:$0xff]
      %v2729 = vld [vmem:[%s2726 + $0x10] sm:$0xff]
      %v2730 = vld [vmem:[%s2726 + $0x18] sm:$0xff]
      %v2731 = vld [vmem:[%s2726 + $0x20] sm:$0xff]
      %v2732 = vld [vmem:[%s2726 + $0x28] sm:$0xff]
      %v2733 = vld [vmem:[%s2726 + $0x30] sm:$0xff]
      %v2734 = vld [vmem:[%s2726 + $0x38] sm:$0xff]
      %v2735 = vld [vmem:[%s2726 + $0x40] sm:$0xff]
      %v2736 = vld [vmem:[%s2726 + $0x48] sm:$0xff]
      %v2737 = vld [vmem:[%s2726 + $0x50] sm:$0xff]
      %v2738 = vld [vmem:[%s2726 + $0x58] sm:$0xff]
      %v2739 = vld [vmem:[%s2726 + $0x60] sm:$0xff]
      %v2740 = vld [vmem:[%s2726 + $0x68] sm:$0xff]
      %v2741 = vld [vmem:[%s2726 + $0x70] sm:$0xff]
      %v2742 = vld [vmem:[%s2726 + $0x78] sm:$0xff]
      %2744 = vset.pattern.permute.xlu0 0
      %2745 = vperm.xlu0 %2744, %v2727
      %v2746 = vpop.permute.xlu0 %2745
      %2749 = vset.pattern.permute.xlu0 0
      %2750 = vperm.xlu0 %2749, %v2728
      %v2751 = vpop.permute.xlu0 %2750
      %2754 = vset.pattern.permute.xlu0 0
      %2755 = vperm.xlu0 %2754, %v2729
      %v2756 = vpop.permute.xlu0 %2755
      %2759 = vset.pattern.permute.xlu0 0
      %2760 = vperm.xlu0 %2759, %v2730
      %v2761 = vpop.permute.xlu0 %2760
      %2764 = vset.pattern.permute.xlu0 0
      %2765 = vperm.xlu0 %2764, %v2731
      %v2766 = vpop.permute.xlu0 %2765
      %2769 = vset.pattern.permute.xlu0 0
      %2770 = vperm.xlu0 %2769, %v2732
      %v2771 = vpop.permute.xlu0 %2770
      %2774 = vset.pattern.permute.xlu0 0
      %2775 = vperm.xlu0 %2774, %v2733
      %v2776 = vpop.permute.xlu0 %2775
      %2779 = vset.pattern.permute.xlu0 0
      %2780 = vperm.xlu0 %2779, %v2734
      %v2781 = vpop.permute.xlu0 %2780
      %2784 = vset.pattern.permute.xlu0 0
      %2785 = vperm.xlu0 %2784, %v2735
      %v2786 = vpop.permute.xlu0 %2785
      %2789 = vset.pattern.permute.xlu0 0
      %2790 = vperm.xlu0 %2789, %v2736
      %v2791 = vpop.permute.xlu0 %2790
      %2794 = vset.pattern.permute.xlu0 0
      %2795 = vperm.xlu0 %2794, %v2737
      %v2796 = vpop.permute.xlu0 %2795
      %2799 = vset.pattern.permute.xlu0 0
      %2800 = vperm.xlu0 %2799, %v2738
      %v2801 = vpop.permute.xlu0 %2800
      %2804 = vset.pattern.permute.xlu0 0
      %2805 = vperm.xlu0 %2804, %v2739
      %v2806 = vpop.permute.xlu0 %2805
      %2809 = vset.pattern.permute.xlu0 0
      %2810 = vperm.xlu0 %2809, %v2740
      %v2811 = vpop.permute.xlu0 %2810
      %2814 = vset.pattern.permute.xlu0 0
      %2815 = vperm.xlu0 %2814, %v2741
      %v2816 = vpop.permute.xlu0 %2815
      %2819 = vset.pattern.permute.xlu0 0
      %2820 = vperm.xlu0 %2819, %v2742
      %v2821 = vpop.permute.xlu0 %2820
      %2823 = vmatprep.subr.bf16.mxu0 %v2578
      %2824 = vmatpush1.bf16.msra.mxu0 %v2577
      %2825 = vmatprep.subr.bf16.mxu0 %v2576
      %2826 = vmatpush1.bf16.msra.mxu0 %v2575
      %2827 = vmatprep.subr.bf16.mxu0 %v2574
      %2828 = vmatpush1.bf16.msra.mxu0 %v2573
      %2829 = vmatprep.subr.bf16.mxu0 %v2572
      %2830 = vmatpush1.bf16.msra.mxu0 %v2571
      %2831 = vmatprep.subr.bf16.mxu0 %v2570
      %2832 = vmatpush1.bf16.msra.mxu0 %v2569
      %2833 = vmatprep.subr.bf16.mxu0 %v2568
      %2834 = vmatpush1.bf16.msra.mxu0 %v2567
      %2835 = vmatprep.subr.bf16.mxu0 %v2566
      %2836 = vmatpush1.bf16.msra.mxu0 %v2565
      %2837 = vmatprep.subr.bf16.mxu0 %v2564
      %2838 = vmatpush1.bf16.msra.mxu0 %v2563
      %2839 = vmatprep.subr.bf16.mxu0 0
      %2840 = vmatpush2.bf16.msra.mxu0 0
      %2841 = vmatprep.subr.bf16.mxu0 0
      %2842 = vmatpush2.bf16.msra.mxu0 0
      %2843 = vmatprep.subr.bf16.mxu0 0
      %2844 = vmatpush2.bf16.msra.mxu0 0
      %2845 = vmatprep.subr.bf16.mxu0 0
      %2846 = vmatpush2.bf16.msra.mxu0 0
      %2847 = vmatprep.subr.bf16.mxu0 0
      %2848 = vmatpush2.bf16.msra.mxu0 0
      %2849 = vmatprep.subr.bf16.mxu0 0
      %2850 = vmatpush2.bf16.msra.mxu0 0
      %2851 = vmatprep.subr.bf16.mxu0 0
      %2852 = vmatpush2.bf16.msra.mxu0 0
      %2853 = vmatprep.subr.bf16.mxu0 0
      %2854 = vmatpush2.bf16.msra.mxu0 0
      %2855 = vmatprep.mubr.bf16.mxu0 0
      %2856 = vmatmul.mubr.bf16.gmra.mxu0 %v2718
      %v2857 = vpop.f32.mrf.mxu0
      %v2858 = vadd.f32 %v2746, %v2857
      %v2859 = vpop.f32.mrf.mxu0
      %v2860 = vadd.f32 %v2746, %v2859
      %v2861 = vpop.f32.mrf.mxu0
      %v2862 = vadd.f32 %v2751, %v2861
      %v2863 = vpop.f32.mrf.mxu0
      %v2864 = vadd.f32 %v2751, %v2863
      %2865 = vmatprep.mubr.bf16.mxu0 0
      %2866 = vmatmul.mubr.bf16.gmra.mxu0 %v2719
      %v2867 = vpop.f32.mrf.mxu0
      %v2868 = vadd.f32 %v2756, %v2867
      %v2869 = vpop.f32.mrf.mxu0
      %v2870 = vadd.f32 %v2756, %v2869
      %v2871 = vpop.f32.mrf.mxu0
      %v2872 = vadd.f32 %v2761, %v2871
      %v2873 = vpop.f32.mrf.mxu0
      %v2874 = vadd.f32 %v2761, %v2873
      %2875 = vmatprep.mubr.bf16.mxu0 0
      %2876 = vmatmul.mubr.bf16.gmra.mxu0 %v2720
      %v2877 = vpop.f32.mrf.mxu0
      %v2878 = vadd.f32 %v2766, %v2877
      %v2879 = vpop.f32.mrf.mxu0
      %v2880 = vadd.f32 %v2766, %v2879
      %v2881 = vpop.f32.mrf.mxu0
      %v2882 = vadd.f32 %v2771, %v2881
      %v2883 = vpop.f32.mrf.mxu0
      %v2884 = vadd.f32 %v2771, %v2883
      %2885 = vmatprep.mubr.bf16.mxu0 0
      %2886 = vmatmul.mubr.bf16.gmra.mxu0 %v2721
      %v2887 = vpop.f32.mrf.mxu0
      %v2888 = vadd.f32 %v2776, %v2887
      %v2889 = vpop.f32.mrf.mxu0
      %v2890 = vadd.f32 %v2776, %v2889
      %v2891 = vpop.f32.mrf.mxu0
      %v2892 = vadd.f32 %v2781, %v2891
      %v2893 = vpop.f32.mrf.mxu0
      %v2894 = vadd.f32 %v2781, %v2893
      %2895 = vmatprep.mubr.bf16.mxu0 0
      %2896 = vmatmul.mubr.bf16.gmra.mxu0 %v2722
      %v2897 = vpop.f32.mrf.mxu0
      %v2898 = vadd.f32 %v2786, %v2897
      %v2899 = vpop.f32.mrf.mxu0
      %v2900 = vadd.f32 %v2786, %v2899
      %v2901 = vpop.f32.mrf.mxu0
      %v2902 = vadd.f32 %v2791, %v2901
      %v2903 = vpop.f32.mrf.mxu0
      %v2904 = vadd.f32 %v2791, %v2903
      %2905 = vmatprep.mubr.bf16.mxu0 0
      %2906 = vmatmul.mubr.bf16.gmra.mxu0 %v2723
      %v2907 = vpop.f32.mrf.mxu0
      %v2908 = vadd.f32 %v2796, %v2907
      %v2909 = vpop.f32.mrf.mxu0
      %v2910 = vadd.f32 %v2796, %v2909
      %v2911 = vpop.f32.mrf.mxu0
      %v2912 = vadd.f32 %v2801, %v2911
      %v2913 = vpop.f32.mrf.mxu0
      %v2914 = vadd.f32 %v2801, %v2913
      %2915 = vmatprep.mubr.bf16.mxu0 0
      %2916 = vmatmul.mubr.bf16.gmra.mxu0 %v2724
      %v2917 = vpop.f32.mrf.mxu0
      %v2918 = vadd.f32 %v2806, %v2917
      %v2919 = vpop.f32.mrf.mxu0
      %v2920 = vadd.f32 %v2806, %v2919
      %v2921 = vpop.f32.mrf.mxu0
      %v2922 = vadd.f32 %v2811, %v2921
      %v2923 = vpop.f32.mrf.mxu0
      %v2924 = vadd.f32 %v2811, %v2923
      %2925 = vmatprep.mubr.bf16.mxu0 0
      %2926 = vmatmul.mubr.bf16.gmra.mxu0 %v2725
      %v2927 = vpop.f32.mrf.mxu0
      %v2928 = vadd.f32 %v2816, %v2927
      %v2929 = vpop.f32.mrf.mxu0
      %v2930 = vadd.f32 %v2816, %v2929
      %v2931 = vpop.f32.mrf.mxu0
      %v2932 = vadd.f32 %v2821, %v2931
      %v2933 = vpop.f32.mrf.mxu0
      %v2934 = vadd.f32 %v2821, %v2933
      %2935 = vdwg.mxu0
      %v2936 = vmul.f32 %v2858, 0.2
      %v2937 = vmul.f32 %v2860, 0.2
      %v2938 = vmul.f32 %v2862, 0.2
      %v2939 = vmul.f32 %v2864, 0.2
      %v2940 = vmul.f32 %v2868, 0.2
      %v2941 = vmul.f32 %v2870, 0.2
      %v2942 = vmul.f32 %v2872, 0.2
      %v2943 = vmul.f32 %v2874, 0.2
      %v2944 = vmul.f32 %v2878, 0.2
      %v2945 = vmul.f32 %v2880, 0.2
      %v2946 = vmul.f32 %v2882, 0.2
      %v2947 = vmul.f32 %v2884, 0.2
      %v2948 = vmul.f32 %v2888, 0.2
      %v2949 = vmul.f32 %v2890, 0.2
      %v2950 = vmul.f32 %v2892, 0.2
      %v2951 = vmul.f32 %v2894, 0.2
      %v2952 = vmul.f32 %v2898, 0.2
      %v2953 = vmul.f32 %v2900, 0.2
      %v2954 = vmul.f32 %v2902, 0.2
      %v2955 = vmul.f32 %v2904, 0.2
      %v2956 = vmul.f32 %v2908, 0.2
      %v2957 = vmul.f32 %v2910, 0.2
      %v2958 = vmul.f32 %v2912, 0.2
      %v2959 = vmul.f32 %v2914, 0.2
      %v2960 = vmul.f32 %v2918, 0.2
      %v2961 = vmul.f32 %v2920, 0.2
      %v2962 = vmul.f32 %v2922, 0.2
      %v2963 = vmul.f32 %v2924, 0.2
      %v2964 = vmul.f32 %v2928, 0.2
      %v2965 = vmul.f32 %v2930, 0.2
      %v2966 = vmul.f32 %v2932, 0.2
      %v2967 = vmul.f32 %v2934, 0.2
      %v2968 = vmax.f32 %v2858, %v2936
      %v2969 = vmax.f32 %v2860, %v2937
      %v2970 = vmax.f32 %v2862, %v2938
      %v2971 = vmax.f32 %v2864, %v2939
      %v2972 = vmax.f32 %v2868, %v2940
      %v2973 = vmax.f32 %v2870, %v2941
      %v2974 = vmax.f32 %v2872, %v2942
      %v2975 = vmax.f32 %v2874, %v2943
      %v2976 = vmax.f32 %v2878, %v2944
      %v2977 = vmax.f32 %v2880, %v2945
      %v2978 = vmax.f32 %v2882, %v2946
      %v2979 = vmax.f32 %v2884, %v2947
      %v2980 = vmax.f32 %v2888, %v2948
      %v2981 = vmax.f32 %v2890, %v2949
      %v2982 = vmax.f32 %v2892, %v2950
      %v2983 = vmax.f32 %v2894, %v2951
      %v2984 = vmax.f32 %v2898, %v2952
      %v2985 = vmax.f32 %v2900, %v2953
      %v2986 = vmax.f32 %v2902, %v2954
      %v2987 = vmax.f32 %v2904, %v2955
      %v2988 = vmax.f32 %v2908, %v2956
      %v2989 = vmax.f32 %v2910, %v2957
      %v2990 = vmax.f32 %v2912, %v2958
      %v2991 = vmax.f32 %v2914, %v2959
      %v2992 = vmax.f32 %v2918, %v2960
      %v2993 = vmax.f32 %v2920, %v2961
      %v2994 = vmax.f32 %v2922, %v2962
      %v2995 = vmax.f32 %v2924, %v2963
      %v2996 = vmax.f32 %v2928, %v2964
      %v2997 = vmax.f32 %v2930, %v2965
      %v2998 = vmax.f32 %v2932, %v2966
      %v2999 = vmax.f32 %v2934, %v2967
      %s3000 = scalar_lea.vmem %s5, 192
      %v3001 = vld [vmem:[%s3000] sm:$0xf]
      %v3002 = vld [vmem:[%s3000 + $0x4] sm:$0xf]
      %v3003 = vld [vmem:[%s3000 + $0x8] sm:$0xf]
      %v3004 = vld [vmem:[%s3000 + $0xc] sm:$0xf]
      %v3005 = vld [vmem:[%s3000 + $0x10] sm:$0xf]
      %v3006 = vld [vmem:[%s3000 + $0x14] sm:$0xf]
      %v3007 = vld [vmem:[%s3000 + $0x18] sm:$0xf]
      %v3008 = vld [vmem:[%s3000 + $0x1c] sm:$0xf]
      %v3009 = vld [vmem:[%s3000 + $0x20] sm:$0xf]
      %v3010 = vld [vmem:[%s3000 + $0x24] sm:$0xf]
      %v3011 = vld [vmem:[%s3000 + $0x28] sm:$0xf]
      %v3012 = vld [vmem:[%s3000 + $0x2c] sm:$0xf]
      %v3013 = vld [vmem:[%s3000 + $0x30] sm:$0xf]
      %v3014 = vld [vmem:[%s3000 + $0x34] sm:$0xf]
      %v3015 = vld [vmem:[%s3000 + $0x38] sm:$0xf]
      %v3016 = vld [vmem:[%s3000 + $0x3c] sm:$0xf]
      %s3017 = scalar_lea.vmem %s421, 3
      %v3018 = vld [vmem:[%s3017] sm:$0x1]
      %v3019 = vunpack.c.l.bf16 %v3001
      %v3020 = vunpack.c.l.bf16 %v3002
      %v3021 = vunpack.c.l.bf16 %v3003
      %v3022 = vunpack.c.l.bf16 %v3004
      %v3023 = vunpack.c.l.bf16 %v3005
      %v3024 = vunpack.c.l.bf16 %v3006
      %v3025 = vunpack.c.l.bf16 %v3007
      %v3026 = vunpack.c.l.bf16 %v3008
      %v3027 = vunpack.c.l.bf16 %v3009
      %v3028 = vunpack.c.l.bf16 %v3010
      %v3029 = vunpack.c.l.bf16 %v3011
      %v3030 = vunpack.c.l.bf16 %v3012
      %v3031 = vunpack.c.l.bf16 %v3013
      %v3032 = vunpack.c.l.bf16 %v3014
      %v3033 = vunpack.c.l.bf16 %v3015
      %v3034 = vunpack.c.l.bf16 %v3016
      %v3036 = vlaneseq
      %v3037 = vshrl.u32 %v3036, 7
      %v3038 = vsub.s32 0, %v3037
      %v3039 = vrot.slane %v3018, %v3038
      %v3041 = vmul.f32 %v3019, %v3039
      %v3042 = vmul.f32 %v3020, %v3039
      %v3043 = vmul.f32 %v3021, %v3039
      %v3044 = vmul.f32 %v3022, %v3039
      %v3045 = vmul.f32 %v3023, %v3039
      %v3046 = vmul.f32 %v3024, %v3039
      %v3047 = vmul.f32 %v3025, %v3039
      %v3048 = vmul.f32 %v3026, %v3039
      %v3049 = vmul.f32 %v3027, %v3039
      %v3050 = vmul.f32 %v3028, %v3039
      %v3051 = vmul.f32 %v3029, %v3039
      %v3052 = vmul.f32 %v3030, %v3039
      %v3053 = vmul.f32 %v3031, %v3039
      %v3054 = vmul.f32 %v3032, %v3039
      %v3055 = vmul.f32 %v3033, %v3039
      %v3056 = vmul.f32 %v3034, %v3039
      %v3057 = vpack.c.bf16 %v3042, %v3041
      %v3058 = vpack.c.bf16 %v3044, %v3043
      %v3059 = vpack.c.bf16 %v3046, %v3045
      %v3060 = vpack.c.bf16 %v3048, %v3047
      %v3061 = vpack.c.bf16 %v3050, %v3049
      %v3062 = vpack.c.bf16 %v3052, %v3051
      %v3063 = vpack.c.bf16 %v3054, %v3053
      %v3064 = vpack.c.bf16 %v3056, %v3055
      %v3065 = vpack.c.bf16 %v2970, %v2968
      %v3066 = vpack.c.bf16 %v2971, %v2969
      %v3067 = vpack.c.bf16 %v2974, %v2972
      %v3068 = vpack.c.bf16 %v2975, %v2973
      %v3069 = vpack.c.bf16 %v2978, %v2976
      %v3070 = vpack.c.bf16 %v2979, %v2977
      %v3071 = vpack.c.bf16 %v2982, %v2980
      %v3072 = vpack.c.bf16 %v2983, %v2981
      %v3073 = vpack.c.bf16 %v2986, %v2984
      %v3074 = vpack.c.bf16 %v2987, %v2985
      %v3075 = vpack.c.bf16 %v2990, %v2988
      %v3076 = vpack.c.bf16 %v2991, %v2989
      %v3077 = vpack.c.bf16 %v2994, %v2992
      %v3078 = vpack.c.bf16 %v2995, %v2993
      %v3079 = vpack.c.bf16 %v2998, %v2996
      %v3080 = vpack.c.bf16 %v2999, %v2997
      %s3081 = scalar_lea.vmem %s6, 384
      %v3082 = vld [vmem:[%s3081] sm:$0xff]
      %v3083 = vld [vmem:[%s3081 + $0x8] sm:$0xff]
      %v3084 = vld [vmem:[%s3081 + $0x10] sm:$0xff]
      %v3085 = vld [vmem:[%s3081 + $0x18] sm:$0xff]
      %v3086 = vld [vmem:[%s3081 + $0x20] sm:$0xff]
      %v3087 = vld [vmem:[%s3081 + $0x28] sm:$0xff]
      %v3088 = vld [vmem:[%s3081 + $0x30] sm:$0xff]
      %v3089 = vld [vmem:[%s3081 + $0x38] sm:$0xff]
      %v3090 = vld [vmem:[%s3081 + $0x40] sm:$0xff]
      %v3091 = vld [vmem:[%s3081 + $0x48] sm:$0xff]
      %v3092 = vld [vmem:[%s3081 + $0x50] sm:$0xff]
      %v3093 = vld [vmem:[%s3081 + $0x58] sm:$0xff]
      %v3094 = vld [vmem:[%s3081 + $0x60] sm:$0xff]
      %v3095 = vld [vmem:[%s3081 + $0x68] sm:$0xff]
      %v3096 = vld [vmem:[%s3081 + $0x70] sm:$0xff]
      %v3097 = vld [vmem:[%s3081 + $0x78] sm:$0xff]
      %3099 = vset.pattern.permute.xlu0 0
      %3100 = vperm.xlu0 %3099, %v3082
      %v3101 = vpop.permute.xlu0 %3100
      %3104 = vset.pattern.permute.xlu0 0
      %3105 = vperm.xlu0 %3104, %v3083
      %v3106 = vpop.permute.xlu0 %3105
      %3109 = vset.pattern.permute.xlu0 0
      %3110 = vperm.xlu0 %3109, %v3084
      %v3111 = vpop.permute.xlu0 %3110
      %3114 = vset.pattern.permute.xlu0 0
      %3115 = vperm.xlu0 %3114, %v3085
      %v3116 = vpop.permute.xlu0 %3115
      %3119 = vset.pattern.permute.xlu0 0
      %3120 = vperm.xlu0 %3119, %v3086
      %v3121 = vpop.permute.xlu0 %3120
      %3124 = vset.pattern.permute.xlu0 0
      %3125 = vperm.xlu0 %3124, %v3087
      %v3126 = vpop.permute.xlu0 %3125
      %3129 = vset.pattern.permute.xlu0 0
      %3130 = vperm.xlu0 %3129, %v3088
      %v3131 = vpop.permute.xlu0 %3130
      %3134 = vset.pattern.permute.xlu0 0
      %3135 = vperm.xlu0 %3134, %v3089
      %v3136 = vpop.permute.xlu0 %3135
      %3139 = vset.pattern.permute.xlu0 0
      %3140 = vperm.xlu0 %3139, %v3090
      %v3141 = vpop.permute.xlu0 %3140
      %3144 = vset.pattern.permute.xlu0 0
      %3145 = vperm.xlu0 %3144, %v3091
      %v3146 = vpop.permute.xlu0 %3145
      %3149 = vset.pattern.permute.xlu0 0
      %3150 = vperm.xlu0 %3149, %v3092
      %v3151 = vpop.permute.xlu0 %3150
      %3154 = vset.pattern.permute.xlu0 0
      %3155 = vperm.xlu0 %3154, %v3093
      %v3156 = vpop.permute.xlu0 %3155
      %3159 = vset.pattern.permute.xlu0 0
      %3160 = vperm.xlu0 %3159, %v3094
      %v3161 = vpop.permute.xlu0 %3160
      %3164 = vset.pattern.permute.xlu0 0
      %3165 = vperm.xlu0 %3164, %v3095
      %v3166 = vpop.permute.xlu0 %3165
      %3169 = vset.pattern.permute.xlu0 0
      %3170 = vperm.xlu0 %3169, %v3096
      %v3171 = vpop.permute.xlu0 %3170
      %3174 = vset.pattern.permute.xlu0 0
      %3175 = vperm.xlu0 %3174, %v3097
      %v3176 = vpop.permute.xlu0 %3175
      %3178 = vmatprep.subr.bf16.mxu0 %v3080
      %3179 = vmatpush1.bf16.msra.mxu0 %v3079
      %3180 = vmatprep.subr.bf16.mxu0 %v3078
      %3181 = vmatpush1.bf16.msra.mxu0 %v3077
      %3182 = vmatprep.subr.bf16.mxu0 %v3076
      %3183 = vmatpush1.bf16.msra.mxu0 %v3075
      %3184 = vmatprep.subr.bf16.mxu0 %v3074
      %3185 = vmatpush1.bf16.msra.mxu0 %v3073
      %3186 = vmatprep.subr.bf16.mxu0 %v3072
      %3187 = vmatpush1.bf16.msra.mxu0 %v3071
      %3188 = vmatprep.subr.bf16.mxu0 %v3070
      %3189 = vmatpush1.bf16.msra.mxu0 %v3069
      %3190 = vmatprep.subr.bf16.mxu0 %v3068
      %3191 = vmatpush1.bf16.msra.mxu0 %v3067
      %3192 = vmatprep.subr.bf16.mxu0 %v3066
      %3193 = vmatpush1.bf16.msra.mxu0 %v3065
      %3194 = vmatprep.subr.bf16.mxu0 0
      %3195 = vmatpush2.bf16.msra.mxu0 0
      %3196 = vmatprep.subr.bf16.mxu0 0
      %3197 = vmatpush2.bf16.msra.mxu0 0
      %3198 = vmatprep.subr.bf16.mxu0 0
      %3199 = vmatpush2.bf16.msra.mxu0 0
      %3200 = vmatprep.subr.bf16.mxu0 0
      %3201 = vmatpush2.bf16.msra.mxu0 0
      %3202 = vmatprep.subr.bf16.mxu0 0
      %3203 = vmatpush2.bf16.msra.mxu0 0
      %3204 = vmatprep.subr.bf16.mxu0 0
      %3205 = vmatpush2.bf16.msra.mxu0 0
      %3206 = vmatprep.subr.bf16.mxu0 0
      %3207 = vmatpush2.bf16.msra.mxu0 0
      %3208 = vmatprep.subr.bf16.mxu0 0
      %3209 = vmatpush2.bf16.msra.mxu0 0
      %3210 = vmatprep.mubr.bf16.mxu0 0
      %3211 = vmatmul.mubr.bf16.gmra.mxu0 %v3057
      %v3212 = vpop.f32.mrf.mxu0
      %v3213 = vadd.f32 %v3101, %v3212
      %v3214 = vpop.f32.mrf.mxu0
      %v3215 = vadd.f32 %v3101, %v3214
      %v3216 = vpop.f32.mrf.mxu0
      %v3217 = vadd.f32 %v3106, %v3216
      %v3218 = vpop.f32.mrf.mxu0
      %v3219 = vadd.f32 %v3106, %v3218
      %3220 = vmatprep.mubr.bf16.mxu0 0
      %3221 = vmatmul.mubr.bf16.gmra.mxu0 %v3058
      %v3222 = vpop.f32.mrf.mxu0
      %v3223 = vadd.f32 %v3111, %v3222
      %v3224 = vpop.f32.mrf.mxu0
      %v3225 = vadd.f32 %v3111, %v3224
      %v3226 = vpop.f32.mrf.mxu0
      %v3227 = vadd.f32 %v3116, %v3226
      %v3228 = vpop.f32.mrf.mxu0
      %v3229 = vadd.f32 %v3116, %v3228
      %3230 = vmatprep.mubr.bf16.mxu0 0
      %3231 = vmatmul.mubr.bf16.gmra.mxu0 %v3059
      %v3232 = vpop.f32.mrf.mxu0
      %v3233 = vadd.f32 %v3121, %v3232
      %v3234 = vpop.f32.mrf.mxu0
      %v3235 = vadd.f32 %v3121, %v3234
      %v3236 = vpop.f32.mrf.mxu0
      %v3237 = vadd.f32 %v3126, %v3236
      %v3238 = vpop.f32.mrf.mxu0
      %v3239 = vadd.f32 %v3126, %v3238
      %3240 = vmatprep.mubr.bf16.mxu0 0
      %3241 = vmatmul.mubr.bf16.gmra.mxu0 %v3060
      %v3242 = vpop.f32.mrf.mxu0
      %v3243 = vadd.f32 %v3131, %v3242
      %v3244 = vpop.f32.mrf.mxu0
      %v3245 = vadd.f32 %v3131, %v3244
      %v3246 = vpop.f32.mrf.mxu0
      %v3247 = vadd.f32 %v3136, %v3246
      %v3248 = vpop.f32.mrf.mxu0
      %v3249 = vadd.f32 %v3136, %v3248
      %3250 = vmatprep.mubr.bf16.mxu0 0
      %3251 = vmatmul.mubr.bf16.gmra.mxu0 %v3061
      %v3252 = vpop.f32.mrf.mxu0
      %v3253 = vadd.f32 %v3141, %v3252
      %v3254 = vpop.f32.mrf.mxu0
      %v3255 = vadd.f32 %v3141, %v3254
      %v3256 = vpop.f32.mrf.mxu0
      %v3257 = vadd.f32 %v3146, %v3256
      %v3258 = vpop.f32.mrf.mxu0
      %v3259 = vadd.f32 %v3146, %v3258
      %3260 = vmatprep.mubr.bf16.mxu0 0
      %3261 = vmatmul.mubr.bf16.gmra.mxu0 %v3062
      %v3262 = vpop.f32.mrf.mxu0
      %v3263 = vadd.f32 %v3151, %v3262
      %v3264 = vpop.f32.mrf.mxu0
      %v3265 = vadd.f32 %v3151, %v3264
      %v3266 = vpop.f32.mrf.mxu0
      %v3267 = vadd.f32 %v3156, %v3266
      %v3268 = vpop.f32.mrf.mxu0
      %v3269 = vadd.f32 %v3156, %v3268
      %3270 = vmatprep.mubr.bf16.mxu0 0
      %3271 = vmatmul.mubr.bf16.gmra.mxu0 %v3063
      %v3272 = vpop.f32.mrf.mxu0
      %v3273 = vadd.f32 %v3161, %v3272
      %v3274 = vpop.f32.mrf.mxu0
      %v3275 = vadd.f32 %v3161, %v3274
      %v3276 = vpop.f32.mrf.mxu0
      %v3277 = vadd.f32 %v3166, %v3276
      %v3278 = vpop.f32.mrf.mxu0
      %v3279 = vadd.f32 %v3166, %v3278
      %3280 = vmatprep.mubr.bf16.mxu0 0
      %3281 = vmatmul.mubr.bf16.gmra.mxu0 %v3064
      %v3282 = vpop.f32.mrf.mxu0
      %v3283 = vadd.f32 %v3171, %v3282
      %v3284 = vpop.f32.mrf.mxu0
      %v3285 = vadd.f32 %v3171, %v3284
      %v3286 = vpop.f32.mrf.mxu0
      %v3287 = vadd.f32 %v3176, %v3286
      %v3288 = vpop.f32.mrf.mxu0
      %v3289 = vadd.f32 %v3176, %v3288
      %3290 = vdwg.mxu0
      %v3291 = vmul.f32 %v3213, 0.2
      %v3292 = vmul.f32 %v3215, 0.2
      %v3293 = vmul.f32 %v3217, 0.2
      %v3294 = vmul.f32 %v3219, 0.2
      %v3295 = vmul.f32 %v3223, 0.2
      %v3296 = vmul.f32 %v3225, 0.2
      %v3297 = vmul.f32 %v3227, 0.2
      %v3298 = vmul.f32 %v3229, 0.2
      %v3299 = vmul.f32 %v3233, 0.2
      %v3300 = vmul.f32 %v3235, 0.2
      %v3301 = vmul.f32 %v3237, 0.2
      %v3302 = vmul.f32 %v3239, 0.2
      %v3303 = vmul.f32 %v3243, 0.2
      %v3304 = vmul.f32 %v3245, 0.2
      %v3305 = vmul.f32 %v3247, 0.2
      %v3306 = vmul.f32 %v3249, 0.2
      %v3307 = vmul.f32 %v3253, 0.2
      %v3308 = vmul.f32 %v3255, 0.2
      %v3309 = vmul.f32 %v3257, 0.2
      %v3310 = vmul.f32 %v3259, 0.2
      %v3311 = vmul.f32 %v3263, 0.2
      %v3312 = vmul.f32 %v3265, 0.2
      %v3313 = vmul.f32 %v3267, 0.2
      %v3314 = vmul.f32 %v3269, 0.2
      %v3315 = vmul.f32 %v3273, 0.2
      %v3316 = vmul.f32 %v3275, 0.2
      %v3317 = vmul.f32 %v3277, 0.2
      %v3318 = vmul.f32 %v3279, 0.2
      %v3319 = vmul.f32 %v3283, 0.2
      %v3320 = vmul.f32 %v3285, 0.2
      %v3321 = vmul.f32 %v3287, 0.2
      %v3322 = vmul.f32 %v3289, 0.2
      %v3323 = vmax.f32 %v3213, %v3291
      %v3324 = vmax.f32 %v3215, %v3292
      %v3325 = vmax.f32 %v3217, %v3293
      %v3326 = vmax.f32 %v3219, %v3294
      %v3327 = vmax.f32 %v3223, %v3295
      %v3328 = vmax.f32 %v3225, %v3296
      %v3329 = vmax.f32 %v3227, %v3297
      %v3330 = vmax.f32 %v3229, %v3298
      %v3331 = vmax.f32 %v3233, %v3299
      %v3332 = vmax.f32 %v3235, %v3300
      %v3333 = vmax.f32 %v3237, %v3301
      %v3334 = vmax.f32 %v3239, %v3302
      %v3335 = vmax.f32 %v3243, %v3303
      %v3336 = vmax.f32 %v3245, %v3304
      %v3337 = vmax.f32 %v3247, %v3305
      %v3338 = vmax.f32 %v3249, %v3306
      %v3339 = vmax.f32 %v3253, %v3307
      %v3340 = vmax.f32 %v3255, %v3308
      %v3341 = vmax.f32 %v3257, %v3309
      %v3342 = vmax.f32 %v3259, %v3310
      %v3343 = vmax.f32 %v3263, %v3311
      %v3344 = vmax.f32 %v3265, %v3312
      %v3345 = vmax.f32 %v3267, %v3313
      %v3346 = vmax.f32 %v3269, %v3314
      %v3347 = vmax.f32 %v3273, %v3315
      %v3348 = vmax.f32 %v3275, %v3316
      %v3349 = vmax.f32 %v3277, %v3317
      %v3350 = vmax.f32 %v3279, %v3318
      %v3351 = vmax.f32 %v3283, %v3319
      %v3352 = vmax.f32 %v3285, %v3320
      %v3353 = vmax.f32 %v3287, %v3321
      %v3354 = vmax.f32 %v3289, %v3322
      %s3355 = scalar_lea.vmem %s8, 4
      %v3356 = vld [vmem:[%s3355] sm:$0x3]
      %s3357 = scalar_lea.vmem %s425, 2
      %v3358 = vld [vmem:[%s3357] sm:$0x1]
      %v3359 = vunpack.c.l.bf16 %v3356
      %v3361 = vlaneseq
      %v3362 = vshrl.u32 %v3361, 7
      %v3363 = vsub.s32 0, %v3362
      %v3364 = vrot.slane %v3358, %v3363
      %v3366 = vmul.f32 %v3359, %v3364
      %v3367 = vpack.c.bf16 %v3366, %v3366
      %v3368 = vpack.c.bf16 %v3325, %v3323
      %v3369 = vpack.c.bf16 %v3326, %v3324
      %v3370 = vpack.c.bf16 %v3329, %v3327
      %v3371 = vpack.c.bf16 %v3330, %v3328
      %v3372 = vpack.c.bf16 %v3333, %v3331
      %v3373 = vpack.c.bf16 %v3334, %v3332
      %v3374 = vpack.c.bf16 %v3337, %v3335
      %v3375 = vpack.c.bf16 %v3338, %v3336
      %v3376 = vpack.c.bf16 %v3341, %v3339
      %v3377 = vpack.c.bf16 %v3342, %v3340
      %v3378 = vpack.c.bf16 %v3345, %v3343
      %v3379 = vpack.c.bf16 %v3346, %v3344
      %v3380 = vpack.c.bf16 %v3349, %v3347
      %v3381 = vpack.c.bf16 %v3350, %v3348
      %v3382 = vpack.c.bf16 %v3353, %v3351
      %v3383 = vpack.c.bf16 %v3354, %v3352
      %3384 = vmatprep.subr.bf16.mxu0 %v3383
      %3385 = vmatpush1.bf16.msra.mxu0 %v3382
      %3386 = vmatprep.subr.bf16.mxu0 %v3381
      %3387 = vmatpush1.bf16.msra.mxu0 %v3380
      %3388 = vmatprep.subr.bf16.mxu0 %v3379
      %3389 = vmatpush1.bf16.msra.mxu0 %v3378
      %3390 = vmatprep.subr.bf16.mxu0 %v3377
      %3391 = vmatpush1.bf16.msra.mxu0 %v3376
      %3392 = vmatprep.subr.bf16.mxu0 %v3375
      %3393 = vmatpush1.bf16.msra.mxu0 %v3374
      %3394 = vmatprep.subr.bf16.mxu0 %v3373
      %3395 = vmatpush1.bf16.msra.mxu0 %v3372
      %3396 = vmatprep.subr.bf16.mxu0 %v3371
      %3397 = vmatpush1.bf16.msra.mxu0 %v3370
      %3398 = vmatprep.subr.bf16.mxu0 %v3369
      %3399 = vmatpush1.bf16.msra.mxu0 %v3368
      %3400 = vmatprep.subr.bf16.mxu0 0
      %3401 = vmatpush2.bf16.msra.mxu0 0
      %3402 = vmatprep.subr.bf16.mxu0 0
      %3403 = vmatpush2.bf16.msra.mxu0 0
      %3404 = vmatprep.subr.bf16.mxu0 0
      %3405 = vmatpush2.bf16.msra.mxu0 0
      %3406 = vmatprep.subr.bf16.mxu0 0
      %3407 = vmatpush2.bf16.msra.mxu0 0
      %3408 = vmatprep.subr.bf16.mxu0 0
      %3409 = vmatpush2.bf16.msra.mxu0 0
      %3410 = vmatprep.subr.bf16.mxu0 0
      %3411 = vmatpush2.bf16.msra.mxu0 0
      %3412 = vmatprep.subr.bf16.mxu0 0
      %3413 = vmatpush2.bf16.msra.mxu0 0
      %3414 = vmatprep.subr.bf16.mxu0 0
      %3415 = vmatpush2.bf16.msra.mxu0 0
      %3416 = vmatprep.mubr.bf16.mxu0 0
      %3417 = vmatmul.mubr.bf16.gmra.mxu0 %v3367
      %v3418 = vpop.f32.mrf.mxu0
      %v3419 = vadd.f32 0.0, %v3418
      %v3420 = vpop.f32.mrf.mxu0
      %v3421 = vadd.f32 0.0, %v3420
      %v3422 = vpop.f32.mrf.mxu0
      %v3423 = vpop.f32.mrf.mxu0
      %3424 = vdwg.mxu0
      %v3425 = vadd.f32 %v2655, %v3419
      %v3426 = vadd.f32 %v2657, %v3421
      %v3427 = vld [vmem:[%s9] sm:$0x7]
      %3429 = vset.pattern.permute.xlu0 0
      %3430 = vperm.xlu0 %3429, %v3427
      %v3431 = vpop.permute.xlu0 %3430
      %v3433 = vadd.f32 %v3425, %v3431
      %v3434 = vadd.f32 %v3426, %v3431
      %v3435 = vxor.u32 %v3433, 2147483648
      %v3436 = vxor.u32 %v3434, 2147483648
      %v3437 = vmul.f32 %v3435, 1.442695
      %v3438 = vpow.pop %v3437
      %v3439 = vmul.f32 %v3436, 1.442695
      %v3440 = vpow.pop %v3439
      %v3441 = vadd.f32 %v3438, 1.0
      %v3442 = vadd.f32 %v3440, 1.0
      %v3443 = vrcp.pop %v3441
      %v3444 = vmul.f32 1.0, %v3443
      %v3445 = vrcp.pop %v3442
      %v3446 = vmul.f32 1.0, %v3445
      %v3447 = vmul.f32 %v3444, 2.0
      %v3448 = vmul.f32 %v3446, 2.0
      %v3449 = vsub.f32 %v3447, 1.0
      %v3450 = vsub.f32 %v3448, 1.0
      %v3453 = vcombine.low %v3449, %v3450
      %3455 = vst [vmem:[%s434] sm:$0x77] %v3453
      %s3456 = smul.u32 2, %s26
      %p3457 = scmp.lt.s32.totalorder %s25, 1
      %s3458 = scalar_select %p3457, %s25, 1
      %p3459 = scmp.lt.s32.totalorder %s3456, 1
      %s3460 = scalar_select %p3459, %s3456, 1
      %s3461 = smul.addr %s3458, 2
      %s3462 = sadd.s32 %s3460, %s3461
      %s3463 = smul.addr %s3462, 4
      %s3464 = scalar_lea.vmem %s10, %s3463
      // Predicated region
      $region61: #{cips_forward.1} parent=59 // pred_check
        %p3465 = pneg %p283
      $region62: #{cips_forward.1} parent=59 // pred_check_branch
        %3467 = sbr.rel (%p3465) target = $region64
      $region63: #{cips_forward.1} parent=59 // pred_region
        %s3468 = smul.u32 2, %s26
      $region64: #{cips_forward.1} parent=59 // pred_fallthru
        _
    $region60: #{cips_forward.1} parent=5 // pred_fallthru
      _
    %p3469 = scmp.le.s32.totalorder 2, %s16
    // Predicated region
    $region65: #{cips_forward.1} parent=5 // pred_check
      %p3470 = pneg %p3469
    $region66: #{cips_forward.1} parent=5 // pred_check_branch
      %3472 = sbr.rel (%p3470) target = $region68
    $region67: #{cips_forward.1} parent=5 // pred_region
      %s3473 = ssub.s32 %s16, 2
      // Predicated region
      $region69: #{cips_forward.1} parent=67 // pred_check
        %p3474 = pneg %p289
      $region70: #{cips_forward.1} parent=67 // pred_check_branch
        %3476 = sbr.rel (%p3474) target = $region72
      $region71: #{cips_forward.1} parent=67 // pred_region
        %s3477 = smul.u32 2, %s28
        %p3478 = scmp.lt.s32.totalorder %s27, 1
        %s3479 = scalar_select %p3478, %s27, 1
        %p3480 = scmp.lt.s32.totalorder %s3477, 1
        %s3481 = scalar_select %p3480, %s3477, 1
        %s3482 = smul.addr %s3479, 2
        %s3483 = sadd.s32 %s3481, %s3482
        %s3484 = smul.addr %s3483, 4
        %s3485 = scalar_lea.vmem %s10, %s3484
      $region72: #{cips_forward.1} parent=67 // pred_fallthru
        _
    $region68: #{cips_forward.1} parent=5 // pred_fallthru
      _
  $region6: #{cips_forward.1} parent=0 // loop_footer
    %s20 = sadd.s32 1, %s16
  $region7: #{cips_forward.1} parent=0 // loop_footer_branch
    %15 = sbr.rel target = $region3
  $region8: #{cips_forward.1} parent=0 // loop_exit
    _

</llo_original>
